<compile_context>
chip_gen: v6e
topology: v6e:2x2x1
jax: 0.10.0
libtpu: 0.0.40
codegen_flags: <defaults>
</compile_context>

<pallas_src>
import functools

import jax
import jax.numpy as jnp
from jax.experimental import pallas as pl
from jax.experimental.pallas import tpu as pltpu

_LANE = 128


def _round_up(v, m):
    return ((v + m - 1) // m) * m


def _pick_tile(n_p, candidates):
    for c in candidates:
        if n_p % c == 0:
            return c
    return _LANE


def _pad2(w, rows, cols, dtype):
    out = jnp.zeros((rows, cols), dtype)
    return out.at[: w.shape[0], : w.shape[1]].set(w.astype(dtype))


# ---------------------------------------------------------------------------
# Tiled path: one GIN layer = aggregation K-reduction + MLP epilogue
# ---------------------------------------------------------------------------
def _gin_layer_kernel(apply_relu, a_ref, h_ref, wa_ref, ba_ref, wb_ref, bb_ref,
                      o_ref, acc_ref):
    """out[i_blk] = maybe_relu( relu( (sum_k A'[i,k] @ h[k]) @ Wa + ba ) @ Wb + bb )."""
    k = pl.program_id(1)

    @pl.when(k == 0)
    def _():
        acc_ref[...] = jnp.zeros_like(acc_ref)

    # Neighbor aggregation (self term already folded into A') on the MXU, f32 acc.
    acc_ref[...] += jnp.dot(a_ref[...], h_ref[...],
                            preferred_element_type=jnp.float32)

    @pl.when(k == pl.num_programs(1) - 1)
    def _():
        agg = acc_ref[...].astype(jnp.bfloat16)
        z = jnp.dot(agg, wa_ref[...],
                    preferred_element_type=jnp.float32) + ba_ref[...]
        z = jnp.maximum(z, 0.0)
        out = jnp.dot(z.astype(jnp.bfloat16), wb_ref[...],
                      preferred_element_type=jnp.float32) + bb_ref[...]
        if apply_relu:
            out = jnp.maximum(out, 0.0)
        o_ref[...] = out.astype(o_ref.dtype)


def _gin_layer(a, h, wa, ba, wb, bb, *, apply_relu, out_dtype, tm, tk):
    n_p = a.shape[0]
    f_in = h.shape[1]
    f_mid = wa.shape[1]
    f_out = wb.shape[1]
    grid = (n_p // tm, n_p // tk)

    # VMEM budget sized from the actual (double-buffered) tile footprint.
    out_isz = jnp.dtype(out_dtype).itemsize
    tile_bytes = (
        2 * tm * tk * 2                              # A' tile (bf16), 2 buffers
        + 2 * tk * f_in * 2                          # h  tile (bf16), 2 buffers
        + 2 * tm * f_out * out_isz                   # out tile, 2 buffers
        + 2 * (f_in * f_mid + f_mid * f_out) * 2     # weights (bf16), 2 buffers
        + 2 * (f_mid + f_out) * 4                    # biases (f32)
        + tm * f_in * 4                              # f32 accumulator scratch
    )
    vmem_limit = int(min(max(4 * tile_bytes, 16 << 20), 48 << 20))

    flops = 2 * n_p * n_p * f_in + 2 * n_p * f_in * f_mid + 2 * n_p * f_mid * f_out
    bytes_accessed = (
        n_p * n_p * 2 + n_p * f_in * 2
        + (f_in * f_mid + f_mid * f_out) * 2 + (f_mid + f_out) * 4
        + n_p * f_out * out_isz
    )

    return pl.pallas_call(
        functools.partial(_gin_layer_kernel, apply_relu),
        out_shape=jax.ShapeDtypeStruct((n_p, f_out), out_dtype),
        grid_spec=pltpu.PrefetchScalarGridSpec(
            num_scalar_prefetch=0,
            grid=grid,
            in_specs=[
                pl.BlockSpec((tm, tk), lambda i, k: (i, k)),         # A' tile
                pl.BlockSpec((tk, f_in), lambda i, k: (k, 0)),       # h  tile
                pl.BlockSpec((f_in, f_mid), lambda i, k: (0, 0)),    # Wa (full)
                pl.BlockSpec((1, f_mid), lambda i, k: (0, 0)),       # ba
                pl.BlockSpec((f_mid, f_out), lambda i, k: (0, 0)),   # Wb (full)
                pl.BlockSpec((1, f_out), lambda i, k: (0, 0)),       # bb
            ],
            out_specs=pl.BlockSpec((tm, f_out), lambda i, k: (i, 0)),
            scratch_shapes=[pltpu.VMEM((tm, f_in), jnp.float32)],
        ),
        compiler_params=pltpu.CompilerParams(
            dimension_semantics=("parallel", "arbitrary"),
            vmem_limit_bytes=vmem_limit,
        ),
        cost_estimate=pl.CostEstimate(
            flops=int(flops), transcendentals=0,
            bytes_accessed=int(bytes_accessed)),
    )(a, h, wa, ba, wb, bb)


# ---------------------------------------------------------------------------
# Fused path: all three GIN layers in one kernel (A' + activations stay in VMEM)
# ---------------------------------------------------------------------------
def _gin3_fused_kernel(a_ref, h_ref,
                       w1a_ref, b1a_ref, w1b_ref, b1b_ref,
                       w2a_ref, b2a_ref, w2b_ref, b2b_ref,
                       w3a_ref, b3a_ref, w3b_ref, b3b_ref,
                       o_ref, h1_ref, h2_ref):
    def mlp(agg_f32, wa_ref, ba_ref, wb_ref, bb_ref, relu_out):
        z = jnp.dot(agg_f32.astype(jnp.bfloat16), wa_ref[...],
                    preferred_element_type=jnp.float32) + ba_ref[...]
        z = jnp.maximum(z, 0.0)
        out = jnp.dot(z.astype(jnp.bfloat16), wb_ref[...],
                      preferred_element_type=jnp.float32) + bb_ref[...]
        if relu_out:
            out = jnp.maximum(out, 0.0)
        return out

    agg1 = jnp.dot(a_ref[...], h_ref[...], preferred_element_type=jnp.float32)
    h1_ref[...] = mlp(agg1, w1a_ref, b1a_ref, w1b_ref, b1b_ref,
                      True).astype(jnp.bfloat16)
    agg2 = jnp.dot(a_ref[...], h1_ref[...], preferred_element_type=jnp.float32)
    h2_ref[...] = mlp(agg2, w2a_ref, b2a_ref, w2b_ref, b2b_ref,
                      True).astype(jnp.bfloat16)
    agg3 = jnp.dot(a_ref[...], h2_ref[...], preferred_element_type=jnp.float32)
    o_ref[...] = mlp(agg3, w3a_ref, b3a_ref, w3b_ref, b3b_ref,
                     False).astype(o_ref.dtype)


def _gin3_fused(a, h, wbs, *, out_dtype, footprint_bytes):
    n_p, f_in = h.shape
    f_hid = wbs[0].shape[1]
    f_out = wbs[-2].shape[1]
    vmem_limit = int(min(max(2 * footprint_bytes, 32 << 20), 48 << 20))

    flops = (2 * n_p * n_p * (f_in + 2 * f_hid)
             + 2 * n_p * (f_in * f_hid + 3 * f_hid * f_hid
                          + f_hid * f_out + f_out * f_out))
    return pl.pallas_call(
        _gin3_fused_kernel,
        out_shape=jax.ShapeDtypeStruct((n_p, f_out), out_dtype),
        scratch_shapes=[pltpu.VMEM((n_p, f_hid), jnp.bfloat16),
                        pltpu.VMEM((n_p, f_hid), jnp.bfloat16)],
        compiler_params=pltpu.CompilerParams(vmem_limit_bytes=vmem_limit),
        cost_estimate=pl.CostEstimate(
            flops=int(flops), transcendentals=0,
            bytes_accessed=int(footprint_bytes)),
    )(a, h, *wbs)


# ---------------------------------------------------------------------------
# Wrapper: pad to lane-dense shapes, fold eps into A, dispatch fused / tiled
# ---------------------------------------------------------------------------
def gin_classifier_3_layer(x, edge_index, params, *, eps=0.0, mode="auto",
                           tile_m=None, tile_k=None):
    """x: [N, input_dim] f32, edge_index: [2, E] int (row0 = src, row1 = dst)."""
    n, in_dim = x.shape
    hid = params["w1a"].shape[1]
    out_dim = params["w3b"].shape[1]

    n_p = _round_up(max(n, _LANE), _LANE)
    f_in_p = _round_up(in_dim, _LANE)
    f_hid_p = _round_up(hid, _LANE)
    f_out_p = _round_up(out_dim, _LANE)

    # Dense adjacency with the (1 + eps) self term folded in:
    #   A'[i, j] = #edges(j -> i) + (1 + eps) * [i == j]
    # TODO(synk): for large sparse graphs replace this O(N^2) dense adjacency with a
    # scalar-prefetched CSR / segment-gather path (manual make_async_copy of neighbor
    # feature tiles) instead of streaming an N^2 matrix.
    src = edge_index[0].astype(jnp.int32)
    dst = edge_index[1].astype(jnp.int32)
    a = jnp.zeros((n_p, n_p), jnp.float32).at[dst, src].add(1.0)
    a = a + (1.0 + eps) * jnp.eye(n_p, dtype=jnp.float32)
    a = a.astype(jnp.bfloat16)   # small integer counts: exact in bf16

    h = _pad2(x, n_p, f_in_p, jnp.bfloat16)

    def pw(name, r, c):          # weight: bf16, lane-padded
        return _pad2(params[name], r, c, jnp.bfloat16)

    def pb(name, c):             # bias: f32, lane-padded, shape (1, c)
        return _pad2(params[name].reshape(1, -1), 1, c, jnp.float32)

    w1a, b1a = pw("w1a", f_in_p, f_hid_p), pb("b1a", f_hid_p)
    w1b, b1b = pw("w1b", f_hid_p, f_hid_p), pb("b1b", f_hid_p)
    w2a, b2a = pw("w2a", f_hid_p, f_hid_p), pb("b2a", f_hid_p)
    w2b, b2b = pw("w2b", f_hid_p, f_hid_p), pb("b2b", f_hid_p)
    w3a, b3a = pw("w3a", f_hid_p, f_out_p), pb("b3a", f_out_p)
    w3b, b3b = pw("w3b", f_out_p, f_out_p), pb("b3b", f_out_p)

    weights_bytes = 2 * (f_in_p * f_hid_p + 3 * f_hid_p * f_hid_p
                         + f_hid_p * f_out_p + f_out_p * f_out_p)
    fused_bytes = (n_p * n_p * 2 + n_p * f_in_p * 2 + 2 * n_p * f_hid_p * 2
                   + n_p * f_out_p * 4 + weights_bytes
                   + (f_hid_p * 2 + f_out_p * 2) * 4)
    use_fused = (mode == "fused") or (mode == "auto" and fused_bytes <= (16 << 20))

    if use_fused:
        out = _gin3_fused(
            a, h,
            (w1a, b1a, w1b, b1b, w2a, b2a, w2b, b2b, w3a, b3a, w3b, b3b),
            out_dtype=jnp.float32, footprint_bytes=fused_bytes)
    else:
        tm = tile_m if tile_m is not None else _pick_tile(n_p, (512, 384, 256, 128))
        tk = tile_k if tile_k is not None else _pick_tile(
            n_p, (1024, 768, 512, 384, 256, 128))
        assert n_p % tm == 0 and n_p % tk == 0
        h = _gin_layer(a, h, w1a, b1a, w1b, b1b, apply_relu=True,
                       out_dtype=jnp.bfloat16, tm=tm, tk=tk)
        h = _gin_layer(a, h, w2a, b2a, w2b, b2b, apply_relu=True,
                       out_dtype=jnp.bfloat16, tm=tm, tk=tk)
        out = _gin_layer(a, h, w3a, b3a, w3b, b3b, apply_relu=False,
                         out_dtype=jnp.float32, tm=tm, tk=tk)

    return out[:n, :out_dim]


# ---------------------------------------------------------------------------
# Deterministic parameter init (shapes from __init__) + pure-JAX reference
# ---------------------------------------------------------------------------
def init_params(key, input_dim, hidden_dim, output_dim):
    dims = [
        (input_dim, hidden_dim, hidden_dim),    # conv1 MLP
        (hidden_dim, hidden_dim, hidden_dim),   # conv2 MLP
        (hidden_dim, output_dim, output_dim),   # conv3 MLP
    ]
    params = {}
    for i, (din, dmid, dout) in enumerate(dims, start=1):
        key, k1, k2, k3, k4 = jax.random.split(key, 5)
        params[f"w{i}a"] = (jax.random.normal(k1, (din, dmid), jnp.float32)
                            * (1.0 / jnp.sqrt(din)))
        params[f"b{i}a"] = 0.1 * jax.random.normal(k2, (1, dmid), jnp.float32)
        params[f"w{i}b"] = (jax.random.normal(k3, (dmid, dout), jnp.float32)
                            * (1.0 / jnp.sqrt(dmid)))
        params[f"b{i}b"] = 0.1 * jax.random.normal(k4, (1, dout), jnp.float32)
    return params


def reference_forward(x, edge_index, params, eps=0.0):
    n = x.shape[0]
    src, dst = edge_index[0], edge_index[1]
    A = jnp.zeros((n, n), jnp.float32).at[dst, src].add(1.0)
    h = x
    for i in range(1, 4):
        agg = A @ h + (1.0 + eps) * h
        z = jnp.maximum(agg @ params[f"w{i}a"] + params[f"b{i}a"], 0.0)
        h = z @ params[f"w{i}b"] + params[f"b{i}b"]
        if i < 3:
            h = jnp.maximum(h, 0.0)
    return h


if __name__ == "__main__":
    N, E = 256, 1024
    INPUT_DIM, HIDDEN_DIM, OUTPUT_DIM = 16, 256, 8   # hidden_dim matches module default

    key = jax.random.PRNGKey(0)
    kx, ke, kp = jax.random.split(key, 3)

    x = jax.random.normal(kx, (N, INPUT_DIM), jnp.float32)
    edge_index = jax.random.randint(ke, (2, E), 0, N, jnp.int32)
    params = init_params(kp, INPUT_DIM, HIDDEN_DIM, OUTPUT_DIM)

    ref = reference_forward(x, edge_index, params)
    ref_scale = float(jnp.max(jnp.abs(ref))) + 1e-6

    # Fused single-kernel path (whole padded graph resident in VMEM).
    fwd_fused = jax.jit(lambda x_, ei_: gin_classifier_3_layer(
        x_, ei_, params, mode="fused"))
    out_f = jax.block_until_ready(fwd_fused(x, edge_index))
    assert out_f.shape == (N, OUTPUT_DIM)
    err_f = float(jnp.max(jnp.abs(out_f - ref))) / ref_scale
    assert err_f < 5e-2, f"fused mismatch vs reference (max rel err {err_f:.4f})"

    # Tiled streaming path (exercises the K-reduction accumulator / grid pipeline).
    fwd_tiled = jax.jit(lambda x_, ei_: gin_classifier_3_layer(
        x_, ei_, params, mode="tiled", tile_m=128, tile_k=128))
    out_t = jax.block_until_ready(fwd_tiled(x, edge_index))
    assert out_t.shape == (N, OUTPUT_DIM)
    err_t = float(jnp.max(jnp.abs(out_t - ref))) / ref_scale
    assert err_t < 5e-2, f"tiled mismatch vs reference (max rel err {err_t:.4f})"

    print("KERNEL_OK")
</pallas_src>

<mosaic_0001>
module attributes {stable_mosaic.version = 11 : i64} {
  func.func private @main(%arg0: i32) attributes {dimension_semantics = [#tpu.dimension_semantics<core_parallel>], iteration_bounds = array<i64: 2>, tpu.core_type = #tpu.core_type<sc_scalar_subcore>, window_params = []} {
    return
  }
}

module attributes {stable_mosaic.version = 11 : i64} {
  func.func private @main(%arg0: i32) attributes {dimension_semantics = [#tpu.dimension_semantics<core_parallel>], iteration_bounds = array<i64: 2>, tpu.core_type = #tpu.core_type<sc_scalar_subcore>, window_params = []} {
    return
  }
}

module attributes {stable_mosaic.version = 11 : i64} {
  func.func @_gin3_fused_kernel(%arg0: memref<256x256xbf16, #tpu.memory_space<vmem>>, %arg1: memref<256x128xbf16, #tpu.memory_space<vmem>>, %arg2: memref<128x256xbf16, #tpu.memory_space<vmem>>, %arg3: memref<1x256xf32, #tpu.memory_space<vmem>>, %arg4: memref<256x256xbf16, #tpu.memory_space<vmem>>, %arg5: memref<1x256xf32, #tpu.memory_space<vmem>>, %arg6: memref<256x256xbf16, #tpu.memory_space<vmem>>, %arg7: memref<1x256xf32, #tpu.memory_space<vmem>>, %arg8: memref<256x256xbf16, #tpu.memory_space<vmem>>, %arg9: memref<1x256xf32, #tpu.memory_space<vmem>>, %arg10: memref<256x128xbf16, #tpu.memory_space<vmem>>, %arg11: memref<1x128xf32, #tpu.memory_space<vmem>>, %arg12: memref<128x128xbf16, #tpu.memory_space<vmem>>, %arg13: memref<1x128xf32, #tpu.memory_space<vmem>>, %arg14: memref<256x128xf32, #tpu.memory_space<vmem>>, %arg15: memref<256x256xbf16, #tpu.memory_space<vmem>>, %arg16: memref<256x256xbf16, #tpu.memory_space<vmem>>) attributes {dimension_semantics = [], scalar_prefetch = 0 : i64, scratch_operands = 2 : i64, tpu.core_type = #tpu.core_type<tc>} {
    %c0 = arith.constant 0 : index
    %c0_0 = arith.constant 0 : index
    %0 = vector.load %arg0[%c0, %c0_0] : memref<256x256xbf16, #tpu.memory_space<vmem>>, vector<256x256xbf16>
    %c0_1 = arith.constant 0 : index
    %c0_2 = arith.constant 0 : index
    %1 = vector.load %arg1[%c0_1, %c0_2] : memref<256x128xbf16, #tpu.memory_space<vmem>>, vector<256x128xbf16>
    %cst = arith.constant dense<0.000000e+00> : vector<256x128xf32>
    %2 = tpu.matmul %0, %1, %cst {dimension_numbers = #tpu.dot_dimension_numbers<[1], [0], [0], [1], [0, 0, 1, 1], [], []>} : vector<256x256xbf16>, vector<256x128xbf16>, vector<256x128xf32> -> vector<256x128xf32>
    %3 = arith.truncf %2 : vector<256x128xf32> to vector<256x128xbf16>
    %c0_3 = arith.constant 0 : index
    %c0_4 = arith.constant 0 : index
    %4 = vector.load %arg2[%c0_3, %c0_4] : memref<128x256xbf16, #tpu.memory_space<vmem>>, vector<128x256xbf16>
    %cst_5 = arith.constant dense<0.000000e+00> : vector<256x256xf32>
    %5 = tpu.matmul %3, %4, %cst_5 {dimension_numbers = #tpu.dot_dimension_numbers<[1], [0], [0], [1], [0, 0, 1, 1], [], []>} : vector<256x128xbf16>, vector<128x256xbf16>, vector<256x256xf32> -> vector<256x256xf32>
    %c0_6 = arith.constant 0 : index
    %c0_7 = arith.constant 0 : index
    %6 = vector.load %arg3[%c0_6, %c0_7] : memref<1x256xf32, #tpu.memory_space<vmem>>, vector<1x256xf32>
    %7 = vector.broadcast %6 : vector<1x256xf32> to vector<256x256xf32>
    %8 = arith.addf %5, %7 : vector<256x256xf32>
    %cst_8 = arith.constant 0.000000e+00 : f32
    %9 = vector.broadcast %cst_8 : f32 to vector<256x256xf32>
    %10 = arith.maximumf %8, %9 : vector<256x256xf32>
    %11 = arith.truncf %10 : vector<256x256xf32> to vector<256x256xbf16>
    %c0_9 = arith.constant 0 : index
    %c0_10 = arith.constant 0 : index
    %12 = vector.load %arg4[%c0_9, %c0_10] : memref<256x256xbf16, #tpu.memory_space<vmem>>, vector<256x256xbf16>
    %cst_11 = arith.constant dense<0.000000e+00> : vector<256x256xf32>
    %13 = tpu.matmul %11, %12, %cst_11 {dimension_numbers = #tpu.dot_dimension_numbers<[1], [0], [0], [1], [0, 0, 1, 1], [], []>} : vector<256x256xbf16>, vector<256x256xbf16>, vector<256x256xf32> -> vector<256x256xf32>
    %c0_12 = arith.constant 0 : index
    %c0_13 = arith.constant 0 : index
    %14 = vector.load %arg5[%c0_12, %c0_13] : memref<1x256xf32, #tpu.memory_space<vmem>>, vector<1x256xf32>
    %15 = vector.broadcast %14 : vector<1x256xf32> to vector<256x256xf32>
    %16 = arith.addf %13, %15 : vector<256x256xf32>
    %cst_14 = arith.constant 0.000000e+00 : f32
    %17 = vector.broadcast %cst_14 : f32 to vector<256x256xf32>
    %18 = arith.maximumf %16, %17 : vector<256x256xf32>
    %19 = arith.truncf %18 : vector<256x256xf32> to vector<256x256xbf16>
    %c0_15 = arith.constant 0 : index
    %c0_16 = arith.constant 0 : index
    %20 = vector.load %arg15[%c0_15, %c0_16] : memref<256x256xbf16, #tpu.memory_space<vmem>>, vector<256x256xbf16>
    tpu.vector_store %arg15[%c0_15, %c0_16], %19 {strides = array<i32>} : memref<256x256xbf16, #tpu.memory_space<vmem>>, vector<256x256xbf16>,
    %c0_17 = arith.constant 0 : index
    %c0_18 = arith.constant 0 : index
    %21 = vector.load %arg0[%c0_17, %c0_18] : memref<256x256xbf16, #tpu.memory_space<vmem>>, vector<256x256xbf16>
    %c0_19 = arith.constant 0 : index
    %c0_20 = arith.constant 0 : index
    %22 = vector.load %arg15[%c0_19, %c0_20] : memref<256x256xbf16, #tpu.memory_space<vmem>>, vector<256x256xbf16>
    %cst_21 = arith.constant dense<0.000000e+00> : vector<256x256xf32>
    %23 = tpu.matmul %21, %22, %cst_21 {dimension_numbers = #tpu.dot_dimension_numbers<[1], [0], [0], [1], [0, 0, 1, 1], [], []>} : vector<256x256xbf16>, vector<256x256xbf16>, vector<256x256xf32> -> vector<256x256xf32>
    %24 = arith.truncf %23 : vector<256x256xf32> to vector<256x256xbf16>
    %c0_22 = arith.constant 0 : index
    %c0_23 = arith.constant 0 : index
    %25 = vector.load %arg6[%c0_22, %c0_23] : memref<256x256xbf16, #tpu.memory_space<vmem>>, vector<256x256xbf16>
    %cst_24 = arith.constant dense<0.000000e+00> : vector<256x256xf32>
    %26 = tpu.matmul %24, %25, %cst_24 {dimension_numbers = #tpu.dot_dimension_numbers<[1], [0], [0], [1], [0, 0, 1, 1], [], []>} : vector<256x256xbf16>, vector<256x256xbf16>, vector<256x256xf32> -> vector<256x256xf32>
    %c0_25 = arith.constant 0 : index
    %c0_26 = arith.constant 0 : index
    %27 = vector.load %arg7[%c0_25, %c0_26] : memref<1x256xf32, #tpu.memory_space<vmem>>, vector<1x256xf32>
    %28 = vector.broadcast %27 : vector<1x256xf32> to vector<256x256xf32>
    %29 = arith.addf %26, %28 : vector<256x256xf32>
    %cst_27 = arith.constant 0.000000e+00 : f32
    %30 = vector.broadcast %cst_27 : f32 to vector<256x256xf32>
    %31 = arith.maximumf %29, %30 : vector<256x256xf32>
    %32 = arith.truncf %31 : vector<256x256xf32> to vector<256x256xbf16>
    %c0_28 = arith.constant 0 : index
    %c0_29 = arith.constant 0 : index
    %33 = vector.load %arg8[%c0_28, %c0_29] : memref<256x256xbf16, #tpu.memory_space<vmem>>, vector<256x256xbf16>
    %cst_30 = arith.constant dense<0.000000e+00> : vector<256x256xf32>
    %34 = tpu.matmul %32, %33, %cst_30 {dimension_numbers = #tpu.dot_dimension_numbers<[1], [0], [0], [1], [0, 0, 1, 1], [], []>} : vector<256x256xbf16>, vector<256x256xbf16>, vector<256x256xf32> -> vector<256x256xf32>
    %c0_31 = arith.constant 0 : index
    %c0_32 = arith.constant 0 : index
    %35 = vector.load %arg9[%c0_31, %c0_32] : memref<1x256xf32, #tpu.memory_space<vmem>>, vector<1x256xf32>
    %36 = vector.broadcast %35 : vector<1x256xf32> to vector<256x256xf32>
    %37 = arith.addf %34, %36 : vector<256x256xf32>
    %cst_33 = arith.constant 0.000000e+00 : f32
    %38 = vector.broadcast %cst_33 : f32 to vector<256x256xf32>
    %39 = arith.maximumf %37, %38 : vector<256x256xf32>
    %40 = arith.truncf %39 : vector<256x256xf32> to vector<256x256xbf16>
    %c0_34 = arith.constant 0 : index
    %c0_35 = arith.constant 0 : index
    %41 = vector.load %arg16[%c0_34, %c0_35] : memref<256x256xbf16, #tpu.memory_space<vmem>>, vector<256x256xbf16>
    tpu.vector_store %arg16[%c0_34, %c0_35], %40 {strides = array<i32>} : memref<256x256xbf16, #tpu.memory_space<vmem>>, vector<256x256xbf16>,
    %c0_36 = arith.constant 0 : index
    %c0_37 = arith.constant 0 : index
    %42 = vector.load %arg0[%c0_36, %c0_37] : memref<256x256xbf16, #tpu.memory_space<vmem>>, vector<256x256xbf16>
    %c0_38 = arith.constant 0 : index
    %c0_39 = arith.constant 0 : index
    %43 = vector.load %arg16[%c0_38, %c0_39] : memref<256x256xbf16, #tpu.memory_space<vmem>>, vector<256x256xbf16>
    %cst_40 = arith.constant dense<0.000000e+00> : vector<256x256xf32>
    %44 = tpu.matmul %42, %43, %cst_40 {dimension_numbers = #tpu.dot_dimension_numbers<[1], [0], [0], [1], [0, 0, 1, 1], [], []>} : vector<256x256xbf16>, vector<256x256xbf16>, vector<256x256xf32> -> vector<256x256xf32>
    %45 = arith.truncf %44 : vector<256x256xf32> to vector<256x256xbf16>
    %c0_41 = arith.constant 0 : index
    %c0_42 = arith.constant 0 : index
    %46 = vector.load %arg10[%c0_41, %c0_42] : memref<256x128xbf16, #tpu.memory_space<vmem>>, vector<256x128xbf16>
    %cst_43 = arith.constant dense<0.000000e+00> : vector<256x128xf32>
    %47 = tpu.matmul %45, %46, %cst_43 {dimension_numbers = #tpu.dot_dimension_numbers<[1], [0], [0], [1], [0, 0, 1, 1], [], []>} : vector<256x256xbf16>, vector<256x128xbf16>, vector<256x128xf32> -> vector<256x128xf32>
    %c0_44 = arith.constant 0 : index
    %c0_45 = arith.constant 0 : index
    %48 = vector.load %arg11[%c0_44, %c0_45] : memref<1x128xf32, #tpu.memory_space<vmem>>, vector<1x128xf32>
    %49 = vector.broadcast %48 : vector<1x128xf32> to vector<256x128xf32>
    %50 = arith.addf %47, %49 : vector<256x128xf32>
    %cst_46 = arith.constant 0.000000e+00 : f32
    %51 = vector.broadcast %cst_46 : f32 to vector<256x128xf32>
    %52 = arith.maximumf %50, %51 : vector<256x128xf32>
    %53 = arith.truncf %52 : vector<256x128xf32> to vector<256x128xbf16>
    %c0_47 = arith.constant 0 : index
    %c0_48 = arith.constant 0 : index
    %54 = vector.load %arg12[%c0_47, %c0_48] : memref<128x128xbf16, #tpu.memory_space<vmem>>, vector<128x128xbf16>
    %cst_49 = arith.constant dense<0.000000e+00> : vector<256x128xf32>
    %55 = tpu.matmul %53, %54, %cst_49 {dimension_numbers = #tpu.dot_dimension_numbers<[1], [0], [0], [1], [0, 0, 1, 1], [], []>} : vector<256x128xbf16>, vector<128x128xbf16>, vector<256x128xf32> -> vector<256x128xf32>
    %c0_50 = arith.constant 0 : index
    %c0_51 = arith.constant 0 : index
    %56 = vector.load %arg13[%c0_50, %c0_51] : memref<1x128xf32, #tpu.memory_space<vmem>>, vector<1x128xf32>
    %57 = vector.broadcast %56 : vector<1x128xf32> to vector<256x128xf32>
    %58 = arith.addf %55, %57 : vector<256x128xf32>
    %c0_52 = arith.constant 0 : index
    %c0_53 = arith.constant 0 : index
    %59 = vector.load %arg14[%c0_52, %c0_53] : memref<256x128xf32, #tpu.memory_space<vmem>>, vector<256x128xf32>
    tpu.vector_store %arg14[%c0_52, %c0_53], %58 {strides = array<i32>} : memref<256x128xf32, #tpu.memory_space<vmem>>, vector<256x128xf32>,
    return
  }
}

</mosaic_0001>

<llo_original>
// kernel: _lambda_.1
$region0: #{_lambda_.1}
  #allocation0 [shape = 'u32[]', space=smem, size = 0x4, offset = 0x4, fixed_abs, tag = 'smem constant byte address 0x4 - core index']
  #allocation1 [shape = 'u32[144,128]{1,0:T(1,128)}', space=vmem, size = 0x12000, scoped, tag = 'internal scratch']
  #allocation2 [shape = 'bf16[256,256]{1,0:T(8,128)(2,1)}', space=vmem, size = 0x20000, scoped, tag = 'scratch operand']
  #allocation3 [shape = 'bf16[256,256]{1,0:T(8,128)(2,1)}', space=vmem, size = 0x20000, scoped, tag = 'scratch operand']
  %s0 = inlined_call_operand.vmem [shape: bf16[256,256], index: 0, kind: input, shape index: {}]
  %s1 = inlined_call_operand.vmem [shape: bf16[256,128], index: 1, kind: input, shape index: {}]
  %s2 = inlined_call_operand.vmem [shape: bf16[128,256], index: 2, kind: input, shape index: {}]
  %s3 = inlined_call_operand.vmem [shape: f32[1,256], index: 3, kind: input, shape index: {}]
  %s4 = inlined_call_operand.vmem [shape: bf16[256,256], index: 4, kind: input, shape index: {}]
  %s5 = inlined_call_operand.vmem [shape: f32[1,256], index: 5, kind: input, shape index: {}]
  %s6 = inlined_call_operand.vmem [shape: bf16[256,256], index: 6, kind: input, shape index: {}]
  %s7 = inlined_call_operand.vmem [shape: f32[1,256], index: 7, kind: input, shape index: {}]
  %s8 = inlined_call_operand.vmem [shape: bf16[256,256], index: 8, kind: input, shape index: {}]
  %s9 = inlined_call_operand.vmem [shape: f32[1,256], index: 9, kind: input, shape index: {}]
  %s10 = inlined_call_operand.vmem [shape: bf16[256,128], index: 10, kind: input, shape index: {}]
  %s11 = inlined_call_operand.vmem [shape: f32[1,128], index: 11, kind: input, shape index: {}]
  %s12 = inlined_call_operand.vmem [shape: bf16[128,128], index: 12, kind: input, shape index: {}]
  %s13 = inlined_call_operand.vmem [shape: f32[1,128], index: 13, kind: input, shape index: {}]
  %s14 = inlined_call_operand.vmem [shape: f32[256,128], index: 14, kind: output, shape index: {}]
  %s15 = sld [smem:[#allocation0]]
  $region66: #{_lambda_.1} parent=0
    _
  %s17 = ssub.s32 1, %s15
  %s18 = scalar_select 0, %s17, %s15
  // Predicated region
  $region2: #{_lambda_.1} parent=0 // pred_check
    _
  $region3: #{_lambda_.1} parent=0 // pred_check_branch
    %20 = sbr.rel (0) target = $region5
  $region4: #{_lambda_.1} parent=0 // pred_region
    _
  $region5: #{_lambda_.1} parent=0 // pred_fallthru
    _
  // Predicated region
  $region6: #{_lambda_.1} parent=0 // pred_check
    _
  $region7: #{_lambda_.1} parent=0 // pred_check_branch
    %22 = sbr.rel (0) target = $region9
  $region8: #{_lambda_.1} parent=0 // pred_region
    _
  $region9: #{_lambda_.1} parent=0 // pred_fallthru
    _
  // Predicated region
  $region10: #{_lambda_.1} parent=0 // pred_check
    _
  $region11: #{_lambda_.1} parent=0 // pred_check_branch
    %24 = sbr.rel (0) target = $region13
  $region12: #{_lambda_.1} parent=0 // pred_region
    _
  $region13: #{_lambda_.1} parent=0 // pred_fallthru
    _
  // Predicated region
  $region14: #{_lambda_.1} parent=0 // pred_check
    _
  $region15: #{_lambda_.1} parent=0 // pred_check_branch
    %26 = sbr.rel (0) target = $region17
  $region16: #{_lambda_.1} parent=0 // pred_region
    _
  $region17: #{_lambda_.1} parent=0 // pred_fallthru
    _
  // Predicated region
  $region18: #{_lambda_.1} parent=0 // pred_check
    _
  $region19: #{_lambda_.1} parent=0 // pred_check_branch
    %28 = sbr.rel (0) target = $region21
  $region20: #{_lambda_.1} parent=0 // pred_region
    _
  $region21: #{_lambda_.1} parent=0 // pred_fallthru
    _
  // Predicated region
  $region22: #{_lambda_.1} parent=0 // pred_check
    _
  $region23: #{_lambda_.1} parent=0 // pred_check_branch
    %30 = sbr.rel (0) target = $region25
  $region24: #{_lambda_.1} parent=0 // pred_region
    _
  $region25: #{_lambda_.1} parent=0 // pred_fallthru
    _
  // Predicated region
  $region26: #{_lambda_.1} parent=0 // pred_check
    _
  $region27: #{_lambda_.1} parent=0 // pred_check_branch
    %32 = sbr.rel (0) target = $region29
  $region28: #{_lambda_.1} parent=0 // pred_region
    _
  $region29: #{_lambda_.1} parent=0 // pred_fallthru
    _
  // Predicated region
  $region30: #{_lambda_.1} parent=0 // pred_check
    _
  $region31: #{_lambda_.1} parent=0 // pred_check_branch
    %34 = sbr.rel (0) target = $region33
  $region32: #{_lambda_.1} parent=0 // pred_region
    _
  $region33: #{_lambda_.1} parent=0 // pred_fallthru
    _
  // Predicated region
  $region34: #{_lambda_.1} parent=0 // pred_check
    _
  $region35: #{_lambda_.1} parent=0 // pred_check_branch
    %36 = sbr.rel (0) target = $region37
  $region36: #{_lambda_.1} parent=0 // pred_region
    _
  $region37: #{_lambda_.1} parent=0 // pred_fallthru
    _
  // Predicated region
  $region38: #{_lambda_.1} parent=0 // pred_check
    _
  $region39: #{_lambda_.1} parent=0 // pred_check_branch
    %38 = sbr.rel (0) target = $region41
  $region40: #{_lambda_.1} parent=0 // pred_region
    _
  $region41: #{_lambda_.1} parent=0 // pred_fallthru
    _
  // Predicated region
  $region42: #{_lambda_.1} parent=0 // pred_check
    _
  $region43: #{_lambda_.1} parent=0 // pred_check_branch
    %40 = sbr.rel (0) target = $region45
  $region44: #{_lambda_.1} parent=0 // pred_region
    _
  $region45: #{_lambda_.1} parent=0 // pred_fallthru
    _
  // Predicated region
  $region46: #{_lambda_.1} parent=0 // pred_check
    _
  $region47: #{_lambda_.1} parent=0 // pred_check_branch
    %42 = sbr.rel (0) target = $region49
  $region48: #{_lambda_.1} parent=0 // pred_region
    _
  $region49: #{_lambda_.1} parent=0 // pred_fallthru
    _
  // Predicated region
  $region50: #{_lambda_.1} parent=0 // pred_check
    _
  $region51: #{_lambda_.1} parent=0 // pred_check_branch
    %44 = sbr.rel (0) target = $region53
  $region52: #{_lambda_.1} parent=0 // pred_region
    _
  $region53: #{_lambda_.1} parent=0 // pred_fallthru
    _
  // Predicated region
  $region54: #{_lambda_.1} parent=0 // pred_check
    _
  $region55: #{_lambda_.1} parent=0 // pred_check_branch
    %46 = sbr.rel (0) target = $region57
  $region56: #{_lambda_.1} parent=0 // pred_region
    _
  $region57: #{_lambda_.1} parent=0 // pred_fallthru
    _
  %v48 = vld [vmem:[%s0] sm:$0xff]
  %v49 = vld [vmem:[%s0 + $0x8] sm:$0xff]
  %v50 = vld [vmem:[%s0 + $0x10] sm:$0xff]
  %v51 = vld [vmem:[%s0 + $0x18] sm:$0xff]
  %v52 = vld [vmem:[%s0 + $0x20] sm:$0xff]
  %v53 = vld [vmem:[%s0 + $0x28] sm:$0xff]
  %v54 = vld [vmem:[%s0 + $0x30] sm:$0xff]
  %v55 = vld [vmem:[%s0 + $0x38] sm:$0xff]
  %v56 = vld [vmem:[%s0 + $0x40] sm:$0xff]
  %v57 = vld [vmem:[%s0 + $0x48] sm:$0xff]
  %v58 = vld [vmem:[%s0 + $0x50] sm:$0xff]
  %v59 = vld [vmem:[%s0 + $0x58] sm:$0xff]
  %v60 = vld [vmem:[%s0 + $0x60] sm:$0xff]
  %v61 = vld [vmem:[%s0 + $0x68] sm:$0xff]
  %v62 = vld [vmem:[%s0 + $0x70] sm:$0xff]
  %v63 = vld [vmem:[%s0 + $0x78] sm:$0xff]
  %v64 = vld [vmem:[%s0 + $0x80] sm:$0xff]
  %v65 = vld [vmem:[%s0 + $0x88] sm:$0xff]
  %v66 = vld [vmem:[%s0 + $0x90] sm:$0xff]
  %v67 = vld [vmem:[%s0 + $0x98] sm:$0xff]
  %v68 = vld [vmem:[%s0 + $0xa0] sm:$0xff]
  %v69 = vld [vmem:[%s0 + $0xa8] sm:$0xff]
  %v70 = vld [vmem:[%s0 + $0xb0] sm:$0xff]
  %v71 = vld [vmem:[%s0 + $0xb8] sm:$0xff]
  %v72 = vld [vmem:[%s0 + $0xc0] sm:$0xff]
  %v73 = vld [vmem:[%s0 + $0xc8] sm:$0xff]
  %v74 = vld [vmem:[%s0 + $0xd0] sm:$0xff]
  %v75 = vld [vmem:[%s0 + $0xd8] sm:$0xff]
  %v76 = vld [vmem:[%s0 + $0xe0] sm:$0xff]
  %v77 = vld [vmem:[%s0 + $0xe8] sm:$0xff]
  %v78 = vld [vmem:[%s0 + $0xf0] sm:$0xff]
  %v79 = vld [vmem:[%s0 + $0xf8] sm:$0xff]
  %v80 = vld [vmem:[%s1] sm:$0xf]
  %v81 = vld [vmem:[%s1 + $0x4] sm:$0xf]
  %v82 = vld [vmem:[%s1 + $0x8] sm:$0xf]
  %v83 = vld [vmem:[%s1 + $0xc] sm:$0xf]
  %v84 = vld [vmem:[%s1 + $0x10] sm:$0xf]
  %v85 = vld [vmem:[%s1 + $0x14] sm:$0xf]
  %v86 = vld [vmem:[%s1 + $0x18] sm:$0xf]
  %v87 = vld [vmem:[%s1 + $0x1c] sm:$0xf]
  %v88 = vld [vmem:[%s1 + $0x20] sm:$0xf]
  %v89 = vld [vmem:[%s1 + $0x24] sm:$0xf]
  %v90 = vld [vmem:[%s1 + $0x28] sm:$0xf]
  %v91 = vld [vmem:[%s1 + $0x2c] sm:$0xf]
  %v92 = vld [vmem:[%s1 + $0x30] sm:$0xf]
  %v93 = vld [vmem:[%s1 + $0x34] sm:$0xf]
  %v94 = vld [vmem:[%s1 + $0x38] sm:$0xf]
  %v95 = vld [vmem:[%s1 + $0x3c] sm:$0xf]
  %v96 = vld [vmem:[%s1 + $0x40] sm:$0xf]
  %v97 = vld [vmem:[%s1 + $0x44] sm:$0xf]
  %v98 = vld [vmem:[%s1 + $0x48] sm:$0xf]
  %v99 = vld [vmem:[%s1 + $0x4c] sm:$0xf]
  %v100 = vld [vmem:[%s1 + $0x50] sm:$0xf]
  %v101 = vld [vmem:[%s1 + $0x54] sm:$0xf]
  %v102 = vld [vmem:[%s1 + $0x58] sm:$0xf]
  %v103 = vld [vmem:[%s1 + $0x5c] sm:$0xf]
  %v104 = vld [vmem:[%s1 + $0x60] sm:$0xf]
  %v105 = vld [vmem:[%s1 + $0x64] sm:$0xf]
  %v106 = vld [vmem:[%s1 + $0x68] sm:$0xf]
  %v107 = vld [vmem:[%s1 + $0x6c] sm:$0xf]
  %v108 = vld [vmem:[%s1 + $0x70] sm:$0xf]
  %v109 = vld [vmem:[%s1 + $0x74] sm:$0xf]
  %v110 = vld [vmem:[%s1 + $0x78] sm:$0xf]
  %v111 = vld [vmem:[%s1 + $0x7c] sm:$0xf]
  %v144 = vunpack.c.l.b16 %v48
  %v145 = vunpack.c.h.b16 %v48
  %v146 = vunpack.c.l.b16 %v49
  %v147 = vunpack.c.h.b16 %v49
  %v148 = vunpack.c.l.b16 %v50
  %v149 = vunpack.c.h.b16 %v50
  %v150 = vunpack.c.l.b16 %v51
  %v151 = vunpack.c.h.b16 %v51
  %v152 = vunpack.c.l.b16 %v52
  %v153 = vunpack.c.h.b16 %v52
  %v154 = vunpack.c.l.b16 %v53
  %v155 = vunpack.c.h.b16 %v53
  %v156 = vunpack.c.l.b16 %v54
  %v157 = vunpack.c.h.b16 %v54
  %v158 = vunpack.c.l.b16 %v55
  %v159 = vunpack.c.h.b16 %v55
  %v160 = vunpack.c.l.b16 %v56
  %v161 = vunpack.c.h.b16 %v56
  %v162 = vunpack.c.l.b16 %v57
  %v163 = vunpack.c.h.b16 %v57
  %v164 = vunpack.c.l.b16 %v58
  %v165 = vunpack.c.h.b16 %v58
  %v166 = vunpack.c.l.b16 %v59
  %v167 = vunpack.c.h.b16 %v59
  %v168 = vunpack.c.l.b16 %v60
  %v169 = vunpack.c.h.b16 %v60
  %v170 = vunpack.c.l.b16 %v61
  %v171 = vunpack.c.h.b16 %v61
  %v172 = vunpack.c.l.b16 %v62
  %v173 = vunpack.c.h.b16 %v62
  %v174 = vunpack.c.l.b16 %v63
  %v175 = vunpack.c.h.b16 %v63
  %v176 = vunpack.c.l.b16 %v64
  %v177 = vunpack.c.h.b16 %v64
  %v178 = vunpack.c.l.b16 %v65
  %v179 = vunpack.c.h.b16 %v65
  %v180 = vunpack.c.l.b16 %v66
  %v181 = vunpack.c.h.b16 %v66
  %v182 = vunpack.c.l.b16 %v67
  %v183 = vunpack.c.h.b16 %v67
  %v184 = vunpack.c.l.b16 %v68
  %v185 = vunpack.c.h.b16 %v68
  %v186 = vunpack.c.l.b16 %v69
  %v187 = vunpack.c.h.b16 %v69
  %v188 = vunpack.c.l.b16 %v70
  %v189 = vunpack.c.h.b16 %v70
  %v190 = vunpack.c.l.b16 %v71
  %v191 = vunpack.c.h.b16 %v71
  %v192 = vunpack.c.l.b16 %v72
  %v193 = vunpack.c.h.b16 %v72
  %v194 = vunpack.c.l.b16 %v73
  %v195 = vunpack.c.h.b16 %v73
  %v196 = vunpack.c.l.b16 %v74
  %v197 = vunpack.c.h.b16 %v74
  %v198 = vunpack.c.l.b16 %v75
  %v199 = vunpack.c.h.b16 %v75
  %v200 = vunpack.c.l.b16 %v76
  %v201 = vunpack.c.h.b16 %v76
  %v202 = vunpack.c.l.b16 %v77
  %v203 = vunpack.c.h.b16 %v77
  %v204 = vunpack.c.l.b16 %v78
  %v205 = vunpack.c.h.b16 %v78
  %v206 = vunpack.c.l.b16 %v79
  %v207 = vunpack.c.h.b16 %v79
  %v208 = vpack.c.b16 %v146, %v144
  %v209 = vpack.c.b16 %v147, %v145
  %v210 = vpack.c.b16 %v150, %v148
  %v211 = vpack.c.b16 %v151, %v149
  %v212 = vpack.c.b16 %v154, %v152
  %v213 = vpack.c.b16 %v155, %v153
  %v214 = vpack.c.b16 %v158, %v156
  %v215 = vpack.c.b16 %v159, %v157
  %v216 = vpack.c.b16 %v162, %v160
  %v217 = vpack.c.b16 %v163, %v161
  %v218 = vpack.c.b16 %v166, %v164
  %v219 = vpack.c.b16 %v167, %v165
  %v220 = vpack.c.b16 %v170, %v168
  %v221 = vpack.c.b16 %v171, %v169
  %v222 = vpack.c.b16 %v174, %v172
  %v223 = vpack.c.b16 %v175, %v173
  %v224 = vpack.c.b16 %v178, %v176
  %v225 = vpack.c.b16 %v179, %v177
  %v226 = vpack.c.b16 %v182, %v180
  %v227 = vpack.c.b16 %v183, %v181
  %v228 = vpack.c.b16 %v186, %v184
  %v229 = vpack.c.b16 %v187, %v185
  %v230 = vpack.c.b16 %v190, %v188
  %v231 = vpack.c.b16 %v191, %v189
  %v232 = vpack.c.b16 %v194, %v192
  %v233 = vpack.c.b16 %v195, %v193
  %v234 = vpack.c.b16 %v198, %v196
  %v235 = vpack.c.b16 %v199, %v197
  %v236 = vpack.c.b16 %v202, %v200
  %v237 = vpack.c.b16 %v203, %v201
  %v238 = vpack.c.b16 %v206, %v204
  %v239 = vpack.c.b16 %v207, %v205
  %v304 = vunpack.c.l.b16 %v80
  %v305 = vunpack.c.l.b16 %v81
  %v306 = vunpack.c.l.b16 %v82
  %v307 = vunpack.c.l.b16 %v83
  %v308 = vunpack.c.l.b16 %v84
  %v309 = vunpack.c.l.b16 %v85
  %v310 = vunpack.c.l.b16 %v86
  %v311 = vunpack.c.l.b16 %v87
  %v312 = vunpack.c.l.b16 %v88
  %v313 = vunpack.c.l.b16 %v89
  %v314 = vunpack.c.l.b16 %v90
  %v315 = vunpack.c.l.b16 %v91
  %v316 = vunpack.c.l.b16 %v92
  %v317 = vunpack.c.l.b16 %v93
  %v318 = vunpack.c.l.b16 %v94
  %v319 = vunpack.c.l.b16 %v95
  %v320 = vunpack.c.l.b16 %v96
  %v321 = vunpack.c.l.b16 %v97
  %v322 = vunpack.c.l.b16 %v98
  %v323 = vunpack.c.l.b16 %v99
  %v324 = vunpack.c.l.b16 %v100
  %v325 = vunpack.c.l.b16 %v101
  %v326 = vunpack.c.l.b16 %v102
  %v327 = vunpack.c.l.b16 %v103
  %v328 = vunpack.c.l.b16 %v104
  %v329 = vunpack.c.l.b16 %v105
  %v330 = vunpack.c.l.b16 %v106
  %v331 = vunpack.c.l.b16 %v107
  %v332 = vunpack.c.l.b16 %v108
  %v333 = vunpack.c.l.b16 %v109
  %v334 = vunpack.c.l.b16 %v110
  %v335 = vunpack.c.l.b16 %v111
  %v336 = vpack.c.b16 %v305, %v304
  %v337 = vpack.c.b16 %v307, %v306
  %v338 = vpack.c.b16 %v309, %v308
  %v339 = vpack.c.b16 %v311, %v310
  %v340 = vpack.c.b16 %v313, %v312
  %v341 = vpack.c.b16 %v315, %v314
  %v342 = vpack.c.b16 %v317, %v316
  %v343 = vpack.c.b16 %v319, %v318
  %v344 = vpack.c.b16 %v321, %v320
  %v345 = vpack.c.b16 %v323, %v322
  %v346 = vpack.c.b16 %v325, %v324
  %v347 = vpack.c.b16 %v327, %v326
  %v348 = vpack.c.b16 %v329, %v328
  %v349 = vpack.c.b16 %v331, %v330
  %v350 = vpack.c.b16 %v333, %v332
  %v351 = vpack.c.b16 %v335, %v334
  %368 = vmatprep.subr.bf16.mxu0 0
  %369 = vmatpush1.bf16.msra.mxu0 %v343
  %370 = vmatprep.subr.bf16.mxu0 0
  %371 = vmatpush1.bf16.msra.mxu0 %v342
  %372 = vmatprep.subr.bf16.mxu0 0
  %373 = vmatpush1.bf16.msra.mxu0 %v341
  %374 = vmatprep.subr.bf16.mxu0 0
  %375 = vmatpush1.bf16.msra.mxu0 %v340
  %376 = vmatprep.subr.bf16.mxu0 0
  %377 = vmatpush1.bf16.msra.mxu0 %v339
  %378 = vmatprep.subr.bf16.mxu0 0
  %379 = vmatpush1.bf16.msra.mxu0 %v338
  %380 = vmatprep.subr.bf16.mxu0 0
  %381 = vmatpush1.bf16.msra.mxu0 %v337
  %382 = vmatprep.subr.bf16.mxu0 0
  %383 = vmatpush1.bf16.msra.mxu0 %v336
  %384 = vmatprep.subr.bf16.mxu0 0
  %385 = vmatpush2.bf16.msra.mxu0 %v351
  %386 = vmatprep.subr.bf16.mxu0 0
  %387 = vmatpush2.bf16.msra.mxu0 %v350
  %388 = vmatprep.subr.bf16.mxu0 0
  %389 = vmatpush2.bf16.msra.mxu0 %v349
  %390 = vmatprep.subr.bf16.mxu0 0
  %391 = vmatpush2.bf16.msra.mxu0 %v348
  %392 = vmatprep.subr.bf16.mxu0 0
  %393 = vmatpush2.bf16.msra.mxu0 %v347
  %394 = vmatprep.subr.bf16.mxu0 0
  %395 = vmatpush2.bf16.msra.mxu0 %v346
  %396 = vmatprep.subr.bf16.mxu0 0
  %397 = vmatpush2.bf16.msra.mxu0 %v345
  %398 = vmatprep.subr.bf16.mxu0 0
  %399 = vmatpush2.bf16.msra.mxu0 %v344
  %400 = vmatprep.mubr.bf16.mxu0 %v209
  %401 = vmatmul.mubr.bf16.gmra.mxu0 %v208
  %v402 = vpop.f32.mrf.mxu0
  %v403 = vadd.f32 0.0, %v402
  %v404 = vpop.f32.mrf.mxu0
  %v405 = vpop.f32.mrf.mxu0
  %v406 = vadd.f32 0.0, %v405
  %v407 = vpop.f32.mrf.mxu0
  %408 = vmatprep.mubr.bf16.mxu0 %v211
  %409 = vmatmul.mubr.bf16.gmra.mxu0 %v210
  %v410 = vpop.f32.mrf.mxu0
  %v411 = vadd.f32 0.0, %v410
  %v412 = vpop.f32.mrf.mxu0
  %v413 = vpop.f32.mrf.mxu0
  %v414 = vadd.f32 0.0, %v413
  %v415 = vpop.f32.mrf.mxu0
  %416 = vmatprep.mubr.bf16.mxu0 %v213
  %417 = vmatmul.mubr.bf16.gmra.mxu0 %v212
  %v418 = vpop.f32.mrf.mxu0
  %v419 = vadd.f32 0.0, %v418
  %v420 = vpop.f32.mrf.mxu0
  %v421 = vpop.f32.mrf.mxu0
  %v422 = vadd.f32 0.0, %v421
  %v423 = vpop.f32.mrf.mxu0
  %424 = vmatprep.mubr.bf16.mxu0 %v215
  %425 = vmatmul.mubr.bf16.gmra.mxu0 %v214
  %v426 = vpop.f32.mrf.mxu0
  %v427 = vadd.f32 0.0, %v426
  %v428 = vpop.f32.mrf.mxu0
  %v429 = vpop.f32.mrf.mxu0
  %v430 = vadd.f32 0.0, %v429
  %v431 = vpop.f32.mrf.mxu0
  %432 = vmatprep.mubr.bf16.mxu0 %v217
  %433 = vmatmul.mubr.bf16.gmra.mxu0 %v216
  %v434 = vpop.f32.mrf.mxu0
  %v435 = vadd.f32 0.0, %v434
  %v436 = vpop.f32.mrf.mxu0
  %v437 = vpop.f32.mrf.mxu0
  %v438 = vadd.f32 0.0, %v437
  %v439 = vpop.f32.mrf.mxu0
  %440 = vmatprep.mubr.bf16.mxu0 %v219
  %441 = vmatmul.mubr.bf16.gmra.mxu0 %v218
  %v442 = vpop.f32.mrf.mxu0
  %v443 = vadd.f32 0.0, %v442
  %v444 = vpop.f32.mrf.mxu0
  %v445 = vpop.f32.mrf.mxu0
  %v446 = vadd.f32 0.0, %v445
  %v447 = vpop.f32.mrf.mxu0
  %448 = vmatprep.mubr.bf16.mxu0 %v221
  %449 = vmatmul.mubr.bf16.gmra.mxu0 %v220
  %v450 = vpop.f32.mrf.mxu0
  %v451 = vadd.f32 0.0, %v450
  %v452 = vpop.f32.mrf.mxu0
  %v453 = vpop.f32.mrf.mxu0
  %v454 = vadd.f32 0.0, %v453
  %v455 = vpop.f32.mrf.mxu0
  %456 = vmatprep.mubr.bf16.mxu0 %v223
  %457 = vmatmul.mubr.bf16.gmra.mxu0 %v222
  %v458 = vpop.f32.mrf.mxu0
  %v459 = vadd.f32 0.0, %v458
  %v460 = vpop.f32.mrf.mxu0
  %v461 = vpop.f32.mrf.mxu0
  %v462 = vadd.f32 0.0, %v461
  %v463 = vpop.f32.mrf.mxu0
  %464 = vmatprep.mubr.bf16.mxu0 %v225
  %465 = vmatmul.mubr.bf16.gmra.mxu0 %v224
  %v466 = vpop.f32.mrf.mxu0
  %v467 = vadd.f32 0.0, %v466
  %v468 = vpop.f32.mrf.mxu0
  %v469 = vpop.f32.mrf.mxu0
  %v470 = vadd.f32 0.0, %v469
  %v471 = vpop.f32.mrf.mxu0
  %472 = vmatprep.mubr.bf16.mxu0 %v227
  %473 = vmatmul.mubr.bf16.gmra.mxu0 %v226
  %v474 = vpop.f32.mrf.mxu0
  %v475 = vadd.f32 0.0, %v474
  %v476 = vpop.f32.mrf.mxu0
  %v477 = vpop.f32.mrf.mxu0
  %v478 = vadd.f32 0.0, %v477
  %v479 = vpop.f32.mrf.mxu0
  %480 = vmatprep.mubr.bf16.mxu0 %v229
  %481 = vmatmul.mubr.bf16.gmra.mxu0 %v228
  %v482 = vpop.f32.mrf.mxu0
  %v483 = vadd.f32 0.0, %v482
  %v484 = vpop.f32.mrf.mxu0
  %v485 = vpop.f32.mrf.mxu0
  %v486 = vadd.f32 0.0, %v485
  %v487 = vpop.f32.mrf.mxu0
  %488 = vmatprep.mubr.bf16.mxu0 %v231
  %489 = vmatmul.mubr.bf16.gmra.mxu0 %v230
  %v490 = vpop.f32.mrf.mxu0
  %v491 = vadd.f32 0.0, %v490
  %v492 = vpop.f32.mrf.mxu0
  %v493 = vpop.f32.mrf.mxu0
  %v494 = vadd.f32 0.0, %v493
  %v495 = vpop.f32.mrf.mxu0
  %496 = vmatprep.mubr.bf16.mxu0 %v233
  %497 = vmatmul.mubr.bf16.gmra.mxu0 %v232
  %v498 = vpop.f32.mrf.mxu0
  %v499 = vadd.f32 0.0, %v498
  %v500 = vpop.f32.mrf.mxu0
  %v501 = vpop.f32.mrf.mxu0
  %v502 = vadd.f32 0.0, %v501
  %v503 = vpop.f32.mrf.mxu0
  %504 = vmatprep.mubr.bf16.mxu0 %v235
  %505 = vmatmul.mubr.bf16.gmra.mxu0 %v234
  %v506 = vpop.f32.mrf.mxu0
  %v507 = vadd.f32 0.0, %v506
  %v508 = vpop.f32.mrf.mxu0
  %v509 = vpop.f32.mrf.mxu0
  %v510 = vadd.f32 0.0, %v509
  %v511 = vpop.f32.mrf.mxu0
  %512 = vmatprep.mubr.bf16.mxu0 %v237
  %513 = vmatmul.mubr.bf16.gmra.mxu0 %v236
  %v514 = vpop.f32.mrf.mxu0
  %v515 = vadd.f32 0.0, %v514
  %v516 = vpop.f32.mrf.mxu0
  %v517 = vpop.f32.mrf.mxu0
  %v518 = vadd.f32 0.0, %v517
  %v519 = vpop.f32.mrf.mxu0
  %520 = vmatprep.mubr.bf16.mxu0 %v239
  %521 = vmatmul.mubr.bf16.gmra.mxu0 %v238
  %v522 = vpop.f32.mrf.mxu0
  %v523 = vadd.f32 0.0, %v522
  %v524 = vpop.f32.mrf.mxu0
  %v525 = vpop.f32.mrf.mxu0
  %v526 = vadd.f32 0.0, %v525
  %v527 = vpop.f32.mrf.mxu0
  %528 = vdwg.mxu0
  %v529 = vpack.c.bf16 %v406, %v403
  %v530 = vpack.c.bf16 %v414, %v411
  %v531 = vpack.c.bf16 %v422, %v419
  %v532 = vpack.c.bf16 %v430, %v427
  %v533 = vpack.c.bf16 %v438, %v435
  %v534 = vpack.c.bf16 %v446, %v443
  %v535 = vpack.c.bf16 %v454, %v451
  %v536 = vpack.c.bf16 %v462, %v459
  %v537 = vpack.c.bf16 %v470, %v467
  %v538 = vpack.c.bf16 %v478, %v475
  %v539 = vpack.c.bf16 %v486, %v483
  %v540 = vpack.c.bf16 %v494, %v491
  %v541 = vpack.c.bf16 %v502, %v499
  %v542 = vpack.c.bf16 %v510, %v507
  %v543 = vpack.c.bf16 %v518, %v515
  %v544 = vpack.c.bf16 %v526, %v523
  %v545 = vld [vmem:[%s2] sm:$0xff]
  %v546 = vld [vmem:[%s2 + $0x8] sm:$0xff]
  %v547 = vld [vmem:[%s2 + $0x10] sm:$0xff]
  %v548 = vld [vmem:[%s2 + $0x18] sm:$0xff]
  %v549 = vld [vmem:[%s2 + $0x20] sm:$0xff]
  %v550 = vld [vmem:[%s2 + $0x28] sm:$0xff]
  %v551 = vld [vmem:[%s2 + $0x30] sm:$0xff]
  %v552 = vld [vmem:[%s2 + $0x38] sm:$0xff]
  %v553 = vld [vmem:[%s2 + $0x40] sm:$0xff]
  %v554 = vld [vmem:[%s2 + $0x48] sm:$0xff]
  %v555 = vld [vmem:[%s2 + $0x50] sm:$0xff]
  %v556 = vld [vmem:[%s2 + $0x58] sm:$0xff]
  %v557 = vld [vmem:[%s2 + $0x60] sm:$0xff]
  %v558 = vld [vmem:[%s2 + $0x68] sm:$0xff]
  %v559 = vld [vmem:[%s2 + $0x70] sm:$0xff]
  %v560 = vld [vmem:[%s2 + $0x78] sm:$0xff]
  %v561 = vld [vmem:[%s3] sm:$0x3]
  %v563 = vlaneseq
  %v564 = vshrl.u32 %v563, 7
  %v565 = vsub.s32 0, %v564
  %v566 = vrot.slane %v561, %v565
  %v567 = vlaneseq
  %v568 = vshrl.u32 %v567, 7
  %v569 = vsub.s32 1, %v568
  %v570 = vrot.slane %v561, %v569
  %v589 = vunpack.c.l.b16 %v545
  %v590 = vunpack.c.h.b16 %v545
  %v591 = vunpack.c.l.b16 %v546
  %v592 = vunpack.c.h.b16 %v546
  %v593 = vunpack.c.l.b16 %v547
  %v594 = vunpack.c.h.b16 %v547
  %v595 = vunpack.c.l.b16 %v548
  %v596 = vunpack.c.h.b16 %v548
  %v597 = vunpack.c.l.b16 %v549
  %v598 = vunpack.c.h.b16 %v549
  %v599 = vunpack.c.l.b16 %v550
  %v600 = vunpack.c.h.b16 %v550
  %v601 = vunpack.c.l.b16 %v551
  %v602 = vunpack.c.h.b16 %v551
  %v603 = vunpack.c.l.b16 %v552
  %v604 = vunpack.c.h.b16 %v552
  %v605 = vunpack.c.l.b16 %v553
  %v606 = vunpack.c.h.b16 %v553
  %v607 = vunpack.c.l.b16 %v554
  %v608 = vunpack.c.h.b16 %v554
  %v609 = vunpack.c.l.b16 %v555
  %v610 = vunpack.c.h.b16 %v555
  %v611 = vunpack.c.l.b16 %v556
  %v612 = vunpack.c.h.b16 %v556
  %v613 = vunpack.c.l.b16 %v557
  %v614 = vunpack.c.h.b16 %v557
  %v615 = vunpack.c.l.b16 %v558
  %v616 = vunpack.c.h.b16 %v558
  %v617 = vunpack.c.l.b16 %v559
  %v618 = vunpack.c.h.b16 %v559
  %v619 = vunpack.c.l.b16 %v560
  %v620 = vunpack.c.h.b16 %v560
  %v621 = vpack.c.b16 %v591, %v589
  %v622 = vpack.c.b16 %v592, %v590
  %v623 = vpack.c.b16 %v595, %v593
  %v624 = vpack.c.b16 %v596, %v594
  %v625 = vpack.c.b16 %v599, %v597
  %v626 = vpack.c.b16 %v600, %v598
  %v627 = vpack.c.b16 %v603, %v601
  %v628 = vpack.c.b16 %v604, %v602
  %v629 = vpack.c.b16 %v607, %v605
  %v630 = vpack.c.b16 %v608, %v606
  %v631 = vpack.c.b16 %v611, %v609
  %v632 = vpack.c.b16 %v612, %v610
  %v633 = vpack.c.b16 %v615, %v613
  %v634 = vpack.c.b16 %v616, %v614
  %v635 = vpack.c.b16 %v619, %v617
  %v636 = vpack.c.b16 %v620, %v618
  %653 = vmatprep.subr.bf16.mxu0 %v636
  %654 = vmatpush1.bf16.msra.mxu0 %v635
  %655 = vmatprep.subr.bf16.mxu0 %v634
  %656 = vmatpush1.bf16.msra.mxu0 %v633
  %657 = vmatprep.subr.bf16.mxu0 %v632
  %658 = vmatpush1.bf16.msra.mxu0 %v631
  %659 = vmatprep.subr.bf16.mxu0 %v630
  %660 = vmatpush1.bf16.msra.mxu0 %v629
  %661 = vmatprep.subr.bf16.mxu0 %v628
  %662 = vmatpush1.bf16.msra.mxu0 %v627
  %663 = vmatprep.subr.bf16.mxu0 %v626
  %664 = vmatpush1.bf16.msra.mxu0 %v625
  %665 = vmatprep.subr.bf16.mxu0 %v624
  %666 = vmatpush1.bf16.msra.mxu0 %v623
  %667 = vmatprep.subr.bf16.mxu0 %v622
  %668 = vmatpush1.bf16.msra.mxu0 %v621
  %669 = vmatprep.subr.bf16.mxu0 0
  %670 = vmatpush2.bf16.msra.mxu0 0
  %671 = vmatprep.subr.bf16.mxu0 0
  %672 = vmatpush2.bf16.msra.mxu0 0
  %673 = vmatprep.subr.bf16.mxu0 0
  %674 = vmatpush2.bf16.msra.mxu0 0
  %675 = vmatprep.subr.bf16.mxu0 0
  %676 = vmatpush2.bf16.msra.mxu0 0
  %677 = vmatprep.subr.bf16.mxu0 0
  %678 = vmatpush2.bf16.msra.mxu0 0
  %679 = vmatprep.subr.bf16.mxu0 0
  %680 = vmatpush2.bf16.msra.mxu0 0
  %681 = vmatprep.subr.bf16.mxu0 0
  %682 = vmatpush2.bf16.msra.mxu0 0
  %683 = vmatprep.subr.bf16.mxu0 0
  %684 = vmatpush2.bf16.msra.mxu0 0
  %685 = vmatprep.mubr.bf16.mxu0 0
  %686 = vmatmul.mubr.bf16.gmra.mxu0 %v529
  %v687 = vpop.f32.mrf.mxu0
  %v688 = vadd.f32 %v566, %v687
  %v689 = vpop.f32.mrf.mxu0
  %v690 = vadd.f32 %v570, %v689
  %v691 = vpop.f32.mrf.mxu0
  %v692 = vadd.f32 %v566, %v691
  %v693 = vpop.f32.mrf.mxu0
  %v694 = vadd.f32 %v570, %v693
  %695 = vmatprep.mubr.bf16.mxu0 0
  %696 = vmatmul.mubr.bf16.gmra.mxu0 %v530
  %v697 = vpop.f32.mrf.mxu0
  %v698 = vadd.f32 %v566, %v697
  %v699 = vpop.f32.mrf.mxu0
  %v700 = vadd.f32 %v570, %v699
  %v701 = vpop.f32.mrf.mxu0
  %v702 = vadd.f32 %v566, %v701
  %v703 = vpop.f32.mrf.mxu0
  %v704 = vadd.f32 %v570, %v703
  %705 = vmatprep.mubr.bf16.mxu0 0
  %706 = vmatmul.mubr.bf16.gmra.mxu0 %v531
  %v707 = vpop.f32.mrf.mxu0
  %v708 = vadd.f32 %v566, %v707
  %v709 = vpop.f32.mrf.mxu0
  %v710 = vadd.f32 %v570, %v709
  %v711 = vpop.f32.mrf.mxu0
  %v712 = vadd.f32 %v566, %v711
  %v713 = vpop.f32.mrf.mxu0
  %v714 = vadd.f32 %v570, %v713
  %715 = vmatprep.mubr.bf16.mxu0 0
  %716 = vmatmul.mubr.bf16.gmra.mxu0 %v532
  %v717 = vpop.f32.mrf.mxu0
  %v718 = vadd.f32 %v566, %v717
  %v719 = vpop.f32.mrf.mxu0
  %v720 = vadd.f32 %v570, %v719
  %v721 = vpop.f32.mrf.mxu0
  %v722 = vadd.f32 %v566, %v721
  %v723 = vpop.f32.mrf.mxu0
  %v724 = vadd.f32 %v570, %v723
  %725 = vmatprep.mubr.bf16.mxu0 0
  %726 = vmatmul.mubr.bf16.gmra.mxu0 %v533
  %v727 = vpop.f32.mrf.mxu0
  %v728 = vadd.f32 %v566, %v727
  %v729 = vpop.f32.mrf.mxu0
  %v730 = vadd.f32 %v570, %v729
  %v731 = vpop.f32.mrf.mxu0
  %v732 = vadd.f32 %v566, %v731
  %v733 = vpop.f32.mrf.mxu0
  %v734 = vadd.f32 %v570, %v733
  %735 = vmatprep.mubr.bf16.mxu0 0
  %736 = vmatmul.mubr.bf16.gmra.mxu0 %v534
  %v737 = vpop.f32.mrf.mxu0
  %v738 = vadd.f32 %v566, %v737
  %v739 = vpop.f32.mrf.mxu0
  %v740 = vadd.f32 %v570, %v739
  %v741 = vpop.f32.mrf.mxu0
  %v742 = vadd.f32 %v566, %v741
  %v743 = vpop.f32.mrf.mxu0
  %v744 = vadd.f32 %v570, %v743
  %745 = vmatprep.mubr.bf16.mxu0 0
  %746 = vmatmul.mubr.bf16.gmra.mxu0 %v535
  %v747 = vpop.f32.mrf.mxu0
  %v748 = vadd.f32 %v566, %v747
  %v749 = vpop.f32.mrf.mxu0
  %v750 = vadd.f32 %v570, %v749
  %v751 = vpop.f32.mrf.mxu0
  %v752 = vadd.f32 %v566, %v751
  %v753 = vpop.f32.mrf.mxu0
  %v754 = vadd.f32 %v570, %v753
  %755 = vmatprep.mubr.bf16.mxu0 0
  %756 = vmatmul.mubr.bf16.gmra.mxu0 %v536
  %v757 = vpop.f32.mrf.mxu0
  %v758 = vadd.f32 %v566, %v757
  %v759 = vpop.f32.mrf.mxu0
  %v760 = vadd.f32 %v570, %v759
  %v761 = vpop.f32.mrf.mxu0
  %v762 = vadd.f32 %v566, %v761
  %v763 = vpop.f32.mrf.mxu0
  %v764 = vadd.f32 %v570, %v763
  %765 = vmatprep.mubr.bf16.mxu0 0
  %766 = vmatmul.mubr.bf16.gmra.mxu0 %v537
  %v767 = vpop.f32.mrf.mxu0
  %v768 = vadd.f32 %v566, %v767
  %v769 = vpop.f32.mrf.mxu0
  %v770 = vadd.f32 %v570, %v769
  %v771 = vpop.f32.mrf.mxu0
  %v772 = vadd.f32 %v566, %v771
  %v773 = vpop.f32.mrf.mxu0
  %v774 = vadd.f32 %v570, %v773
  %775 = vmatprep.mubr.bf16.mxu0 0
  %776 = vmatmul.mubr.bf16.gmra.mxu0 %v538
  %v777 = vpop.f32.mrf.mxu0
  %v778 = vadd.f32 %v566, %v777
  %v779 = vpop.f32.mrf.mxu0
  %v780 = vadd.f32 %v570, %v779
  %v781 = vpop.f32.mrf.mxu0
  %v782 = vadd.f32 %v566, %v781
  %v783 = vpop.f32.mrf.mxu0
  %v784 = vadd.f32 %v570, %v783
  %785 = vmatprep.mubr.bf16.mxu0 0
  %786 = vmatmul.mubr.bf16.gmra.mxu0 %v539
  %v787 = vpop.f32.mrf.mxu0
  %v788 = vadd.f32 %v566, %v787
  %v789 = vpop.f32.mrf.mxu0
  %v790 = vadd.f32 %v570, %v789
  %v791 = vpop.f32.mrf.mxu0
  %v792 = vadd.f32 %v566, %v791
  %v793 = vpop.f32.mrf.mxu0
  %v794 = vadd.f32 %v570, %v793
  %795 = vmatprep.mubr.bf16.mxu0 0
  %796 = vmatmul.mubr.bf16.gmra.mxu0 %v540
  %v797 = vpop.f32.mrf.mxu0
  %v798 = vadd.f32 %v566, %v797
  %v799 = vpop.f32.mrf.mxu0
  %v800 = vadd.f32 %v570, %v799
  %v801 = vpop.f32.mrf.mxu0
  %v802 = vadd.f32 %v566, %v801
  %v803 = vpop.f32.mrf.mxu0
  %v804 = vadd.f32 %v570, %v803
  %805 = vmatprep.mubr.bf16.mxu0 0
  %806 = vmatmul.mubr.bf16.gmra.mxu0 %v541
  %v807 = vpop.f32.mrf.mxu0
  %v808 = vadd.f32 %v566, %v807
  %v809 = vpop.f32.mrf.mxu0
  %v810 = vadd.f32 %v570, %v809
  %v811 = vpop.f32.mrf.mxu0
  %v812 = vadd.f32 %v566, %v811
  %v813 = vpop.f32.mrf.mxu0
  %v814 = vadd.f32 %v570, %v813
  %815 = vmatprep.mubr.bf16.mxu0 0
  %816 = vmatmul.mubr.bf16.gmra.mxu0 %v542
  %v817 = vpop.f32.mrf.mxu0
  %v818 = vadd.f32 %v566, %v817
  %v819 = vpop.f32.mrf.mxu0
  %v820 = vadd.f32 %v570, %v819
  %v821 = vpop.f32.mrf.mxu0
  %v822 = vadd.f32 %v566, %v821
  %v823 = vpop.f32.mrf.mxu0
  %v824 = vadd.f32 %v570, %v823
  %825 = vmatprep.mubr.bf16.mxu0 0
  %826 = vmatmul.mubr.bf16.gmra.mxu0 %v543
  %v827 = vpop.f32.mrf.mxu0
  %v828 = vadd.f32 %v566, %v827
  %v829 = vpop.f32.mrf.mxu0
  %v830 = vadd.f32 %v570, %v829
  %v831 = vpop.f32.mrf.mxu0
  %v832 = vadd.f32 %v566, %v831
  %v833 = vpop.f32.mrf.mxu0
  %v834 = vadd.f32 %v570, %v833
  %835 = vmatprep.mubr.bf16.mxu0 0
  %836 = vmatmul.mubr.bf16.gmra.mxu0 %v544
  %v837 = vpop.f32.mrf.mxu0
  %v838 = vadd.f32 %v566, %v837
  %v839 = vpop.f32.mrf.mxu0
  %v840 = vadd.f32 %v570, %v839
  %v841 = vpop.f32.mrf.mxu0
  %v842 = vadd.f32 %v566, %v841
  %v843 = vpop.f32.mrf.mxu0
  %v844 = vadd.f32 %v570, %v843
  %845 = vdwg.mxu0
  %v846 = vmax.f32 %v688, 0.0
  %v847 = vmax.f32 %v690, 0.0
  %v848 = vmax.f32 %v692, 0.0
  %v849 = vmax.f32 %v694, 0.0
  %v850 = vmax.f32 %v698, 0.0
  %v851 = vmax.f32 %v700, 0.0
  %v852 = vmax.f32 %v702, 0.0
  %v853 = vmax.f32 %v704, 0.0
  %v854 = vmax.f32 %v708, 0.0
  %v855 = vmax.f32 %v710, 0.0
  %v856 = vmax.f32 %v712, 0.0
  %v857 = vmax.f32 %v714, 0.0
  %v858 = vmax.f32 %v718, 0.0
  %v859 = vmax.f32 %v720, 0.0
  %v860 = vmax.f32 %v722, 0.0
  %v861 = vmax.f32 %v724, 0.0
  %v862 = vmax.f32 %v728, 0.0
  %v863 = vmax.f32 %v730, 0.0
  %v864 = vmax.f32 %v732, 0.0
  %v865 = vmax.f32 %v734, 0.0
  %v866 = vmax.f32 %v738, 0.0
  %v867 = vmax.f32 %v740, 0.0
  %v868 = vmax.f32 %v742, 0.0
  %v869 = vmax.f32 %v744, 0.0
  %v870 = vmax.f32 %v748, 0.0
  %v871 = vmax.f32 %v750, 0.0
  %v872 = vmax.f32 %v752, 0.0
  %v873 = vmax.f32 %v754, 0.0
  %v874 = vmax.f32 %v758, 0.0
  %v875 = vmax.f32 %v760, 0.0
  %v876 = vmax.f32 %v762, 0.0
  %v877 = vmax.f32 %v764, 0.0
  %v878 = vmax.f32 %v768, 0.0
  %v879 = vmax.f32 %v770, 0.0
  %v880 = vmax.f32 %v772, 0.0
  %v881 = vmax.f32 %v774, 0.0
  %v882 = vmax.f32 %v778, 0.0
  %v883 = vmax.f32 %v780, 0.0
  %v884 = vmax.f32 %v782, 0.0
  %v885 = vmax.f32 %v784, 0.0
  %v886 = vmax.f32 %v788, 0.0
  %v887 = vmax.f32 %v790, 0.0
  %v888 = vmax.f32 %v792, 0.0
  %v889 = vmax.f32 %v794, 0.0
  %v890 = vmax.f32 %v798, 0.0
  %v891 = vmax.f32 %v800, 0.0
  %v892 = vmax.f32 %v802, 0.0
  %v893 = vmax.f32 %v804, 0.0
  %v894 = vmax.f32 %v808, 0.0
  %v895 = vmax.f32 %v810, 0.0
  %v896 = vmax.f32 %v812, 0.0
  %v897 = vmax.f32 %v814, 0.0
  %v898 = vmax.f32 %v818, 0.0
  %v899 = vmax.f32 %v820, 0.0
  %v900 = vmax.f32 %v822, 0.0
  %v901 = vmax.f32 %v824, 0.0
  %v902 = vmax.f32 %v828, 0.0
  %v903 = vmax.f32 %v830, 0.0
  %v904 = vmax.f32 %v832, 0.0
  %v905 = vmax.f32 %v834, 0.0
  %v906 = vmax.f32 %v838, 0.0
  %v907 = vmax.f32 %v840, 0.0
  %v908 = vmax.f32 %v842, 0.0
  %v909 = vmax.f32 %v844, 0.0
  %v910 = vpack.c.bf16 %v848, %v846
  %v911 = vpack.c.bf16 %v849, %v847
  %v912 = vpack.c.bf16 %v852, %v850
  %v913 = vpack.c.bf16 %v853, %v851
  %v914 = vpack.c.bf16 %v856, %v854
  %v915 = vpack.c.bf16 %v857, %v855
  %v916 = vpack.c.bf16 %v860, %v858
  %v917 = vpack.c.bf16 %v861, %v859
  %v918 = vpack.c.bf16 %v864, %v862
  %v919 = vpack.c.bf16 %v865, %v863
  %v920 = vpack.c.bf16 %v868, %v866
  %v921 = vpack.c.bf16 %v869, %v867
  %v922 = vpack.c.bf16 %v872, %v870
  %v923 = vpack.c.bf16 %v873, %v871
  %v924 = vpack.c.bf16 %v876, %v874
  %v925 = vpack.c.bf16 %v877, %v875
  %v926 = vpack.c.bf16 %v880, %v878
  %v927 = vpack.c.bf16 %v881, %v879
  %v928 = vpack.c.bf16 %v884, %v882
  %v929 = vpack.c.bf16 %v885, %v883
  %v930 = vpack.c.bf16 %v888, %v886
  %v931 = vpack.c.bf16 %v889, %v887
  %v932 = vpack.c.bf16 %v892, %v890
  %v933 = vpack.c.bf16 %v893, %v891
  %v934 = vpack.c.bf16 %v896, %v894
  %v935 = vpack.c.bf16 %v897, %v895
  %v936 = vpack.c.bf16 %v900, %v898
  %v937 = vpack.c.bf16 %v901, %v899
  %v938 = vpack.c.bf16 %v904, %v902
  %v939 = vpack.c.bf16 %v905, %v903
  %v940 = vpack.c.bf16 %v908, %v906
  %v941 = vpack.c.bf16 %v909, %v907
  %v942 = vld [vmem:[%s4] sm:$0xff]
  %v943 = vld [vmem:[%s4 + $0x8] sm:$0xff]
  %v944 = vld [vmem:[%s4 + $0x10] sm:$0xff]
  %v945 = vld [vmem:[%s4 + $0x18] sm:$0xff]
  %v946 = vld [vmem:[%s4 + $0x20] sm:$0xff]
  %v947 = vld [vmem:[%s4 + $0x28] sm:$0xff]
  %v948 = vld [vmem:[%s4 + $0x30] sm:$0xff]
  %v949 = vld [vmem:[%s4 + $0x38] sm:$0xff]
  %v950 = vld [vmem:[%s4 + $0x40] sm:$0xff]
  %v951 = vld [vmem:[%s4 + $0x48] sm:$0xff]
  %v952 = vld [vmem:[%s4 + $0x50] sm:$0xff]
  %v953 = vld [vmem:[%s4 + $0x58] sm:$0xff]
  %v954 = vld [vmem:[%s4 + $0x60] sm:$0xff]
  %v955 = vld [vmem:[%s4 + $0x68] sm:$0xff]
  %v956 = vld [vmem:[%s4 + $0x70] sm:$0xff]
  %v957 = vld [vmem:[%s4 + $0x78] sm:$0xff]
  %v958 = vld [vmem:[%s4 + $0x80] sm:$0xff]
  %v959 = vld [vmem:[%s4 + $0x88] sm:$0xff]
  %v960 = vld [vmem:[%s4 + $0x90] sm:$0xff]
  %v961 = vld [vmem:[%s4 + $0x98] sm:$0xff]
  %v962 = vld [vmem:[%s4 + $0xa0] sm:$0xff]
  %v963 = vld [vmem:[%s4 + $0xa8] sm:$0xff]
  %v964 = vld [vmem:[%s4 + $0xb0] sm:$0xff]
  %v965 = vld [vmem:[%s4 + $0xb8] sm:$0xff]
  %v966 = vld [vmem:[%s4 + $0xc0] sm:$0xff]
  %v967 = vld [vmem:[%s4 + $0xc8] sm:$0xff]
  %v968 = vld [vmem:[%s4 + $0xd0] sm:$0xff]
  %v969 = vld [vmem:[%s4 + $0xd8] sm:$0xff]
  %v970 = vld [vmem:[%s4 + $0xe0] sm:$0xff]
  %v971 = vld [vmem:[%s4 + $0xe8] sm:$0xff]
  %v972 = vld [vmem:[%s4 + $0xf0] sm:$0xff]
  %v973 = vld [vmem:[%s4 + $0xf8] sm:$0xff]
  %v974 = vld [vmem:[%s5] sm:$0x3]
  %v976 = vlaneseq
  %v977 = vshrl.u32 %v976, 7
  %v978 = vsub.s32 0, %v977
  %v979 = vrot.slane %v974, %v978
  %v980 = vlaneseq
  %v981 = vshrl.u32 %v980, 7
  %v982 = vsub.s32 1, %v981
  %v983 = vrot.slane %v974, %v982
  %v1018 = vunpack.c.l.b16 %v942
  %v1019 = vunpack.c.h.b16 %v942
  %v1020 = vunpack.c.l.b16 %v943
  %v1021 = vunpack.c.h.b16 %v943
  %v1022 = vunpack.c.l.b16 %v944
  %v1023 = vunpack.c.h.b16 %v944
  %v1024 = vunpack.c.l.b16 %v945
  %v1025 = vunpack.c.h.b16 %v945
  %v1026 = vunpack.c.l.b16 %v946
  %v1027 = vunpack.c.h.b16 %v946
  %v1028 = vunpack.c.l.b16 %v947
  %v1029 = vunpack.c.h.b16 %v947
  %v1030 = vunpack.c.l.b16 %v948
  %v1031 = vunpack.c.h.b16 %v948
  %v1032 = vunpack.c.l.b16 %v949
  %v1033 = vunpack.c.h.b16 %v949
  %v1034 = vunpack.c.l.b16 %v950
  %v1035 = vunpack.c.h.b16 %v950
  %v1036 = vunpack.c.l.b16 %v951
  %v1037 = vunpack.c.h.b16 %v951
  %v1038 = vunpack.c.l.b16 %v952
  %v1039 = vunpack.c.h.b16 %v952
  %v1040 = vunpack.c.l.b16 %v953
  %v1041 = vunpack.c.h.b16 %v953
  %v1042 = vunpack.c.l.b16 %v954
  %v1043 = vunpack.c.h.b16 %v954
  %v1044 = vunpack.c.l.b16 %v955
  %v1045 = vunpack.c.h.b16 %v955
  %v1046 = vunpack.c.l.b16 %v956
  %v1047 = vunpack.c.h.b16 %v956
  %v1048 = vunpack.c.l.b16 %v957
  %v1049 = vunpack.c.h.b16 %v957
  %v1050 = vunpack.c.l.b16 %v958
  %v1051 = vunpack.c.h.b16 %v958
  %v1052 = vunpack.c.l.b16 %v959
  %v1053 = vunpack.c.h.b16 %v959
  %v1054 = vunpack.c.l.b16 %v960
  %v1055 = vunpack.c.h.b16 %v960
  %v1056 = vunpack.c.l.b16 %v961
  %v1057 = vunpack.c.h.b16 %v961
  %v1058 = vunpack.c.l.b16 %v962
  %v1059 = vunpack.c.h.b16 %v962
  %v1060 = vunpack.c.l.b16 %v963
  %v1061 = vunpack.c.h.b16 %v963
  %v1062 = vunpack.c.l.b16 %v964
  %v1063 = vunpack.c.h.b16 %v964
  %v1064 = vunpack.c.l.b16 %v965
  %v1065 = vunpack.c.h.b16 %v965
  %v1066 = vunpack.c.l.b16 %v966
  %v1067 = vunpack.c.h.b16 %v966
  %v1068 = vunpack.c.l.b16 %v967
  %v1069 = vunpack.c.h.b16 %v967
  %v1070 = vunpack.c.l.b16 %v968
  %v1071 = vunpack.c.h.b16 %v968
  %v1072 = vunpack.c.l.b16 %v969
  %v1073 = vunpack.c.h.b16 %v969
  %v1074 = vunpack.c.l.b16 %v970
  %v1075 = vunpack.c.h.b16 %v970
  %v1076 = vunpack.c.l.b16 %v971
  %v1077 = vunpack.c.h.b16 %v971
  %v1078 = vunpack.c.l.b16 %v972
  %v1079 = vunpack.c.h.b16 %v972
  %v1080 = vunpack.c.l.b16 %v973
  %v1081 = vunpack.c.h.b16 %v973
  %v1082 = vpack.c.b16 %v1020, %v1018
  %v1083 = vpack.c.b16 %v1021, %v1019
  %v1084 = vpack.c.b16 %v1024, %v1022
  %v1085 = vpack.c.b16 %v1025, %v1023
  %v1086 = vpack.c.b16 %v1028, %v1026
  %v1087 = vpack.c.b16 %v1029, %v1027
  %v1088 = vpack.c.b16 %v1032, %v1030
  %v1089 = vpack.c.b16 %v1033, %v1031
  %v1090 = vpack.c.b16 %v1036, %v1034
  %v1091 = vpack.c.b16 %v1037, %v1035
  %v1092 = vpack.c.b16 %v1040, %v1038
  %v1093 = vpack.c.b16 %v1041, %v1039
  %v1094 = vpack.c.b16 %v1044, %v1042
  %v1095 = vpack.c.b16 %v1045, %v1043
  %v1096 = vpack.c.b16 %v1048, %v1046
  %v1097 = vpack.c.b16 %v1049, %v1047
  %v1098 = vpack.c.b16 %v1052, %v1050
  %v1099 = vpack.c.b16 %v1053, %v1051
  %v1100 = vpack.c.b16 %v1056, %v1054
  %v1101 = vpack.c.b16 %v1057, %v1055
  %v1102 = vpack.c.b16 %v1060, %v1058
  %v1103 = vpack.c.b16 %v1061, %v1059
  %v1104 = vpack.c.b16 %v1064, %v1062
  %v1105 = vpack.c.b16 %v1065, %v1063
  %v1106 = vpack.c.b16 %v1068, %v1066
  %v1107 = vpack.c.b16 %v1069, %v1067
  %v1108 = vpack.c.b16 %v1072, %v1070
  %v1109 = vpack.c.b16 %v1073, %v1071
  %v1110 = vpack.c.b16 %v1076, %v1074
  %v1111 = vpack.c.b16 %v1077, %v1075
  %v1112 = vpack.c.b16 %v1080, %v1078
  %v1113 = vpack.c.b16 %v1081, %v1079
  %1146 = vmatprep.subr.bf16.mxu0 %v1097
  %1147 = vmatpush1.bf16.msra.mxu0 %v1096
  %1148 = vmatprep.subr.bf16.mxu0 %v1095
  %1149 = vmatpush1.bf16.msra.mxu0 %v1094
  %1150 = vmatprep.subr.bf16.mxu0 %v1093
  %1151 = vmatpush1.bf16.msra.mxu0 %v1092
  %1152 = vmatprep.subr.bf16.mxu0 %v1091
  %1153 = vmatpush1.bf16.msra.mxu0 %v1090
  %1154 = vmatprep.subr.bf16.mxu0 %v1089
  %1155 = vmatpush1.bf16.msra.mxu0 %v1088
  %1156 = vmatprep.subr.bf16.mxu0 %v1087
  %1157 = vmatpush1.bf16.msra.mxu0 %v1086
  %1158 = vmatprep.subr.bf16.mxu0 %v1085
  %1159 = vmatpush1.bf16.msra.mxu0 %v1084
  %1160 = vmatprep.subr.bf16.mxu0 %v1083
  %1161 = vmatpush1.bf16.msra.mxu0 %v1082
  %1162 = vmatprep.subr.bf16.mxu0 %v1113
  %1163 = vmatpush2.bf16.msra.mxu0 %v1112
  %1164 = vmatprep.subr.bf16.mxu0 %v1111
  %1165 = vmatpush2.bf16.msra.mxu0 %v1110
  %1166 = vmatprep.subr.bf16.mxu0 %v1109
  %1167 = vmatpush2.bf16.msra.mxu0 %v1108
  %1168 = vmatprep.subr.bf16.mxu0 %v1107
  %1169 = vmatpush2.bf16.msra.mxu0 %v1106
  %1170 = vmatprep.subr.bf16.mxu0 %v1105
  %1171 = vmatpush2.bf16.msra.mxu0 %v1104
  %1172 = vmatprep.subr.bf16.mxu0 %v1103
  %1173 = vmatpush2.bf16.msra.mxu0 %v1102
  %1174 = vmatprep.subr.bf16.mxu0 %v1101
  %1175 = vmatpush2.bf16.msra.mxu0 %v1100
  %1176 = vmatprep.subr.bf16.mxu0 %v1099
  %1177 = vmatpush2.bf16.msra.mxu0 %v1098
  %1178 = vmatprep.mubr.bf16.mxu0 %v911
  %1179 = vmatmul.mubr.bf16.gmra.mxu0 %v910
  %v1180 = vpop.f32.mrf.mxu0
  %v1181 = vadd.f32 %v979, %v1180
  %v1182 = vpop.f32.mrf.mxu0
  %v1183 = vadd.f32 %v983, %v1182
  %v1184 = vpop.f32.mrf.mxu0
  %v1185 = vadd.f32 %v979, %v1184
  %v1186 = vpop.f32.mrf.mxu0
  %v1187 = vadd.f32 %v983, %v1186
  %1188 = vmatprep.mubr.bf16.mxu0 %v913
  %1189 = vmatmul.mubr.bf16.gmra.mxu0 %v912
  %v1190 = vpop.f32.mrf.mxu0
  %v1191 = vadd.f32 %v979, %v1190
  %v1192 = vpop.f32.mrf.mxu0
  %v1193 = vadd.f32 %v983, %v1192
  %v1194 = vpop.f32.mrf.mxu0
  %v1195 = vadd.f32 %v979, %v1194
  %v1196 = vpop.f32.mrf.mxu0
  %v1197 = vadd.f32 %v983, %v1196
  %1198 = vmatprep.mubr.bf16.mxu0 %v915
  %1199 = vmatmul.mubr.bf16.gmra.mxu0 %v914
  %v1200 = vpop.f32.mrf.mxu0
  %v1201 = vadd.f32 %v979, %v1200
  %v1202 = vpop.f32.mrf.mxu0
  %v1203 = vadd.f32 %v983, %v1202
  %v1204 = vpop.f32.mrf.mxu0
  %v1205 = vadd.f32 %v979, %v1204
  %v1206 = vpop.f32.mrf.mxu0
  %v1207 = vadd.f32 %v983, %v1206
  %1208 = vmatprep.mubr.bf16.mxu0 %v917
  %1209 = vmatmul.mubr.bf16.gmra.mxu0 %v916
  %v1210 = vpop.f32.mrf.mxu0
  %v1211 = vadd.f32 %v979, %v1210
  %v1212 = vpop.f32.mrf.mxu0
  %v1213 = vadd.f32 %v983, %v1212
  %v1214 = vpop.f32.mrf.mxu0
  %v1215 = vadd.f32 %v979, %v1214
  %v1216 = vpop.f32.mrf.mxu0
  %v1217 = vadd.f32 %v983, %v1216
  %1218 = vmatprep.mubr.bf16.mxu0 %v919
  %1219 = vmatmul.mubr.bf16.gmra.mxu0 %v918
  %v1220 = vpop.f32.mrf.mxu0
  %v1221 = vadd.f32 %v979, %v1220
  %v1222 = vpop.f32.mrf.mxu0
  %v1223 = vadd.f32 %v983, %v1222
  %v1224 = vpop.f32.mrf.mxu0
  %v1225 = vadd.f32 %v979, %v1224
  %v1226 = vpop.f32.mrf.mxu0
  %v1227 = vadd.f32 %v983, %v1226
  %1228 = vmatprep.mubr.bf16.mxu0 %v921
  %1229 = vmatmul.mubr.bf16.gmra.mxu0 %v920
  %v1230 = vpop.f32.mrf.mxu0
  %v1231 = vadd.f32 %v979, %v1230
  %v1232 = vpop.f32.mrf.mxu0
  %v1233 = vadd.f32 %v983, %v1232
  %v1234 = vpop.f32.mrf.mxu0
  %v1235 = vadd.f32 %v979, %v1234
  %v1236 = vpop.f32.mrf.mxu0
  %v1237 = vadd.f32 %v983, %v1236
  %1238 = vmatprep.mubr.bf16.mxu0 %v923
  %1239 = vmatmul.mubr.bf16.gmra.mxu0 %v922
  %v1240 = vpop.f32.mrf.mxu0
  %v1241 = vadd.f32 %v979, %v1240
  %v1242 = vpop.f32.mrf.mxu0
  %v1243 = vadd.f32 %v983, %v1242
  %v1244 = vpop.f32.mrf.mxu0
  %v1245 = vadd.f32 %v979, %v1244
  %v1246 = vpop.f32.mrf.mxu0
  %v1247 = vadd.f32 %v983, %v1246
  %1248 = vmatprep.mubr.bf16.mxu0 %v925
  %1249 = vmatmul.mubr.bf16.gmra.mxu0 %v924
  %v1250 = vpop.f32.mrf.mxu0
  %v1251 = vadd.f32 %v979, %v1250
  %v1252 = vpop.f32.mrf.mxu0
  %v1253 = vadd.f32 %v983, %v1252
  %v1254 = vpop.f32.mrf.mxu0
  %v1255 = vadd.f32 %v979, %v1254
  %v1256 = vpop.f32.mrf.mxu0
  %v1257 = vadd.f32 %v983, %v1256
  %1258 = vmatprep.mubr.bf16.mxu0 %v927
  %1259 = vmatmul.mubr.bf16.gmra.mxu0 %v926
  %v1260 = vpop.f32.mrf.mxu0
  %v1261 = vadd.f32 %v979, %v1260
  %v1262 = vpop.f32.mrf.mxu0
  %v1263 = vadd.f32 %v983, %v1262
  %v1264 = vpop.f32.mrf.mxu0
  %v1265 = vadd.f32 %v979, %v1264
  %v1266 = vpop.f32.mrf.mxu0
  %v1267 = vadd.f32 %v983, %v1266
  %1268 = vmatprep.mubr.bf16.mxu0 %v929
  %1269 = vmatmul.mubr.bf16.gmra.mxu0 %v928
  %v1270 = vpop.f32.mrf.mxu0
  %v1271 = vadd.f32 %v979, %v1270
  %v1272 = vpop.f32.mrf.mxu0
  %v1273 = vadd.f32 %v983, %v1272
  %v1274 = vpop.f32.mrf.mxu0
  %v1275 = vadd.f32 %v979, %v1274
  %v1276 = vpop.f32.mrf.mxu0
  %v1277 = vadd.f32 %v983, %v1276
  %1278 = vmatprep.mubr.bf16.mxu0 %v931
  %1279 = vmatmul.mubr.bf16.gmra.mxu0 %v930
  %v1280 = vpop.f32.mrf.mxu0
  %v1281 = vadd.f32 %v979, %v1280
  %v1282 = vpop.f32.mrf.mxu0
  %v1283 = vadd.f32 %v983, %v1282
  %v1284 = vpop.f32.mrf.mxu0
  %v1285 = vadd.f32 %v979, %v1284
  %v1286 = vpop.f32.mrf.mxu0
  %v1287 = vadd.f32 %v983, %v1286
  %1288 = vmatprep.mubr.bf16.mxu0 %v933
  %1289 = vmatmul.mubr.bf16.gmra.mxu0 %v932
  %v1290 = vpop.f32.mrf.mxu0
  %v1291 = vadd.f32 %v979, %v1290
  %v1292 = vpop.f32.mrf.mxu0
  %v1293 = vadd.f32 %v983, %v1292
  %v1294 = vpop.f32.mrf.mxu0
  %v1295 = vadd.f32 %v979, %v1294
  %v1296 = vpop.f32.mrf.mxu0
  %v1297 = vadd.f32 %v983, %v1296
  %1298 = vmatprep.mubr.bf16.mxu0 %v935
  %1299 = vmatmul.mubr.bf16.gmra.mxu0 %v934
  %v1300 = vpop.f32.mrf.mxu0
  %v1301 = vadd.f32 %v979, %v1300
  %v1302 = vpop.f32.mrf.mxu0
  %v1303 = vadd.f32 %v983, %v1302
  %v1304 = vpop.f32.mrf.mxu0
  %v1305 = vadd.f32 %v979, %v1304
  %v1306 = vpop.f32.mrf.mxu0
  %v1307 = vadd.f32 %v983, %v1306
  %1308 = vmatprep.mubr.bf16.mxu0 %v937
  %1309 = vmatmul.mubr.bf16.gmra.mxu0 %v936
  %v1310 = vpop.f32.mrf.mxu0
  %v1311 = vadd.f32 %v979, %v1310
  %v1312 = vpop.f32.mrf.mxu0
  %v1313 = vadd.f32 %v983, %v1312
  %v1314 = vpop.f32.mrf.mxu0
  %v1315 = vadd.f32 %v979, %v1314
  %v1316 = vpop.f32.mrf.mxu0
  %v1317 = vadd.f32 %v983, %v1316
  %1318 = vmatprep.mubr.bf16.mxu0 %v939
  %1319 = vmatmul.mubr.bf16.gmra.mxu0 %v938
  %v1320 = vpop.f32.mrf.mxu0
  %v1321 = vadd.f32 %v979, %v1320
  %v1322 = vpop.f32.mrf.mxu0
  %v1323 = vadd.f32 %v983, %v1322
  %v1324 = vpop.f32.mrf.mxu0
  %v1325 = vadd.f32 %v979, %v1324
  %v1326 = vpop.f32.mrf.mxu0
  %v1327 = vadd.f32 %v983, %v1326
  %1328 = vmatprep.mubr.bf16.mxu0 %v941
  %1329 = vmatmul.mubr.bf16.gmra.mxu0 %v940
  %v1330 = vpop.f32.mrf.mxu0
  %v1331 = vadd.f32 %v979, %v1330
  %v1332 = vpop.f32.mrf.mxu0
  %v1333 = vadd.f32 %v983, %v1332
  %v1334 = vpop.f32.mrf.mxu0
  %v1335 = vadd.f32 %v979, %v1334
  %v1336 = vpop.f32.mrf.mxu0
  %v1337 = vadd.f32 %v983, %v1336
  %1338 = vdwg.mxu0
  %v1339 = vmax.f32 %v1181, 0.0
  %v1340 = vmax.f32 %v1183, 0.0
  %v1341 = vmax.f32 %v1185, 0.0
  %v1342 = vmax.f32 %v1187, 0.0
  %v1343 = vmax.f32 %v1191, 0.0
  %v1344 = vmax.f32 %v1193, 0.0
  %v1345 = vmax.f32 %v1195, 0.0
  %v1346 = vmax.f32 %v1197, 0.0
  %v1347 = vmax.f32 %v1201, 0.0
  %v1348 = vmax.f32 %v1203, 0.0
  %v1349 = vmax.f32 %v1205, 0.0
  %v1350 = vmax.f32 %v1207, 0.0
  %v1351 = vmax.f32 %v1211, 0.0
  %v1352 = vmax.f32 %v1213, 0.0
  %v1353 = vmax.f32 %v1215, 0.0
  %v1354 = vmax.f32 %v1217, 0.0
  %v1355 = vmax.f32 %v1221, 0.0
  %v1356 = vmax.f32 %v1223, 0.0
  %v1357 = vmax.f32 %v1225, 0.0
  %v1358 = vmax.f32 %v1227, 0.0
  %v1359 = vmax.f32 %v1231, 0.0
  %v1360 = vmax.f32 %v1233, 0.0
  %v1361 = vmax.f32 %v1235, 0.0
  %v1362 = vmax.f32 %v1237, 0.0
  %v1363 = vmax.f32 %v1241, 0.0
  %v1364 = vmax.f32 %v1243, 0.0
  %v1365 = vmax.f32 %v1245, 0.0
  %v1366 = vmax.f32 %v1247, 0.0
  %v1367 = vmax.f32 %v1251, 0.0
  %v1368 = vmax.f32 %v1253, 0.0
  %v1369 = vmax.f32 %v1255, 0.0
  %v1370 = vmax.f32 %v1257, 0.0
  %v1371 = vmax.f32 %v1261, 0.0
  %v1372 = vmax.f32 %v1263, 0.0
  %v1373 = vmax.f32 %v1265, 0.0
  %v1374 = vmax.f32 %v1267, 0.0
  %v1375 = vmax.f32 %v1271, 0.0
  %v1376 = vmax.f32 %v1273, 0.0
  %v1377 = vmax.f32 %v1275, 0.0
  %v1378 = vmax.f32 %v1277, 0.0
  %v1379 = vmax.f32 %v1281, 0.0
  %v1380 = vmax.f32 %v1283, 0.0
  %v1381 = vmax.f32 %v1285, 0.0
  %v1382 = vmax.f32 %v1287, 0.0
  %v1383 = vmax.f32 %v1291, 0.0
  %v1384 = vmax.f32 %v1293, 0.0
  %v1385 = vmax.f32 %v1295, 0.0
  %v1386 = vmax.f32 %v1297, 0.0
  %v1387 = vmax.f32 %v1301, 0.0
  %v1388 = vmax.f32 %v1303, 0.0
  %v1389 = vmax.f32 %v1305, 0.0
  %v1390 = vmax.f32 %v1307, 0.0
  %v1391 = vmax.f32 %v1311, 0.0
  %v1392 = vmax.f32 %v1313, 0.0
  %v1393 = vmax.f32 %v1315, 0.0
  %v1394 = vmax.f32 %v1317, 0.0
  %v1395 = vmax.f32 %v1321, 0.0
  %v1396 = vmax.f32 %v1323, 0.0
  %v1397 = vmax.f32 %v1325, 0.0
  %v1398 = vmax.f32 %v1327, 0.0
  %v1399 = vmax.f32 %v1331, 0.0
  %v1400 = vmax.f32 %v1333, 0.0
  %v1401 = vmax.f32 %v1335, 0.0
  %v1402 = vmax.f32 %v1337, 0.0
  %v1403 = vpack.c.bf16 %v1341, %v1339
  %v1404 = vpack.c.bf16 %v1342, %v1340
  %v1405 = vpack.c.bf16 %v1345, %v1343
  %v1406 = vpack.c.bf16 %v1346, %v1344
  %v1407 = vpack.c.bf16 %v1349, %v1347
  %v1408 = vpack.c.bf16 %v1350, %v1348
  %v1409 = vpack.c.bf16 %v1353, %v1351
  %v1410 = vpack.c.bf16 %v1354, %v1352
  %v1411 = vpack.c.bf16 %v1357, %v1355
  %v1412 = vpack.c.bf16 %v1358, %v1356
  %v1413 = vpack.c.bf16 %v1361, %v1359
  %v1414 = vpack.c.bf16 %v1362, %v1360
  %v1415 = vpack.c.bf16 %v1365, %v1363
  %v1416 = vpack.c.bf16 %v1366, %v1364
  %v1417 = vpack.c.bf16 %v1369, %v1367
  %v1418 = vpack.c.bf16 %v1370, %v1368
  %v1419 = vpack.c.bf16 %v1373, %v1371
  %v1420 = vpack.c.bf16 %v1374, %v1372
  %v1421 = vpack.c.bf16 %v1377, %v1375
  %v1422 = vpack.c.bf16 %v1378, %v1376
  %v1423 = vpack.c.bf16 %v1381, %v1379
  %v1424 = vpack.c.bf16 %v1382, %v1380
  %v1425 = vpack.c.bf16 %v1385, %v1383
  %v1426 = vpack.c.bf16 %v1386, %v1384
  %v1427 = vpack.c.bf16 %v1389, %v1387
  %v1428 = vpack.c.bf16 %v1390, %v1388
  %v1429 = vpack.c.bf16 %v1393, %v1391
  %v1430 = vpack.c.bf16 %v1394, %v1392
  %v1431 = vpack.c.bf16 %v1397, %v1395
  %v1432 = vpack.c.bf16 %v1398, %v1396
  %v1433 = vpack.c.bf16 %v1401, %v1399
  %v1434 = vpack.c.bf16 %v1402, %v1400
  %v1467 = vunpack.c.l.b16 %v1403
  %v1468 = vunpack.c.l.b16 %v1404
  %v1469 = vunpack.c.h.b16 %v1403
  %v1470 = vunpack.c.h.b16 %v1404
  %v1471 = vunpack.c.l.b16 %v1405
  %v1472 = vunpack.c.l.b16 %v1406
  %v1473 = vunpack.c.h.b16 %v1405
  %v1474 = vunpack.c.h.b16 %v1406
  %v1475 = vunpack.c.l.b16 %v1407
  %v1476 = vunpack.c.l.b16 %v1408
  %v1477 = vunpack.c.h.b16 %v1407
  %v1478 = vunpack.c.h.b16 %v1408
  %v1479 = vunpack.c.l.b16 %v1409
  %v1480 = vunpack.c.l.b16 %v1410
  %v1481 = vunpack.c.h.b16 %v1409
  %v1482 = vunpack.c.h.b16 %v1410
  %v1483 = vunpack.c.l.b16 %v1411
  %v1484 = vunpack.c.l.b16 %v1412
  %v1485 = vunpack.c.h.b16 %v1411
  %v1486 = vunpack.c.h.b16 %v1412
  %v1487 = vunpack.c.l.b16 %v1413
  %v1488 = vunpack.c.l.b16 %v1414
  %v1489 = vunpack.c.h.b16 %v1413
  %v1490 = vunpack.c.h.b16 %v1414
  %v1491 = vunpack.c.l.b16 %v1415
  %v1492 = vunpack.c.l.b16 %v1416
  %v1493 = vunpack.c.h.b16 %v1415
  %v1494 = vunpack.c.h.b16 %v1416
  %v1495 = vunpack.c.l.b16 %v1417
  %v1496 = vunpack.c.l.b16 %v1418
  %v1497 = vunpack.c.h.b16 %v1417
  %v1498 = vunpack.c.h.b16 %v1418
  %v1499 = vunpack.c.l.b16 %v1419
  %v1500 = vunpack.c.l.b16 %v1420
  %v1501 = vunpack.c.h.b16 %v1419
  %v1502 = vunpack.c.h.b16 %v1420
  %v1503 = vunpack.c.l.b16 %v1421
  %v1504 = vunpack.c.l.b16 %v1422
  %v1505 = vunpack.c.h.b16 %v1421
  %v1506 = vunpack.c.h.b16 %v1422
  %v1507 = vunpack.c.l.b16 %v1423
  %v1508 = vunpack.c.l.b16 %v1424
  %v1509 = vunpack.c.h.b16 %v1423
  %v1510 = vunpack.c.h.b16 %v1424
  %v1511 = vunpack.c.l.b16 %v1425
  %v1512 = vunpack.c.l.b16 %v1426
  %v1513 = vunpack.c.h.b16 %v1425
  %v1514 = vunpack.c.h.b16 %v1426
  %v1515 = vunpack.c.l.b16 %v1427
  %v1516 = vunpack.c.l.b16 %v1428
  %v1517 = vunpack.c.h.b16 %v1427
  %v1518 = vunpack.c.h.b16 %v1428
  %v1519 = vunpack.c.l.b16 %v1429
  %v1520 = vunpack.c.l.b16 %v1430
  %v1521 = vunpack.c.h.b16 %v1429
  %v1522 = vunpack.c.h.b16 %v1430
  %v1523 = vunpack.c.l.b16 %v1431
  %v1524 = vunpack.c.l.b16 %v1432
  %v1525 = vunpack.c.h.b16 %v1431
  %v1526 = vunpack.c.h.b16 %v1432
  %v1527 = vunpack.c.l.b16 %v1433
  %v1528 = vunpack.c.l.b16 %v1434
  %v1529 = vunpack.c.h.b16 %v1433
  %v1530 = vunpack.c.h.b16 %v1434
  %v1531 = vpack.c.b16 %v1468, %v1467
  %v1532 = vpack.c.b16 %v1470, %v1469
  %v1533 = vpack.c.b16 %v1472, %v1471
  %v1534 = vpack.c.b16 %v1474, %v1473
  %v1535 = vpack.c.b16 %v1476, %v1475
  %v1536 = vpack.c.b16 %v1478, %v1477
  %v1537 = vpack.c.b16 %v1480, %v1479
  %v1538 = vpack.c.b16 %v1482, %v1481
  %v1539 = vpack.c.b16 %v1484, %v1483
  %v1540 = vpack.c.b16 %v1486, %v1485
  %v1541 = vpack.c.b16 %v1488, %v1487
  %v1542 = vpack.c.b16 %v1490, %v1489
  %v1543 = vpack.c.b16 %v1492, %v1491
  %v1544 = vpack.c.b16 %v1494, %v1493
  %v1545 = vpack.c.b16 %v1496, %v1495
  %v1546 = vpack.c.b16 %v1498, %v1497
  %v1547 = vpack.c.b16 %v1500, %v1499
  %v1548 = vpack.c.b16 %v1502, %v1501
  %v1549 = vpack.c.b16 %v1504, %v1503
  %v1550 = vpack.c.b16 %v1506, %v1505
  %v1551 = vpack.c.b16 %v1508, %v1507
  %v1552 = vpack.c.b16 %v1510, %v1509
  %v1553 = vpack.c.b16 %v1512, %v1511
  %v1554 = vpack.c.b16 %v1514, %v1513
  %v1555 = vpack.c.b16 %v1516, %v1515
  %v1556 = vpack.c.b16 %v1518, %v1517
  %v1557 = vpack.c.b16 %v1520, %v1519
  %v1558 = vpack.c.b16 %v1522, %v1521
  %v1559 = vpack.c.b16 %v1524, %v1523
  %v1560 = vpack.c.b16 %v1526, %v1525
  %v1561 = vpack.c.b16 %v1528, %v1527
  %v1562 = vpack.c.b16 %v1530, %v1529
  %1595 = vst [vmem:[#allocation2] sm:$0xff] %v1531
  %1596 = vst [vmem:[#allocation2 + $0x8] sm:$0xff] %v1532
  %1597 = vst [vmem:[#allocation2 + $0x10] sm:$0xff] %v1533
  %1598 = vst [vmem:[#allocation2 + $0x18] sm:$0xff] %v1534
  %1599 = vst [vmem:[#allocation2 + $0x20] sm:$0xff] %v1535
  %1600 = vst [vmem:[#allocation2 + $0x28] sm:$0xff] %v1536
  %1601 = vst [vmem:[#allocation2 + $0x30] sm:$0xff] %v1537
  %1602 = vst [vmem:[#allocation2 + $0x38] sm:$0xff] %v1538
  %1603 = vst [vmem:[#allocation2 + $0x40] sm:$0xff] %v1539
  %1604 = vst [vmem:[#allocation2 + $0x48] sm:$0xff] %v1540
  %1605 = vst [vmem:[#allocation2 + $0x50] sm:$0xff] %v1541
  %1606 = vst [vmem:[#allocation2 + $0x58] sm:$0xff] %v1542
  %1607 = vst [vmem:[#allocation2 + $0x60] sm:$0xff] %v1543
  %1608 = vst [vmem:[#allocation2 + $0x68] sm:$0xff] %v1544
  %1609 = vst [vmem:[#allocation2 + $0x70] sm:$0xff] %v1545
  %1610 = vst [vmem:[#allocation2 + $0x78] sm:$0xff] %v1546
  %1611 = vst [vmem:[#allocation2 + $0x80] sm:$0xff] %v1547
  %1612 = vst [vmem:[#allocation2 + $0x88] sm:$0xff] %v1548
  %1613 = vst [vmem:[#allocation2 + $0x90] sm:$0xff] %v1549
  %1614 = vst [vmem:[#allocation2 + $0x98] sm:$0xff] %v1550
  %1615 = vst [vmem:[#allocation2 + $0xa0] sm:$0xff] %v1551
  %1616 = vst [vmem:[#allocation2 + $0xa8] sm:$0xff] %v1552
  %1617 = vst [vmem:[#allocation2 + $0xb0] sm:$0xff] %v1553
  %1618 = vst [vmem:[#allocation2 + $0xb8] sm:$0xff] %v1554
  %1619 = vst [vmem:[#allocation2 + $0xc0] sm:$0xff] %v1555
  %1620 = vst [vmem:[#allocation2 + $0xc8] sm:$0xff] %v1556
  %1621 = vst [vmem:[#allocation2 + $0xd0] sm:$0xff] %v1557
  %1622 = vst [vmem:[#allocation2 + $0xd8] sm:$0xff] %v1558
  %1623 = vst [vmem:[#allocation2 + $0xe0] sm:$0xff] %v1559
  %1624 = vst [vmem:[#allocation2 + $0xe8] sm:$0xff] %v1560
  %1625 = vst [vmem:[#allocation2 + $0xf0] sm:$0xff] %v1561
  %1626 = vst [vmem:[#allocation2 + $0xf8] sm:$0xff] %v1562
  %v1627 = vld [vmem:[%s0] sm:$0xff]
  %v1628 = vld [vmem:[%s0 + $0x8] sm:$0xff]
  %v1629 = vld [vmem:[%s0 + $0x10] sm:$0xff]
  %v1630 = vld [vmem:[%s0 + $0x18] sm:$0xff]
  %v1631 = vld [vmem:[%s0 + $0x20] sm:$0xff]
  %v1632 = vld [vmem:[%s0 + $0x28] sm:$0xff]
  %v1633 = vld [vmem:[%s0 + $0x30] sm:$0xff]
  %v1634 = vld [vmem:[%s0 + $0x38] sm:$0xff]
  %v1635 = vld [vmem:[%s0 + $0x40] sm:$0xff]
  %v1636 = vld [vmem:[%s0 + $0x48] sm:$0xff]
  %v1637 = vld [vmem:[%s0 + $0x50] sm:$0xff]
  %v1638 = vld [vmem:[%s0 + $0x58] sm:$0xff]
  %v1639 = vld [vmem:[%s0 + $0x60] sm:$0xff]
  %v1640 = vld [vmem:[%s0 + $0x68] sm:$0xff]
  %v1641 = vld [vmem:[%s0 + $0x70] sm:$0xff]
  %v1642 = vld [vmem:[%s0 + $0x78] sm:$0xff]
  %v1643 = vld [vmem:[%s0 + $0x80] sm:$0xff]
  %v1644 = vld [vmem:[%s0 + $0x88] sm:$0xff]
  %v1645 = vld [vmem:[%s0 + $0x90] sm:$0xff]
  %v1646 = vld [vmem:[%s0 + $0x98] sm:$0xff]
  %v1647 = vld [vmem:[%s0 + $0xa0] sm:$0xff]
  %v1648 = vld [vmem:[%s0 + $0xa8] sm:$0xff]
  %v1649 = vld [vmem:[%s0 + $0xb0] sm:$0xff]
  %v1650 = vld [vmem:[%s0 + $0xb8] sm:$0xff]
  %v1651 = vld [vmem:[%s0 + $0xc0] sm:$0xff]
  %v1652 = vld [vmem:[%s0 + $0xc8] sm:$0xff]
  %v1653 = vld [vmem:[%s0 + $0xd0] sm:$0xff]
  %v1654 = vld [vmem:[%s0 + $0xd8] sm:$0xff]
  %v1655 = vld [vmem:[%s0 + $0xe0] sm:$0xff]
  %v1656 = vld [vmem:[%s0 + $0xe8] sm:$0xff]
  %v1657 = vld [vmem:[%s0 + $0xf0] sm:$0xff]
  %v1658 = vld [vmem:[%s0 + $0xf8] sm:$0xff]
  %v1659 = vld [vmem:[#allocation2] sm:$0xff]
  %v1660 = vld [vmem:[#allocation2 + $0x8] sm:$0xff]
  %v1661 = vld [vmem:[#allocation2 + $0x10] sm:$0xff]
  %v1662 = vld [vmem:[#allocation2 + $0x18] sm:$0xff]
  %v1663 = vld [vmem:[#allocation2 + $0x20] sm:$0xff]
  %v1664 = vld [vmem:[#allocation2 + $0x28] sm:$0xff]
  %v1665 = vld [vmem:[#allocation2 + $0x30] sm:$0xff]
  %v1666 = vld [vmem:[#allocation2 + $0x38] sm:$0xff]
  %v1667 = vld [vmem:[#allocation2 + $0x40] sm:$0xff]
  %v1668 = vld [vmem:[#allocation2 + $0x48] sm:$0xff]
  %v1669 = vld [vmem:[#allocation2 + $0x50] sm:$0xff]
  %v1670 = vld [vmem:[#allocation2 + $0x58] sm:$0xff]
  %v1671 = vld [vmem:[#allocation2 + $0x60] sm:$0xff]
  %v1672 = vld [vmem:[#allocation2 + $0x68] sm:$0xff]
  %v1673 = vld [vmem:[#allocation2 + $0x70] sm:$0xff]
  %v1674 = vld [vmem:[#allocation2 + $0x78] sm:$0xff]
  %v1675 = vld [vmem:[#allocation2 + $0x80] sm:$0xff]
  %v1676 = vld [vmem:[#allocation2 + $0x88] sm:$0xff]
  %v1677 = vld [vmem:[#allocation2 + $0x90] sm:$0xff]
  %v1678 = vld [vmem:[#allocation2 + $0x98] sm:$0xff]
  %v1679 = vld [vmem:[#allocation2 + $0xa0] sm:$0xff]
  %v1680 = vld [vmem:[#allocation2 + $0xa8] sm:$0xff]
  %v1681 = vld [vmem:[#allocation2 + $0xb0] sm:$0xff]
  %v1682 = vld [vmem:[#allocation2 + $0xb8] sm:$0xff]
  %v1683 = vld [vmem:[#allocation2 + $0xc0] sm:$0xff]
  %v1684 = vld [vmem:[#allocation2 + $0xc8] sm:$0xff]
  %v1685 = vld [vmem:[#allocation2 + $0xd0] sm:$0xff]
  %v1686 = vld [vmem:[#allocation2 + $0xd8] sm:$0xff]
  %v1687 = vld [vmem:[#allocation2 + $0xe0] sm:$0xff]
  %v1688 = vld [vmem:[#allocation2 + $0xe8] sm:$0xff]
  %v1689 = vld [vmem:[#allocation2 + $0xf0] sm:$0xff]
  %v1690 = vld [vmem:[#allocation2 + $0xf8] sm:$0xff]
  %v1723 = vunpack.c.l.b16 %v1627
  %v1724 = vunpack.c.h.b16 %v1627
  %v1725 = vunpack.c.l.b16 %v1628
  %v1726 = vunpack.c.h.b16 %v1628
  %v1727 = vunpack.c.l.b16 %v1629
  %v1728 = vunpack.c.h.b16 %v1629
  %v1729 = vunpack.c.l.b16 %v1630
  %v1730 = vunpack.c.h.b16 %v1630
  %v1731 = vunpack.c.l.b16 %v1631
  %v1732 = vunpack.c.h.b16 %v1631
  %v1733 = vunpack.c.l.b16 %v1632
  %v1734 = vunpack.c.h.b16 %v1632
  %v1735 = vunpack.c.l.b16 %v1633
  %v1736 = vunpack.c.h.b16 %v1633
  %v1737 = vunpack.c.l.b16 %v1634
  %v1738 = vunpack.c.h.b16 %v1634
  %v1739 = vunpack.c.l.b16 %v1635
  %v1740 = vunpack.c.h.b16 %v1635
  %v1741 = vunpack.c.l.b16 %v1636
  %v1742 = vunpack.c.h.b16 %v1636
  %v1743 = vunpack.c.l.b16 %v1637
  %v1744 = vunpack.c.h.b16 %v1637
  %v1745 = vunpack.c.l.b16 %v1638
  %v1746 = vunpack.c.h.b16 %v1638
  %v1747 = vunpack.c.l.b16 %v1639
  %v1748 = vunpack.c.h.b16 %v1639
  %v1749 = vunpack.c.l.b16 %v1640
  %v1750 = vunpack.c.h.b16 %v1640
  %v1751 = vunpack.c.l.b16 %v1641
  %v1752 = vunpack.c.h.b16 %v1641
  %v1753 = vunpack.c.l.b16 %v1642
  %v1754 = vunpack.c.h.b16 %v1642
  %v1755 = vunpack.c.l.b16 %v1643
  %v1756 = vunpack.c.h.b16 %v1643
  %v1757 = vunpack.c.l.b16 %v1644
  %v1758 = vunpack.c.h.b16 %v1644
  %v1759 = vunpack.c.l.b16 %v1645
  %v1760 = vunpack.c.h.b16 %v1645
  %v1761 = vunpack.c.l.b16 %v1646
  %v1762 = vunpack.c.h.b16 %v1646
  %v1763 = vunpack.c.l.b16 %v1647
  %v1764 = vunpack.c.h.b16 %v1647
  %v1765 = vunpack.c.l.b16 %v1648
  %v1766 = vunpack.c.h.b16 %v1648
  %v1767 = vunpack.c.l.b16 %v1649
  %v1768 = vunpack.c.h.b16 %v1649
  %v1769 = vunpack.c.l.b16 %v1650
  %v1770 = vunpack.c.h.b16 %v1650
  %v1771 = vunpack.c.l.b16 %v1651
  %v1772 = vunpack.c.h.b16 %v1651
  %v1773 = vunpack.c.l.b16 %v1652
  %v1774 = vunpack.c.h.b16 %v1652
  %v1775 = vunpack.c.l.b16 %v1653
  %v1776 = vunpack.c.h.b16 %v1653
  %v1777 = vunpack.c.l.b16 %v1654
  %v1778 = vunpack.c.h.b16 %v1654
  %v1779 = vunpack.c.l.b16 %v1655
  %v1780 = vunpack.c.h.b16 %v1655
  %v1781 = vunpack.c.l.b16 %v1656
  %v1782 = vunpack.c.h.b16 %v1656
  %v1783 = vunpack.c.l.b16 %v1657
  %v1784 = vunpack.c.h.b16 %v1657
  %v1785 = vunpack.c.l.b16 %v1658
  %v1786 = vunpack.c.h.b16 %v1658
  %v1787 = vpack.c.b16 %v1725, %v1723
  %v1788 = vpack.c.b16 %v1726, %v1724
  %v1789 = vpack.c.b16 %v1729, %v1727
  %v1790 = vpack.c.b16 %v1730, %v1728
  %v1791 = vpack.c.b16 %v1733, %v1731
  %v1792 = vpack.c.b16 %v1734, %v1732
  %v1793 = vpack.c.b16 %v1737, %v1735
  %v1794 = vpack.c.b16 %v1738, %v1736
  %v1795 = vpack.c.b16 %v1741, %v1739
  %v1796 = vpack.c.b16 %v1742, %v1740
  %v1797 = vpack.c.b16 %v1745, %v1743
  %v1798 = vpack.c.b16 %v1746, %v1744
  %v1799 = vpack.c.b16 %v1749, %v1747
  %v1800 = vpack.c.b16 %v1750, %v1748
  %v1801 = vpack.c.b16 %v1753, %v1751
  %v1802 = vpack.c.b16 %v1754, %v1752
  %v1803 = vpack.c.b16 %v1757, %v1755
  %v1804 = vpack.c.b16 %v1758, %v1756
  %v1805 = vpack.c.b16 %v1761, %v1759
  %v1806 = vpack.c.b16 %v1762, %v1760
  %v1807 = vpack.c.b16 %v1765, %v1763
  %v1808 = vpack.c.b16 %v1766, %v1764
  %v1809 = vpack.c.b16 %v1769, %v1767
  %v1810 = vpack.c.b16 %v1770, %v1768
  %v1811 = vpack.c.b16 %v1773, %v1771
  %v1812 = vpack.c.b16 %v1774, %v1772
  %v1813 = vpack.c.b16 %v1777, %v1775
  %v1814 = vpack.c.b16 %v1778, %v1776
  %v1815 = vpack.c.b16 %v1781, %v1779
  %v1816 = vpack.c.b16 %v1782, %v1780
  %v1817 = vpack.c.b16 %v1785, %v1783
  %v1818 = vpack.c.b16 %v1786, %v1784
  %v1883 = vunpack.c.l.b16 %v1659
  %v1884 = vunpack.c.h.b16 %v1659
  %v1885 = vunpack.c.l.b16 %v1660
  %v1886 = vunpack.c.h.b16 %v1660
  %v1887 = vunpack.c.l.b16 %v1661
  %v1888 = vunpack.c.h.b16 %v1661
  %v1889 = vunpack.c.l.b16 %v1662
  %v1890 = vunpack.c.h.b16 %v1662
  %v1891 = vunpack.c.l.b16 %v1663
  %v1892 = vunpack.c.h.b16 %v1663
  %v1893 = vunpack.c.l.b16 %v1664
  %v1894 = vunpack.c.h.b16 %v1664
  %v1895 = vunpack.c.l.b16 %v1665
  %v1896 = vunpack.c.h.b16 %v1665
  %v1897 = vunpack.c.l.b16 %v1666
  %v1898 = vunpack.c.h.b16 %v1666
  %v1899 = vunpack.c.l.b16 %v1667
  %v1900 = vunpack.c.h.b16 %v1667
  %v1901 = vunpack.c.l.b16 %v1668
  %v1902 = vunpack.c.h.b16 %v1668
  %v1903 = vunpack.c.l.b16 %v1669
  %v1904 = vunpack.c.h.b16 %v1669
  %v1905 = vunpack.c.l.b16 %v1670
  %v1906 = vunpack.c.h.b16 %v1670
  %v1907 = vunpack.c.l.b16 %v1671
  %v1908 = vunpack.c.h.b16 %v1671
  %v1909 = vunpack.c.l.b16 %v1672
  %v1910 = vunpack.c.h.b16 %v1672
  %v1911 = vunpack.c.l.b16 %v1673
  %v1912 = vunpack.c.h.b16 %v1673
  %v1913 = vunpack.c.l.b16 %v1674
  %v1914 = vunpack.c.h.b16 %v1674
  %v1915 = vunpack.c.l.b16 %v1675
  %v1916 = vunpack.c.h.b16 %v1675
  %v1917 = vunpack.c.l.b16 %v1676
  %v1918 = vunpack.c.h.b16 %v1676
  %v1919 = vunpack.c.l.b16 %v1677
  %v1920 = vunpack.c.h.b16 %v1677
  %v1921 = vunpack.c.l.b16 %v1678
  %v1922 = vunpack.c.h.b16 %v1678
  %v1923 = vunpack.c.l.b16 %v1679
  %v1924 = vunpack.c.h.b16 %v1679
  %v1925 = vunpack.c.l.b16 %v1680
  %v1926 = vunpack.c.h.b16 %v1680
  %v1927 = vunpack.c.l.b16 %v1681
  %v1928 = vunpack.c.h.b16 %v1681
  %v1929 = vunpack.c.l.b16 %v1682
  %v1930 = vunpack.c.h.b16 %v1682
  %v1931 = vunpack.c.l.b16 %v1683
  %v1932 = vunpack.c.h.b16 %v1683
  %v1933 = vunpack.c.l.b16 %v1684
  %v1934 = vunpack.c.h.b16 %v1684
  %v1935 = vunpack.c.l.b16 %v1685
  %v1936 = vunpack.c.h.b16 %v1685
  %v1937 = vunpack.c.l.b16 %v1686
  %v1938 = vunpack.c.h.b16 %v1686
  %v1939 = vunpack.c.l.b16 %v1687
  %v1940 = vunpack.c.h.b16 %v1687
  %v1941 = vunpack.c.l.b16 %v1688
  %v1942 = vunpack.c.h.b16 %v1688
  %v1943 = vunpack.c.l.b16 %v1689
  %v1944 = vunpack.c.h.b16 %v1689
  %v1945 = vunpack.c.l.b16 %v1690
  %v1946 = vunpack.c.h.b16 %v1690
  %v1947 = vpack.c.b16 %v1885, %v1883
  %v1948 = vpack.c.b16 %v1886, %v1884
  %v1949 = vpack.c.b16 %v1889, %v1887
  %v1950 = vpack.c.b16 %v1890, %v1888
  %v1951 = vpack.c.b16 %v1893, %v1891
  %v1952 = vpack.c.b16 %v1894, %v1892
  %v1953 = vpack.c.b16 %v1897, %v1895
  %v1954 = vpack.c.b16 %v1898, %v1896
  %v1955 = vpack.c.b16 %v1901, %v1899
  %v1956 = vpack.c.b16 %v1902, %v1900
  %v1957 = vpack.c.b16 %v1905, %v1903
  %v1958 = vpack.c.b16 %v1906, %v1904
  %v1959 = vpack.c.b16 %v1909, %v1907
  %v1960 = vpack.c.b16 %v1910, %v1908
  %v1961 = vpack.c.b16 %v1913, %v1911
  %v1962 = vpack.c.b16 %v1914, %v1912
  %v1963 = vpack.c.b16 %v1917, %v1915
  %v1964 = vpack.c.b16 %v1918, %v1916
  %v1965 = vpack.c.b16 %v1921, %v1919
  %v1966 = vpack.c.b16 %v1922, %v1920
  %v1967 = vpack.c.b16 %v1925, %v1923
  %v1968 = vpack.c.b16 %v1926, %v1924
  %v1969 = vpack.c.b16 %v1929, %v1927
  %v1970 = vpack.c.b16 %v1930, %v1928
  %v1971 = vpack.c.b16 %v1933, %v1931
  %v1972 = vpack.c.b16 %v1934, %v1932
  %v1973 = vpack.c.b16 %v1937, %v1935
  %v1974 = vpack.c.b16 %v1938, %v1936
  %v1975 = vpack.c.b16 %v1941, %v1939
  %v1976 = vpack.c.b16 %v1942, %v1940
  %v1977 = vpack.c.b16 %v1945, %v1943
  %v1978 = vpack.c.b16 %v1946, %v1944
  %2011 = vmatprep.subr.bf16.mxu0 %v1962
  %2012 = vmatpush1.bf16.msra.mxu0 %v1961
  %2013 = vmatprep.subr.bf16.mxu0 %v1960
  %2014 = vmatpush1.bf16.msra.mxu0 %v1959
  %2015 = vmatprep.subr.bf16.mxu0 %v1958
  %2016 = vmatpush1.bf16.msra.mxu0 %v1957
  %2017 = vmatprep.subr.bf16.mxu0 %v1956
  %2018 = vmatpush1.bf16.msra.mxu0 %v1955
  %2019 = vmatprep.subr.bf16.mxu0 %v1954
  %2020 = vmatpush1.bf16.msra.mxu0 %v1953
  %2021 = vmatprep.subr.bf16.mxu0 %v1952
  %2022 = vmatpush1.bf16.msra.mxu0 %v1951
  %2023 = vmatprep.subr.bf16.mxu0 %v1950
  %2024 = vmatpush1.bf16.msra.mxu0 %v1949
  %2025 = vmatprep.subr.bf16.mxu0 %v1948
  %2026 = vmatpush1.bf16.msra.mxu0 %v1947
  %2027 = vmatprep.subr.bf16.mxu0 %v1978
  %2028 = vmatpush2.bf16.msra.mxu0 %v1977
  %2029 = vmatprep.subr.bf16.mxu0 %v1976
  %2030 = vmatpush2.bf16.msra.mxu0 %v1975
  %2031 = vmatprep.subr.bf16.mxu0 %v1974
  %2032 = vmatpush2.bf16.msra.mxu0 %v1973
  %2033 = vmatprep.subr.bf16.mxu0 %v1972
  %2034 = vmatpush2.bf16.msra.mxu0 %v1971
  %2035 = vmatprep.subr.bf16.mxu0 %v1970
  %2036 = vmatpush2.bf16.msra.mxu0 %v1969
  %2037 = vmatprep.subr.bf16.mxu0 %v1968
  %2038 = vmatpush2.bf16.msra.mxu0 %v1967
  %2039 = vmatprep.subr.bf16.mxu0 %v1966
  %2040 = vmatpush2.bf16.msra.mxu0 %v1965
  %2041 = vmatprep.subr.bf16.mxu0 %v1964
  %2042 = vmatpush2.bf16.msra.mxu0 %v1963
  %2043 = vmatprep.mubr.bf16.mxu0 %v1788
  %2044 = vmatmul.mubr.bf16.gmra.mxu0 %v1787
  %v2045 = vpop.f32.mrf.mxu0
  %v2046 = vadd.f32 0.0, %v2045
  %v2047 = vpop.f32.mrf.mxu0
  %v2048 = vadd.f32 0.0, %v2047
  %v2049 = vpop.f32.mrf.mxu0
  %v2050 = vadd.f32 0.0, %v2049
  %v2051 = vpop.f32.mrf.mxu0
  %v2052 = vadd.f32 0.0, %v2051
  %2053 = vmatprep.mubr.bf16.mxu0 %v1790
  %2054 = vmatmul.mubr.bf16.gmra.mxu0 %v1789
  %v2055 = vpop.f32.mrf.mxu0
  %v2056 = vadd.f32 0.0, %v2055
  %v2057 = vpop.f32.mrf.mxu0
  %v2058 = vadd.f32 0.0, %v2057
  %v2059 = vpop.f32.mrf.mxu0
  %v2060 = vadd.f32 0.0, %v2059
  %v2061 = vpop.f32.mrf.mxu0
  %v2062 = vadd.f32 0.0, %v2061
  %2063 = vmatprep.mubr.bf16.mxu0 %v1792
  %2064 = vmatmul.mubr.bf16.gmra.mxu0 %v1791
  %v2065 = vpop.f32.mrf.mxu0
  %v2066 = vadd.f32 0.0, %v2065
  %v2067 = vpop.f32.mrf.mxu0
  %v2068 = vadd.f32 0.0, %v2067
  %v2069 = vpop.f32.mrf.mxu0
  %v2070 = vadd.f32 0.0, %v2069
  %v2071 = vpop.f32.mrf.mxu0
  %v2072 = vadd.f32 0.0, %v2071
  %2073 = vmatprep.mubr.bf16.mxu0 %v1794
  %2074 = vmatmul.mubr.bf16.gmra.mxu0 %v1793
  %v2075 = vpop.f32.mrf.mxu0
  %v2076 = vadd.f32 0.0, %v2075
  %v2077 = vpop.f32.mrf.mxu0
  %v2078 = vadd.f32 0.0, %v2077
  %v2079 = vpop.f32.mrf.mxu0
  %v2080 = vadd.f32 0.0, %v2079
  %v2081 = vpop.f32.mrf.mxu0
  %v2082 = vadd.f32 0.0, %v2081
  %2083 = vmatprep.mubr.bf16.mxu0 %v1796
  %2084 = vmatmul.mubr.bf16.gmra.mxu0 %v1795
  %v2085 = vpop.f32.mrf.mxu0
  %v2086 = vadd.f32 0.0, %v2085
  %v2087 = vpop.f32.mrf.mxu0
  %v2088 = vadd.f32 0.0, %v2087
  %v2089 = vpop.f32.mrf.mxu0
  %v2090 = vadd.f32 0.0, %v2089
  %v2091 = vpop.f32.mrf.mxu0
  %v2092 = vadd.f32 0.0, %v2091
  %2093 = vmatprep.mubr.bf16.mxu0 %v1798
  %2094 = vmatmul.mubr.bf16.gmra.mxu0 %v1797
  %v2095 = vpop.f32.mrf.mxu0
  %v2096 = vadd.f32 0.0, %v2095
  %v2097 = vpop.f32.mrf.mxu0
  %v2098 = vadd.f32 0.0, %v2097
  %v2099 = vpop.f32.mrf.mxu0
  %v2100 = vadd.f32 0.0, %v2099
  %v2101 = vpop.f32.mrf.mxu0
  %v2102 = vadd.f32 0.0, %v2101
  %2103 = vmatprep.mubr.bf16.mxu0 %v1800
  %2104 = vmatmul.mubr.bf16.gmra.mxu0 %v1799
  %v2105 = vpop.f32.mrf.mxu0
  %v2106 = vadd.f32 0.0, %v2105
  %v2107 = vpop.f32.mrf.mxu0
  %v2108 = vadd.f32 0.0, %v2107
  %v2109 = vpop.f32.mrf.mxu0
  %v2110 = vadd.f32 0.0, %v2109
  %v2111 = vpop.f32.mrf.mxu0
  %v2112 = vadd.f32 0.0, %v2111
  %2113 = vmatprep.mubr.bf16.mxu0 %v1802
  %2114 = vmatmul.mubr.bf16.gmra.mxu0 %v1801
  %v2115 = vpop.f32.mrf.mxu0
  %v2116 = vadd.f32 0.0, %v2115
  %v2117 = vpop.f32.mrf.mxu0
  %v2118 = vadd.f32 0.0, %v2117
  %v2119 = vpop.f32.mrf.mxu0
  %v2120 = vadd.f32 0.0, %v2119
  %v2121 = vpop.f32.mrf.mxu0
  %v2122 = vadd.f32 0.0, %v2121
  %2123 = vmatprep.mubr.bf16.mxu0 %v1804
  %2124 = vmatmul.mubr.bf16.gmra.mxu0 %v1803
  %v2125 = vpop.f32.mrf.mxu0
  %v2126 = vadd.f32 0.0, %v2125
  %v2127 = vpop.f32.mrf.mxu0
  %v2128 = vadd.f32 0.0, %v2127
  %v2129 = vpop.f32.mrf.mxu0
  %v2130 = vadd.f32 0.0, %v2129
  %v2131 = vpop.f32.mrf.mxu0
  %v2132 = vadd.f32 0.0, %v2131
  %2133 = vmatprep.mubr.bf16.mxu0 %v1806
  %2134 = vmatmul.mubr.bf16.gmra.mxu0 %v1805
  %v2135 = vpop.f32.mrf.mxu0
  %v2136 = vadd.f32 0.0, %v2135
  %v2137 = vpop.f32.mrf.mxu0
  %v2138 = vadd.f32 0.0, %v2137
  %v2139 = vpop.f32.mrf.mxu0
  %v2140 = vadd.f32 0.0, %v2139
  %v2141 = vpop.f32.mrf.mxu0
  %v2142 = vadd.f32 0.0, %v2141
  %2143 = vmatprep.mubr.bf16.mxu0 %v1808
  %2144 = vmatmul.mubr.bf16.gmra.mxu0 %v1807
  %v2145 = vpop.f32.mrf.mxu0
  %v2146 = vadd.f32 0.0, %v2145
  %v2147 = vpop.f32.mrf.mxu0
  %v2148 = vadd.f32 0.0, %v2147
  %v2149 = vpop.f32.mrf.mxu0
  %v2150 = vadd.f32 0.0, %v2149
  %v2151 = vpop.f32.mrf.mxu0
  %v2152 = vadd.f32 0.0, %v2151
  %2153 = vmatprep.mubr.bf16.mxu0 %v1810
  %2154 = vmatmul.mubr.bf16.gmra.mxu0 %v1809
  %v2155 = vpop.f32.mrf.mxu0
  %v2156 = vadd.f32 0.0, %v2155
  %v2157 = vpop.f32.mrf.mxu0
  %v2158 = vadd.f32 0.0, %v2157
  %v2159 = vpop.f32.mrf.mxu0
  %v2160 = vadd.f32 0.0, %v2159
  %v2161 = vpop.f32.mrf.mxu0
  %v2162 = vadd.f32 0.0, %v2161
  %2163 = vmatprep.mubr.bf16.mxu0 %v1812
  %2164 = vmatmul.mubr.bf16.gmra.mxu0 %v1811
  %v2165 = vpop.f32.mrf.mxu0
  %v2166 = vadd.f32 0.0, %v2165
  %v2167 = vpop.f32.mrf.mxu0
  %v2168 = vadd.f32 0.0, %v2167
  %v2169 = vpop.f32.mrf.mxu0
  %v2170 = vadd.f32 0.0, %v2169
  %v2171 = vpop.f32.mrf.mxu0
  %v2172 = vadd.f32 0.0, %v2171
  %2173 = vmatprep.mubr.bf16.mxu0 %v1814
  %2174 = vmatmul.mubr.bf16.gmra.mxu0 %v1813
  %v2175 = vpop.f32.mrf.mxu0
  %v2176 = vadd.f32 0.0, %v2175
  %v2177 = vpop.f32.mrf.mxu0
  %v2178 = vadd.f32 0.0, %v2177
  %v2179 = vpop.f32.mrf.mxu0
  %v2180 = vadd.f32 0.0, %v2179
  %v2181 = vpop.f32.mrf.mxu0
  %v2182 = vadd.f32 0.0, %v2181
  %2183 = vmatprep.mubr.bf16.mxu0 %v1816
  %2184 = vmatmul.mubr.bf16.gmra.mxu0 %v1815
  %v2185 = vpop.f32.mrf.mxu0
  %v2186 = vadd.f32 0.0, %v2185
  %v2187 = vpop.f32.mrf.mxu0
  %v2188 = vadd.f32 0.0, %v2187
  %v2189 = vpop.f32.mrf.mxu0
  %v2190 = vadd.f32 0.0, %v2189
  %v2191 = vpop.f32.mrf.mxu0
  %v2192 = vadd.f32 0.0, %v2191
  %2193 = vmatprep.mubr.bf16.mxu0 %v1818
  %2194 = vmatmul.mubr.bf16.gmra.mxu0 %v1817
  %v2195 = vpop.f32.mrf.mxu0
  %v2196 = vadd.f32 0.0, %v2195
  %v2197 = vpop.f32.mrf.mxu0
  %v2198 = vadd.f32 0.0, %v2197
  %v2199 = vpop.f32.mrf.mxu0
  %v2200 = vadd.f32 0.0, %v2199
  %v2201 = vpop.f32.mrf.mxu0
  %v2202 = vadd.f32 0.0, %v2201
  %2203 = vdwg.mxu0
  %v2204 = vpack.c.bf16 %v2050, %v2046
  %v2205 = vpack.c.bf16 %v2052, %v2048
  %v2206 = vpack.c.bf16 %v2060, %v2056
  %v2207 = vpack.c.bf16 %v2062, %v2058
  %v2208 = vpack.c.bf16 %v2070, %v2066
  %v2209 = vpack.c.bf16 %v2072, %v2068
  %v2210 = vpack.c.bf16 %v2080, %v2076
  %v2211 = vpack.c.bf16 %v2082, %v2078
  %v2212 = vpack.c.bf16 %v2090, %v2086
  %v2213 = vpack.c.bf16 %v2092, %v2088
  %v2214 = vpack.c.bf16 %v2100, %v2096
  %v2215 = vpack.c.bf16 %v2102, %v2098
  %v2216 = vpack.c.bf16 %v2110, %v2106
  %v2217 = vpack.c.bf16 %v2112, %v2108
  %v2218 = vpack.c.bf16 %v2120, %v2116
  %v2219 = vpack.c.bf16 %v2122, %v2118
  %v2220 = vpack.c.bf16 %v2130, %v2126
  %v2221 = vpack.c.bf16 %v2132, %v2128
  %v2222 = vpack.c.bf16 %v2140, %v2136
  %v2223 = vpack.c.bf16 %v2142, %v2138
  %v2224 = vpack.c.bf16 %v2150, %v2146
  %v2225 = vpack.c.bf16 %v2152, %v2148
  %v2226 = vpack.c.bf16 %v2160, %v2156
  %v2227 = vpack.c.bf16 %v2162, %v2158
  %v2228 = vpack.c.bf16 %v2170, %v2166
  %v2229 = vpack.c.bf16 %v2172, %v2168
  %v2230 = vpack.c.bf16 %v2180, %v2176
  %v2231 = vpack.c.bf16 %v2182, %v2178
  %v2232 = vpack.c.bf16 %v2190, %v2186
  %v2233 = vpack.c.bf16 %v2192, %v2188
  %v2234 = vpack.c.bf16 %v2200, %v2196
  %v2235 = vpack.c.bf16 %v2202, %v2198
  %v2236 = vld [vmem:[%s6] sm:$0xff]
  %v2237 = vld [vmem:[%s6 + $0x8] sm:$0xff]
  %v2238 = vld [vmem:[%s6 + $0x10] sm:$0xff]
  %v2239 = vld [vmem:[%s6 + $0x18] sm:$0xff]
  %v2240 = vld [vmem:[%s6 + $0x20] sm:$0xff]
  %v2241 = vld [vmem:[%s6 + $0x28] sm:$0xff]
  %v2242 = vld [vmem:[%s6 + $0x30] sm:$0xff]
  %v2243 = vld [vmem:[%s6 + $0x38] sm:$0xff]
  %v2244 = vld [vmem:[%s6 + $0x40] sm:$0xff]
  %v2245 = vld [vmem:[%s6 + $0x48] sm:$0xff]
  %v2246 = vld [vmem:[%s6 + $0x50] sm:$0xff]
  %v2247 = vld [vmem:[%s6 + $0x58] sm:$0xff]
  %v2248 = vld [vmem:[%s6 + $0x60] sm:$0xff]
  %v2249 = vld [vmem:[%s6 + $0x68] sm:$0xff]
  %v2250 = vld [vmem:[%s6 + $0x70] sm:$0xff]
  %v2251 = vld [vmem:[%s6 + $0x78] sm:$0xff]
  %v2252 = vld [vmem:[%s6 + $0x80] sm:$0xff]
  %v2253 = vld [vmem:[%s6 + $0x88] sm:$0xff]
  %v2254 = vld [vmem:[%s6 + $0x90] sm:$0xff]
  %v2255 = vld [vmem:[%s6 + $0x98] sm:$0xff]
  %v2256 = vld [vmem:[%s6 + $0xa0] sm:$0xff]
  %v2257 = vld [vmem:[%s6 + $0xa8] sm:$0xff]
  %v2258 = vld [vmem:[%s6 + $0xb0] sm:$0xff]
  %v2259 = vld [vmem:[%s6 + $0xb8] sm:$0xff]
  %v2260 = vld [vmem:[%s6 + $0xc0] sm:$0xff]
  %v2261 = vld [vmem:[%s6 + $0xc8] sm:$0xff]
  %v2262 = vld [vmem:[%s6 + $0xd0] sm:$0xff]
  %v2263 = vld [vmem:[%s6 + $0xd8] sm:$0xff]
  %v2264 = vld [vmem:[%s6 + $0xe0] sm:$0xff]
  %v2265 = vld [vmem:[%s6 + $0xe8] sm:$0xff]
  %v2266 = vld [vmem:[%s6 + $0xf0] sm:$0xff]
  %v2267 = vld [vmem:[%s6 + $0xf8] sm:$0xff]
  %v2268 = vld [vmem:[%s7] sm:$0x3]
  %v2270 = vlaneseq
  %v2271 = vshrl.u32 %v2270, 7
  %v2272 = vsub.s32 0, %v2271
  %v2273 = vrot.slane %v2268, %v2272
  %v2274 = vlaneseq
  %v2275 = vshrl.u32 %v2274, 7
  %v2276 = vsub.s32 1, %v2275
  %v2277 = vrot.slane %v2268, %v2276
  %v2312 = vunpack.c.l.b16 %v2236
  %v2313 = vunpack.c.h.b16 %v2236
  %v2314 = vunpack.c.l.b16 %v2237
  %v2315 = vunpack.c.h.b16 %v2237
  %v2316 = vunpack.c.l.b16 %v2238
  %v2317 = vunpack.c.h.b16 %v2238
  %v2318 = vunpack.c.l.b16 %v2239
  %v2319 = vunpack.c.h.b16 %v2239
  %v2320 = vunpack.c.l.b16 %v2240
  %v2321 = vunpack.c.h.b16 %v2240
  %v2322 = vunpack.c.l.b16 %v2241
  %v2323 = vunpack.c.h.b16 %v2241
  %v2324 = vunpack.c.l.b16 %v2242
  %v2325 = vunpack.c.h.b16 %v2242
  %v2326 = vunpack.c.l.b16 %v2243
  %v2327 = vunpack.c.h.b16 %v2243
  %v2328 = vunpack.c.l.b16 %v2244
  %v2329 = vunpack.c.h.b16 %v2244
  %v2330 = vunpack.c.l.b16 %v2245
  %v2331 = vunpack.c.h.b16 %v2245
  %v2332 = vunpack.c.l.b16 %v2246
  %v2333 = vunpack.c.h.b16 %v2246
  %v2334 = vunpack.c.l.b16 %v2247
  %v2335 = vunpack.c.h.b16 %v2247
  %v2336 = vunpack.c.l.b16 %v2248
  %v2337 = vunpack.c.h.b16 %v2248
  %v2338 = vunpack.c.l.b16 %v2249
  %v2339 = vunpack.c.h.b16 %v2249
  %v2340 = vunpack.c.l.b16 %v2250
  %v2341 = vunpack.c.h.b16 %v2250
  %v2342 = vunpack.c.l.b16 %v2251
  %v2343 = vunpack.c.h.b16 %v2251
  %v2344 = vunpack.c.l.b16 %v2252
  %v2345 = vunpack.c.h.b16 %v2252
  %v2346 = vunpack.c.l.b16 %v2253
  %v2347 = vunpack.c.h.b16 %v2253
  %v2348 = vunpack.c.l.b16 %v2254
  %v2349 = vunpack.c.h.b16 %v2254
  %v2350 = vunpack.c.l.b16 %v2255
  %v2351 = vunpack.c.h.b16 %v2255
  %v2352 = vunpack.c.l.b16 %v2256
  %v2353 = vunpack.c.h.b16 %v2256
  %v2354 = vunpack.c.l.b16 %v2257
  %v2355 = vunpack.c.h.b16 %v2257
  %v2356 = vunpack.c.l.b16 %v2258
  %v2357 = vunpack.c.h.b16 %v2258
  %v2358 = vunpack.c.l.b16 %v2259
  %v2359 = vunpack.c.h.b16 %v2259
  %v2360 = vunpack.c.l.b16 %v2260
  %v2361 = vunpack.c.h.b16 %v2260
  %v2362 = vunpack.c.l.b16 %v2261
  %v2363 = vunpack.c.h.b16 %v2261
  %v2364 = vunpack.c.l.b16 %v2262
  %v2365 = vunpack.c.h.b16 %v2262
  %v2366 = vunpack.c.l.b16 %v2263
  %v2367 = vunpack.c.h.b16 %v2263
  %v2368 = vunpack.c.l.b16 %v2264
  %v2369 = vunpack.c.h.b16 %v2264
  %v2370 = vunpack.c.l.b16 %v2265
  %v2371 = vunpack.c.h.b16 %v2265
  %v2372 = vunpack.c.l.b16 %v2266
  %v2373 = vunpack.c.h.b16 %v2266
  %v2374 = vunpack.c.l.b16 %v2267
  %v2375 = vunpack.c.h.b16 %v2267
  %v2376 = vpack.c.b16 %v2314, %v2312
  %v2377 = vpack.c.b16 %v2315, %v2313
  %v2378 = vpack.c.b16 %v2318, %v2316
  %v2379 = vpack.c.b16 %v2319, %v2317
  %v2380 = vpack.c.b16 %v2322, %v2320
  %v2381 = vpack.c.b16 %v2323, %v2321
  %v2382 = vpack.c.b16 %v2326, %v2324
  %v2383 = vpack.c.b16 %v2327, %v2325
  %v2384 = vpack.c.b16 %v2330, %v2328
  %v2385 = vpack.c.b16 %v2331, %v2329
  %v2386 = vpack.c.b16 %v2334, %v2332
  %v2387 = vpack.c.b16 %v2335, %v2333
  %v2388 = vpack.c.b16 %v2338, %v2336
  %v2389 = vpack.c.b16 %v2339, %v2337
  %v2390 = vpack.c.b16 %v2342, %v2340
  %v2391 = vpack.c.b16 %v2343, %v2341
  %v2392 = vpack.c.b16 %v2346, %v2344
  %v2393 = vpack.c.b16 %v2347, %v2345
  %v2394 = vpack.c.b16 %v2350, %v2348
  %v2395 = vpack.c.b16 %v2351, %v2349
  %v2396 = vpack.c.b16 %v2354, %v2352
  %v2397 = vpack.c.b16 %v2355, %v2353
  %v2398 = vpack.c.b16 %v2358, %v2356
  %v2399 = vpack.c.b16 %v2359, %v2357
  %v2400 = vpack.c.b16 %v2362, %v2360
  %v2401 = vpack.c.b16 %v2363, %v2361
  %v2402 = vpack.c.b16 %v2366, %v2364
  %v2403 = vpack.c.b16 %v2367, %v2365
  %v2404 = vpack.c.b16 %v2370, %v2368
  %v2405 = vpack.c.b16 %v2371, %v2369
  %v2406 = vpack.c.b16 %v2374, %v2372
  %v2407 = vpack.c.b16 %v2375, %v2373
  %2440 = vmatprep.subr.bf16.mxu0 %v2391
  %2441 = vmatpush1.bf16.msra.mxu0 %v2390
  %2442 = vmatprep.subr.bf16.mxu0 %v2389
  %2443 = vmatpush1.bf16.msra.mxu0 %v2388
  %2444 = vmatprep.subr.bf16.mxu0 %v2387
  %2445 = vmatpush1.bf16.msra.mxu0 %v2386
  %2446 = vmatprep.subr.bf16.mxu0 %v2385
  %2447 = vmatpush1.bf16.msra.mxu0 %v2384
  %2448 = vmatprep.subr.bf16.mxu0 %v2383
  %2449 = vmatpush1.bf16.msra.mxu0 %v2382
  %2450 = vmatprep.subr.bf16.mxu0 %v2381
  %2451 = vmatpush1.bf16.msra.mxu0 %v2380
  %2452 = vmatprep.subr.bf16.mxu0 %v2379
  %2453 = vmatpush1.bf16.msra.mxu0 %v2378
  %2454 = vmatprep.subr.bf16.mxu0 %v2377
  %2455 = vmatpush1.bf16.msra.mxu0 %v2376
  %2456 = vmatprep.subr.bf16.mxu0 %v2407
  %2457 = vmatpush2.bf16.msra.mxu0 %v2406
  %2458 = vmatprep.subr.bf16.mxu0 %v2405
  %2459 = vmatpush2.bf16.msra.mxu0 %v2404
  %2460 = vmatprep.subr.bf16.mxu0 %v2403
  %2461 = vmatpush2.bf16.msra.mxu0 %v2402
  %2462 = vmatprep.subr.bf16.mxu0 %v2401
  %2463 = vmatpush2.bf16.msra.mxu0 %v2400
  %2464 = vmatprep.subr.bf16.mxu0 %v2399
  %2465 = vmatpush2.bf16.msra.mxu0 %v2398
  %2466 = vmatprep.subr.bf16.mxu0 %v2397
  %2467 = vmatpush2.bf16.msra.mxu0 %v2396
  %2468 = vmatprep.subr.bf16.mxu0 %v2395
  %2469 = vmatpush2.bf16.msra.mxu0 %v2394
  %2470 = vmatprep.subr.bf16.mxu0 %v2393
  %2471 = vmatpush2.bf16.msra.mxu0 %v2392
  %2472 = vmatprep.mubr.bf16.mxu0 %v2205
  %2473 = vmatmul.mubr.bf16.gmra.mxu0 %v2204
  %v2474 = vpop.f32.mrf.mxu0
  %v2475 = vadd.f32 %v2273, %v2474
  %v2476 = vpop.f32.mrf.mxu0
  %v2477 = vadd.f32 %v2277, %v2476
  %v2478 = vpop.f32.mrf.mxu0
  %v2479 = vadd.f32 %v2273, %v2478
  %v2480 = vpop.f32.mrf.mxu0
  %v2481 = vadd.f32 %v2277, %v2480
  %2482 = vmatprep.mubr.bf16.mxu0 %v2207
  %2483 = vmatmul.mubr.bf16.gmra.mxu0 %v2206
  %v2484 = vpop.f32.mrf.mxu0
  %v2485 = vadd.f32 %v2273, %v2484
  %v2486 = vpop.f32.mrf.mxu0
  %v2487 = vadd.f32 %v2277, %v2486
  %v2488 = vpop.f32.mrf.mxu0
  %v2489 = vadd.f32 %v2273, %v2488
  %v2490 = vpop.f32.mrf.mxu0
  %v2491 = vadd.f32 %v2277, %v2490
  %2492 = vmatprep.mubr.bf16.mxu0 %v2209
  %2493 = vmatmul.mubr.bf16.gmra.mxu0 %v2208
  %v2494 = vpop.f32.mrf.mxu0
  %v2495 = vadd.f32 %v2273, %v2494
  %v2496 = vpop.f32.mrf.mxu0
  %v2497 = vadd.f32 %v2277, %v2496
  %v2498 = vpop.f32.mrf.mxu0
  %v2499 = vadd.f32 %v2273, %v2498
  %v2500 = vpop.f32.mrf.mxu0
  %v2501 = vadd.f32 %v2277, %v2500
  %2502 = vmatprep.mubr.bf16.mxu0 %v2211
  %2503 = vmatmul.mubr.bf16.gmra.mxu0 %v2210
  %v2504 = vpop.f32.mrf.mxu0
  %v2505 = vadd.f32 %v2273, %v2504
  %v2506 = vpop.f32.mrf.mxu0
  %v2507 = vadd.f32 %v2277, %v2506
  %v2508 = vpop.f32.mrf.mxu0
  %v2509 = vadd.f32 %v2273, %v2508
  %v2510 = vpop.f32.mrf.mxu0
  %v2511 = vadd.f32 %v2277, %v2510
  %2512 = vmatprep.mubr.bf16.mxu0 %v2213
  %2513 = vmatmul.mubr.bf16.gmra.mxu0 %v2212
  %v2514 = vpop.f32.mrf.mxu0
  %v2515 = vadd.f32 %v2273, %v2514
  %v2516 = vpop.f32.mrf.mxu0
  %v2517 = vadd.f32 %v2277, %v2516
  %v2518 = vpop.f32.mrf.mxu0
  %v2519 = vadd.f32 %v2273, %v2518
  %v2520 = vpop.f32.mrf.mxu0
  %v2521 = vadd.f32 %v2277, %v2520
  %2522 = vmatprep.mubr.bf16.mxu0 %v2215
  %2523 = vmatmul.mubr.bf16.gmra.mxu0 %v2214
  %v2524 = vpop.f32.mrf.mxu0
  %v2525 = vadd.f32 %v2273, %v2524
  %v2526 = vpop.f32.mrf.mxu0
  %v2527 = vadd.f32 %v2277, %v2526
  %v2528 = vpop.f32.mrf.mxu0
  %v2529 = vadd.f32 %v2273, %v2528
  %v2530 = vpop.f32.mrf.mxu0
  %v2531 = vadd.f32 %v2277, %v2530
  %2532 = vmatprep.mubr.bf16.mxu0 %v2217
  %2533 = vmatmul.mubr.bf16.gmra.mxu0 %v2216
  %v2534 = vpop.f32.mrf.mxu0
  %v2535 = vadd.f32 %v2273, %v2534
  %v2536 = vpop.f32.mrf.mxu0
  %v2537 = vadd.f32 %v2277, %v2536
  %v2538 = vpop.f32.mrf.mxu0
  %v2539 = vadd.f32 %v2273, %v2538
  %v2540 = vpop.f32.mrf.mxu0
  %v2541 = vadd.f32 %v2277, %v2540
  %2542 = vmatprep.mubr.bf16.mxu0 %v2219
  %2543 = vmatmul.mubr.bf16.gmra.mxu0 %v2218
  %v2544 = vpop.f32.mrf.mxu0
  %v2545 = vadd.f32 %v2273, %v2544
  %v2546 = vpop.f32.mrf.mxu0
  %v2547 = vadd.f32 %v2277, %v2546
  %v2548 = vpop.f32.mrf.mxu0
  %v2549 = vadd.f32 %v2273, %v2548
  %v2550 = vpop.f32.mrf.mxu0
  %v2551 = vadd.f32 %v2277, %v2550
  %2552 = vmatprep.mubr.bf16.mxu0 %v2221
  %2553 = vmatmul.mubr.bf16.gmra.mxu0 %v2220
  %v2554 = vpop.f32.mrf.mxu0
  %v2555 = vadd.f32 %v2273, %v2554
  %v2556 = vpop.f32.mrf.mxu0
  %v2557 = vadd.f32 %v2277, %v2556
  %v2558 = vpop.f32.mrf.mxu0
  %v2559 = vadd.f32 %v2273, %v2558
  %v2560 = vpop.f32.mrf.mxu0
  %v2561 = vadd.f32 %v2277, %v2560
  %2562 = vmatprep.mubr.bf16.mxu0 %v2223
  %2563 = vmatmul.mubr.bf16.gmra.mxu0 %v2222
  %v2564 = vpop.f32.mrf.mxu0
  %v2565 = vadd.f32 %v2273, %v2564
  %v2566 = vpop.f32.mrf.mxu0
  %v2567 = vadd.f32 %v2277, %v2566
  %v2568 = vpop.f32.mrf.mxu0
  %v2569 = vadd.f32 %v2273, %v2568
  %v2570 = vpop.f32.mrf.mxu0
  %v2571 = vadd.f32 %v2277, %v2570
  %2572 = vmatprep.mubr.bf16.mxu0 %v2225
  %2573 = vmatmul.mubr.bf16.gmra.mxu0 %v2224
  %v2574 = vpop.f32.mrf.mxu0
  %v2575 = vadd.f32 %v2273, %v2574
  %v2576 = vpop.f32.mrf.mxu0
  %v2577 = vadd.f32 %v2277, %v2576
  %v2578 = vpop.f32.mrf.mxu0
  %v2579 = vadd.f32 %v2273, %v2578
  %v2580 = vpop.f32.mrf.mxu0
  %v2581 = vadd.f32 %v2277, %v2580
  %2582 = vmatprep.mubr.bf16.mxu0 %v2227
  %2583 = vmatmul.mubr.bf16.gmra.mxu0 %v2226
  %v2584 = vpop.f32.mrf.mxu0
  %v2585 = vadd.f32 %v2273, %v2584
  %v2586 = vpop.f32.mrf.mxu0
  %v2587 = vadd.f32 %v2277, %v2586
  %v2588 = vpop.f32.mrf.mxu0
  %v2589 = vadd.f32 %v2273, %v2588
  %v2590 = vpop.f32.mrf.mxu0
  %v2591 = vadd.f32 %v2277, %v2590
  %2592 = vmatprep.mubr.bf16.mxu0 %v2229
  %2593 = vmatmul.mubr.bf16.gmra.mxu0 %v2228
  %v2594 = vpop.f32.mrf.mxu0
  %v2595 = vadd.f32 %v2273, %v2594
  %v2596 = vpop.f32.mrf.mxu0
  %v2597 = vadd.f32 %v2277, %v2596
  %v2598 = vpop.f32.mrf.mxu0
  %v2599 = vadd.f32 %v2273, %v2598
  %v2600 = vpop.f32.mrf.mxu0
  %v2601 = vadd.f32 %v2277, %v2600
  %2602 = vmatprep.mubr.bf16.mxu0 %v2231
  %2603 = vmatmul.mubr.bf16.gmra.mxu0 %v2230
  %v2604 = vpop.f32.mrf.mxu0
  %v2605 = vadd.f32 %v2273, %v2604
  %v2606 = vpop.f32.mrf.mxu0
  %v2607 = vadd.f32 %v2277, %v2606
  %v2608 = vpop.f32.mrf.mxu0
  %v2609 = vadd.f32 %v2273, %v2608
  %v2610 = vpop.f32.mrf.mxu0
  %v2611 = vadd.f32 %v2277, %v2610
  %2612 = vmatprep.mubr.bf16.mxu0 %v2233
  %2613 = vmatmul.mubr.bf16.gmra.mxu0 %v2232
  %v2614 = vpop.f32.mrf.mxu0
  %v2615 = vadd.f32 %v2273, %v2614
  %v2616 = vpop.f32.mrf.mxu0
  %v2617 = vadd.f32 %v2277, %v2616
  %v2618 = vpop.f32.mrf.mxu0
  %v2619 = vadd.f32 %v2273, %v2618
  %v2620 = vpop.f32.mrf.mxu0
  %v2621 = vadd.f32 %v2277, %v2620
  %2622 = vmatprep.mubr.bf16.mxu0 %v2235
  %2623 = vmatmul.mubr.bf16.gmra.mxu0 %v2234
  %v2624 = vpop.f32.mrf.mxu0
  %v2625 = vadd.f32 %v2273, %v2624
  %v2626 = vpop.f32.mrf.mxu0
  %v2627 = vadd.f32 %v2277, %v2626
  %v2628 = vpop.f32.mrf.mxu0
  %v2629 = vadd.f32 %v2273, %v2628
  %v2630 = vpop.f32.mrf.mxu0
  %v2631 = vadd.f32 %v2277, %v2630
  %2632 = vdwg.mxu0
  %v2633 = vmax.f32 %v2475, 0.0
  %v2634 = vmax.f32 %v2477, 0.0
  %v2635 = vmax.f32 %v2479, 0.0
  %v2636 = vmax.f32 %v2481, 0.0
  %v2637 = vmax.f32 %v2485, 0.0
  %v2638 = vmax.f32 %v2487, 0.0
  %v2639 = vmax.f32 %v2489, 0.0
  %v2640 = vmax.f32 %v2491, 0.0
  %v2641 = vmax.f32 %v2495, 0.0
  %v2642 = vmax.f32 %v2497, 0.0
  %v2643 = vmax.f32 %v2499, 0.0
  %v2644 = vmax.f32 %v2501, 0.0
  %v2645 = vmax.f32 %v2505, 0.0
  %v2646 = vmax.f32 %v2507, 0.0
  %v2647 = vmax.f32 %v2509, 0.0
  %v2648 = vmax.f32 %v2511, 0.0
  %v2649 = vmax.f32 %v2515, 0.0
  %v2650 = vmax.f32 %v2517, 0.0
  %v2651 = vmax.f32 %v2519, 0.0
  %v2652 = vmax.f32 %v2521, 0.0
  %v2653 = vmax.f32 %v2525, 0.0
  %v2654 = vmax.f32 %v2527, 0.0
  %v2655 = vmax.f32 %v2529, 0.0
  %v2656 = vmax.f32 %v2531, 0.0
  %v2657 = vmax.f32 %v2535, 0.0
  %v2658 = vmax.f32 %v2537, 0.0
  %v2659 = vmax.f32 %v2539, 0.0
  %v2660 = vmax.f32 %v2541, 0.0
  %v2661 = vmax.f32 %v2545, 0.0
  %v2662 = vmax.f32 %v2547, 0.0
  %v2663 = vmax.f32 %v2549, 0.0
  %v2664 = vmax.f32 %v2551, 0.0
  %v2665 = vmax.f32 %v2555, 0.0
  %v2666 = vmax.f32 %v2557, 0.0
  %v2667 = vmax.f32 %v2559, 0.0
  %v2668 = vmax.f32 %v2561, 0.0
  %v2669 = vmax.f32 %v2565, 0.0
  %v2670 = vmax.f32 %v2567, 0.0
  %v2671 = vmax.f32 %v2569, 0.0
  %v2672 = vmax.f32 %v2571, 0.0
  %v2673 = vmax.f32 %v2575, 0.0
  %v2674 = vmax.f32 %v2577, 0.0
  %v2675 = vmax.f32 %v2579, 0.0
  %v2676 = vmax.f32 %v2581, 0.0
  %v2677 = vmax.f32 %v2585, 0.0
  %v2678 = vmax.f32 %v2587, 0.0
  %v2679 = vmax.f32 %v2589, 0.0
  %v2680 = vmax.f32 %v2591, 0.0
  %v2681 = vmax.f32 %v2595, 0.0
  %v2682 = vmax.f32 %v2597, 0.0
  %v2683 = vmax.f32 %v2599, 0.0
  %v2684 = vmax.f32 %v2601, 0.0
  %v2685 = vmax.f32 %v2605, 0.0
  %v2686 = vmax.f32 %v2607, 0.0
  %v2687 = vmax.f32 %v2609, 0.0
  %v2688 = vmax.f32 %v2611, 0.0
  %v2689 = vmax.f32 %v2615, 0.0
  %v2690 = vmax.f32 %v2617, 0.0
  %v2691 = vmax.f32 %v2619, 0.0
  %v2692 = vmax.f32 %v2621, 0.0
  %v2693 = vmax.f32 %v2625, 0.0
  %v2694 = vmax.f32 %v2627, 0.0
  %v2695 = vmax.f32 %v2629, 0.0
  %v2696 = vmax.f32 %v2631, 0.0
  %v2697 = vpack.c.bf16 %v2635, %v2633
  %v2698 = vpack.c.bf16 %v2636, %v2634
  %v2699 = vpack.c.bf16 %v2639, %v2637
  %v2700 = vpack.c.bf16 %v2640, %v2638
  %v2701 = vpack.c.bf16 %v2643, %v2641
  %v2702 = vpack.c.bf16 %v2644, %v2642
  %v2703 = vpack.c.bf16 %v2647, %v2645
  %v2704 = vpack.c.bf16 %v2648, %v2646
  %v2705 = vpack.c.bf16 %v2651, %v2649
  %v2706 = vpack.c.bf16 %v2652, %v2650
  %v2707 = vpack.c.bf16 %v2655, %v2653
  %v2708 = vpack.c.bf16 %v2656, %v2654
  %v2709 = vpack.c.bf16 %v2659, %v2657
  %v2710 = vpack.c.bf16 %v2660, %v2658
  %v2711 = vpack.c.bf16 %v2663, %v2661
  %v2712 = vpack.c.bf16 %v2664, %v2662
  %v2713 = vpack.c.bf16 %v2667, %v2665
  %v2714 = vpack.c.bf16 %v2668, %v2666
  %v2715 = vpack.c.bf16 %v2671, %v2669
  %v2716 = vpack.c.bf16 %v2672, %v2670
  %v2717 = vpack.c.bf16 %v2675, %v2673
  %v2718 = vpack.c.bf16 %v2676, %v2674
  %v2719 = vpack.c.bf16 %v2679, %v2677
  %v2720 = vpack.c.bf16 %v2680, %v2678
  %v2721 = vpack.c.bf16 %v2683, %v2681
  %v2722 = vpack.c.bf16 %v2684, %v2682
  %v2723 = vpack.c.bf16 %v2687, %v2685
  %v2724 = vpack.c.bf16 %v2688, %v2686
  %v2725 = vpack.c.bf16 %v2691, %v2689
  %v2726 = vpack.c.bf16 %v2692, %v2690
  %v2727 = vpack.c.bf16 %v2695, %v2693
  %v2728 = vpack.c.bf16 %v2696, %v2694
  %v2729 = vld [vmem:[%s8] sm:$0xff]
  %v2730 = vld [vmem:[%s8 + $0x8] sm:$0xff]
  %v2731 = vld [vmem:[%s8 + $0x10] sm:$0xff]
  %v2732 = vld [vmem:[%s8 + $0x18] sm:$0xff]
  %v2733 = vld [vmem:[%s8 + $0x20] sm:$0xff]
  %v2734 = vld [vmem:[%s8 + $0x28] sm:$0xff]
  %v2735 = vld [vmem:[%s8 + $0x30] sm:$0xff]
  %v2736 = vld [vmem:[%s8 + $0x38] sm:$0xff]
  %v2737 = vld [vmem:[%s8 + $0x40] sm:$0xff]
  %v2738 = vld [vmem:[%s8 + $0x48] sm:$0xff]
  %v2739 = vld [vmem:[%s8 + $0x50] sm:$0xff]
  %v2740 = vld [vmem:[%s8 + $0x58] sm:$0xff]
  %v2741 = vld [vmem:[%s8 + $0x60] sm:$0xff]
  %v2742 = vld [vmem:[%s8 + $0x68] sm:$0xff]
  %v2743 = vld [vmem:[%s8 + $0x70] sm:$0xff]
  %v2744 = vld [vmem:[%s8 + $0x78] sm:$0xff]
  %v2745 = vld [vmem:[%s8 + $0x80] sm:$0xff]
  %v2746 = vld [vmem:[%s8 + $0x88] sm:$0xff]
  %v2747 = vld [vmem:[%s8 + $0x90] sm:$0xff]
  %v2748 = vld [vmem:[%s8 + $0x98] sm:$0xff]
  %v2749 = vld [vmem:[%s8 + $0xa0] sm:$0xff]
  %v2750 = vld [vmem:[%s8 + $0xa8] sm:$0xff]
  %v2751 = vld [vmem:[%s8 + $0xb0] sm:$0xff]
  %v2752 = vld [vmem:[%s8 + $0xb8] sm:$0xff]
  %v2753 = vld [vmem:[%s8 + $0xc0] sm:$0xff]
  %v2754 = vld [vmem:[%s8 + $0xc8] sm:$0xff]
  %v2755 = vld [vmem:[%s8 + $0xd0] sm:$0xff]
  %v2756 = vld [vmem:[%s8 + $0xd8] sm:$0xff]
  %v2757 = vld [vmem:[%s8 + $0xe0] sm:$0xff]
  %v2758 = vld [vmem:[%s8 + $0xe8] sm:$0xff]
  %v2759 = vld [vmem:[%s8 + $0xf0] sm:$0xff]
  %v2760 = vld [vmem:[%s8 + $0xf8] sm:$0xff]
  %v2761 = vld [vmem:[%s9] sm:$0x3]
  %v2763 = vlaneseq
  %v2764 = vshrl.u32 %v2763, 7
  %v2765 = vsub.s32 0, %v2764
  %v2766 = vrot.slane %v2761, %v2765
  %v2767 = vlaneseq
  %v2768 = vshrl.u32 %v2767, 7
  %v2769 = vsub.s32 1, %v2768
  %v2770 = vrot.slane %v2761, %v2769
  %v2805 = vunpack.c.l.b16 %v2729
  %v2806 = vunpack.c.h.b16 %v2729
  %v2807 = vunpack.c.l.b16 %v2730
  %v2808 = vunpack.c.h.b16 %v2730
  %v2809 = vunpack.c.l.b16 %v2731
  %v2810 = vunpack.c.h.b16 %v2731
  %v2811 = vunpack.c.l.b16 %v2732
  %v2812 = vunpack.c.h.b16 %v2732
  %v2813 = vunpack.c.l.b16 %v2733
  %v2814 = vunpack.c.h.b16 %v2733
  %v2815 = vunpack.c.l.b16 %v2734
  %v2816 = vunpack.c.h.b16 %v2734
  %v2817 = vunpack.c.l.b16 %v2735
  %v2818 = vunpack.c.h.b16 %v2735
  %v2819 = vunpack.c.l.b16 %v2736
  %v2820 = vunpack.c.h.b16 %v2736
  %v2821 = vunpack.c.l.b16 %v2737
  %v2822 = vunpack.c.h.b16 %v2737
  %v2823 = vunpack.c.l.b16 %v2738
  %v2824 = vunpack.c.h.b16 %v2738
  %v2825 = vunpack.c.l.b16 %v2739
  %v2826 = vunpack.c.h.b16 %v2739
  %v2827 = vunpack.c.l.b16 %v2740
  %v2828 = vunpack.c.h.b16 %v2740
  %v2829 = vunpack.c.l.b16 %v2741
  %v2830 = vunpack.c.h.b16 %v2741
  %v2831 = vunpack.c.l.b16 %v2742
  %v2832 = vunpack.c.h.b16 %v2742
  %v2833 = vunpack.c.l.b16 %v2743
  %v2834 = vunpack.c.h.b16 %v2743
  %v2835 = vunpack.c.l.b16 %v2744
  %v2836 = vunpack.c.h.b16 %v2744
  %v2837 = vunpack.c.l.b16 %v2745
  %v2838 = vunpack.c.h.b16 %v2745
  %v2839 = vunpack.c.l.b16 %v2746
  %v2840 = vunpack.c.h.b16 %v2746
  %v2841 = vunpack.c.l.b16 %v2747
  %v2842 = vunpack.c.h.b16 %v2747
  %v2843 = vunpack.c.l.b16 %v2748
  %v2844 = vunpack.c.h.b16 %v2748
  %v2845 = vunpack.c.l.b16 %v2749
  %v2846 = vunpack.c.h.b16 %v2749
  %v2847 = vunpack.c.l.b16 %v2750
  %v2848 = vunpack.c.h.b16 %v2750
  %v2849 = vunpack.c.l.b16 %v2751
  %v2850 = vunpack.c.h.b16 %v2751
  %v2851 = vunpack.c.l.b16 %v2752
  %v2852 = vunpack.c.h.b16 %v2752
  %v2853 = vunpack.c.l.b16 %v2753
  %v2854 = vunpack.c.h.b16 %v2753
  %v2855 = vunpack.c.l.b16 %v2754
  %v2856 = vunpack.c.h.b16 %v2754
  %v2857 = vunpack.c.l.b16 %v2755
  %v2858 = vunpack.c.h.b16 %v2755
  %v2859 = vunpack.c.l.b16 %v2756
  %v2860 = vunpack.c.h.b16 %v2756
  %v2861 = vunpack.c.l.b16 %v2757
  %v2862 = vunpack.c.h.b16 %v2757
  %v2863 = vunpack.c.l.b16 %v2758
  %v2864 = vunpack.c.h.b16 %v2758
  %v2865 = vunpack.c.l.b16 %v2759
  %v2866 = vunpack.c.h.b16 %v2759
  %v2867 = vunpack.c.l.b16 %v2760
  %v2868 = vunpack.c.h.b16 %v2760
  %v2869 = vpack.c.b16 %v2807, %v2805
  %v2870 = vpack.c.b16 %v2808, %v2806
  %v2871 = vpack.c.b16 %v2811, %v2809
  %v2872 = vpack.c.b16 %v2812, %v2810
  %v2873 = vpack.c.b16 %v2815, %v2813
  %v2874 = vpack.c.b16 %v2816, %v2814
  %v2875 = vpack.c.b16 %v2819, %v2817
  %v2876 = vpack.c.b16 %v2820, %v2818
  %v2877 = vpack.c.b16 %v2823, %v2821
  %v2878 = vpack.c.b16 %v2824, %v2822
  %v2879 = vpack.c.b16 %v2827, %v2825
  %v2880 = vpack.c.b16 %v2828, %v2826
  %v2881 = vpack.c.b16 %v2831, %v2829
  %v2882 = vpack.c.b16 %v2832, %v2830
  %v2883 = vpack.c.b16 %v2835, %v2833
  %v2884 = vpack.c.b16 %v2836, %v2834
  %v2885 = vpack.c.b16 %v2839, %v2837
  %v2886 = vpack.c.b16 %v2840, %v2838
  %v2887 = vpack.c.b16 %v2843, %v2841
  %v2888 = vpack.c.b16 %v2844, %v2842
  %v2889 = vpack.c.b16 %v2847, %v2845
  %v2890 = vpack.c.b16 %v2848, %v2846
  %v2891 = vpack.c.b16 %v2851, %v2849
  %v2892 = vpack.c.b16 %v2852, %v2850
  %v2893 = vpack.c.b16 %v2855, %v2853
  %v2894 = vpack.c.b16 %v2856, %v2854
  %v2895 = vpack.c.b16 %v2859, %v2857
  %v2896 = vpack.c.b16 %v2860, %v2858
  %v2897 = vpack.c.b16 %v2863, %v2861
  %v2898 = vpack.c.b16 %v2864, %v2862
  %v2899 = vpack.c.b16 %v2867, %v2865
  %v2900 = vpack.c.b16 %v2868, %v2866
  %2933 = vmatprep.subr.bf16.mxu0 %v2884
  %2934 = vmatpush1.bf16.msra.mxu0 %v2883
  %2935 = vmatprep.subr.bf16.mxu0 %v2882
  %2936 = vmatpush1.bf16.msra.mxu0 %v2881
  %2937 = vmatprep.subr.bf16.mxu0 %v2880
  %2938 = vmatpush1.bf16.msra.mxu0 %v2879
  %2939 = vmatprep.subr.bf16.mxu0 %v2878
  %2940 = vmatpush1.bf16.msra.mxu0 %v2877
  %2941 = vmatprep.subr.bf16.mxu0 %v2876
  %2942 = vmatpush1.bf16.msra.mxu0 %v2875
  %2943 = vmatprep.subr.bf16.mxu0 %v2874
  %2944 = vmatpush1.bf16.msra.mxu0 %v2873
  %2945 = vmatprep.subr.bf16.mxu0 %v2872
  %2946 = vmatpush1.bf16.msra.mxu0 %v2871
  %2947 = vmatprep.subr.bf16.mxu0 %v2870
  %2948 = vmatpush1.bf16.msra.mxu0 %v2869
  %2949 = vmatprep.subr.bf16.mxu0 %v2900
  %2950 = vmatpush2.bf16.msra.mxu0 %v2899
  %2951 = vmatprep.subr.bf16.mxu0 %v2898
  %2952 = vmatpush2.bf16.msra.mxu0 %v2897
  %2953 = vmatprep.subr.bf16.mxu0 %v2896
  %2954 = vmatpush2.bf16.msra.mxu0 %v2895
  %2955 = vmatprep.subr.bf16.mxu0 %v2894
  %2956 = vmatpush2.bf16.msra.mxu0 %v2893
  %2957 = vmatprep.subr.bf16.mxu0 %v2892
  %2958 = vmatpush2.bf16.msra.mxu0 %v2891
  %2959 = vmatprep.subr.bf16.mxu0 %v2890
  %2960 = vmatpush2.bf16.msra.mxu0 %v2889
  %2961 = vmatprep.subr.bf16.mxu0 %v2888
  %2962 = vmatpush2.bf16.msra.mxu0 %v2887
  %2963 = vmatprep.subr.bf16.mxu0 %v2886
  %2964 = vmatpush2.bf16.msra.mxu0 %v2885
  %2965 = vmatprep.mubr.bf16.mxu0 %v2698
  %2966 = vmatmul.mubr.bf16.gmra.mxu0 %v2697
  %v2967 = vpop.f32.mrf.mxu0
  %v2968 = vadd.f32 %v2766, %v2967
  %v2969 = vpop.f32.mrf.mxu0
  %v2970 = vadd.f32 %v2770, %v2969
  %v2971 = vpop.f32.mrf.mxu0
  %v2972 = vadd.f32 %v2766, %v2971
  %v2973 = vpop.f32.mrf.mxu0
  %v2974 = vadd.f32 %v2770, %v2973
  %2975 = vmatprep.mubr.bf16.mxu0 %v2700
  %2976 = vmatmul.mubr.bf16.gmra.mxu0 %v2699
  %v2977 = vpop.f32.mrf.mxu0
  %v2978 = vadd.f32 %v2766, %v2977
  %v2979 = vpop.f32.mrf.mxu0
  %v2980 = vadd.f32 %v2770, %v2979
  %v2981 = vpop.f32.mrf.mxu0
  %v2982 = vadd.f32 %v2766, %v2981
  %v2983 = vpop.f32.mrf.mxu0
  %v2984 = vadd.f32 %v2770, %v2983
  %2985 = vmatprep.mubr.bf16.mxu0 %v2702
  %2986 = vmatmul.mubr.bf16.gmra.mxu0 %v2701
  %v2987 = vpop.f32.mrf.mxu0
  %v2988 = vadd.f32 %v2766, %v2987
  %v2989 = vpop.f32.mrf.mxu0
  %v2990 = vadd.f32 %v2770, %v2989
  %v2991 = vpop.f32.mrf.mxu0
  %v2992 = vadd.f32 %v2766, %v2991
  %v2993 = vpop.f32.mrf.mxu0
  %v2994 = vadd.f32 %v2770, %v2993
  %2995 = vmatprep.mubr.bf16.mxu0 %v2704
  %2996 = vmatmul.mubr.bf16.gmra.mxu0 %v2703
  %v2997 = vpop.f32.mrf.mxu0
  %v2998 = vadd.f32 %v2766, %v2997
  %v2999 = vpop.f32.mrf.mxu0
  %v3000 = vadd.f32 %v2770, %v2999
  %v3001 = vpop.f32.mrf.mxu0
  %v3002 = vadd.f32 %v2766, %v3001
  %v3003 = vpop.f32.mrf.mxu0
  %v3004 = vadd.f32 %v2770, %v3003
  %3005 = vmatprep.mubr.bf16.mxu0 %v2706
  %3006 = vmatmul.mubr.bf16.gmra.mxu0 %v2705
  %v3007 = vpop.f32.mrf.mxu0
  %v3008 = vadd.f32 %v2766, %v3007
  %v3009 = vpop.f32.mrf.mxu0
  %v3010 = vadd.f32 %v2770, %v3009
  %v3011 = vpop.f32.mrf.mxu0
  %v3012 = vadd.f32 %v2766, %v3011
  %v3013 = vpop.f32.mrf.mxu0
  %v3014 = vadd.f32 %v2770, %v3013
  %3015 = vmatprep.mubr.bf16.mxu0 %v2708
  %3016 = vmatmul.mubr.bf16.gmra.mxu0 %v2707
  %v3017 = vpop.f32.mrf.mxu0
  %v3018 = vadd.f32 %v2766, %v3017
  %v3019 = vpop.f32.mrf.mxu0
  %v3020 = vadd.f32 %v2770, %v3019
  %v3021 = vpop.f32.mrf.mxu0
  %v3022 = vadd.f32 %v2766, %v3021
  %v3023 = vpop.f32.mrf.mxu0
  %v3024 = vadd.f32 %v2770, %v3023
  %3025 = vmatprep.mubr.bf16.mxu0 %v2710
  %3026 = vmatmul.mubr.bf16.gmra.mxu0 %v2709
  %v3027 = vpop.f32.mrf.mxu0
  %v3028 = vadd.f32 %v2766, %v3027
  %v3029 = vpop.f32.mrf.mxu0
  %v3030 = vadd.f32 %v2770, %v3029
  %v3031 = vpop.f32.mrf.mxu0
  %v3032 = vadd.f32 %v2766, %v3031
  %v3033 = vpop.f32.mrf.mxu0
  %v3034 = vadd.f32 %v2770, %v3033
  %3035 = vmatprep.mubr.bf16.mxu0 %v2712
  %3036 = vmatmul.mubr.bf16.gmra.mxu0 %v2711
  %v3037 = vpop.f32.mrf.mxu0
  %v3038 = vadd.f32 %v2766, %v3037
  %v3039 = vpop.f32.mrf.mxu0
  %v3040 = vadd.f32 %v2770, %v3039
  %v3041 = vpop.f32.mrf.mxu0
  %v3042 = vadd.f32 %v2766, %v3041
  %v3043 = vpop.f32.mrf.mxu0
  %v3044 = vadd.f32 %v2770, %v3043
  %3045 = vmatprep.mubr.bf16.mxu0 %v2714
  %3046 = vmatmul.mubr.bf16.gmra.mxu0 %v2713
  %v3047 = vpop.f32.mrf.mxu0
  %v3048 = vadd.f32 %v2766, %v3047
  %v3049 = vpop.f32.mrf.mxu0
  %v3050 = vadd.f32 %v2770, %v3049
  %v3051 = vpop.f32.mrf.mxu0
  %v3052 = vadd.f32 %v2766, %v3051
  %v3053 = vpop.f32.mrf.mxu0
  %v3054 = vadd.f32 %v2770, %v3053
  %3055 = vmatprep.mubr.bf16.mxu0 %v2716
  %3056 = vmatmul.mubr.bf16.gmra.mxu0 %v2715
  %v3057 = vpop.f32.mrf.mxu0
  %v3058 = vadd.f32 %v2766, %v3057
  %v3059 = vpop.f32.mrf.mxu0
  %v3060 = vadd.f32 %v2770, %v3059
  %v3061 = vpop.f32.mrf.mxu0
  %v3062 = vadd.f32 %v2766, %v3061
  %v3063 = vpop.f32.mrf.mxu0
  %v3064 = vadd.f32 %v2770, %v3063
  %3065 = vmatprep.mubr.bf16.mxu0 %v2718
  %3066 = vmatmul.mubr.bf16.gmra.mxu0 %v2717
  %v3067 = vpop.f32.mrf.mxu0
  %v3068 = vadd.f32 %v2766, %v3067
  %v3069 = vpop.f32.mrf.mxu0
  %v3070 = vadd.f32 %v2770, %v3069
  %v3071 = vpop.f32.mrf.mxu0
  %v3072 = vadd.f32 %v2766, %v3071
  %v3073 = vpop.f32.mrf.mxu0
  %v3074 = vadd.f32 %v2770, %v3073
  %3075 = vmatprep.mubr.bf16.mxu0 %v2720
  %3076 = vmatmul.mubr.bf16.gmra.mxu0 %v2719
  %v3077 = vpop.f32.mrf.mxu0
  %v3078 = vadd.f32 %v2766, %v3077
  %v3079 = vpop.f32.mrf.mxu0
  %v3080 = vadd.f32 %v2770, %v3079
  %v3081 = vpop.f32.mrf.mxu0
  %v3082 = vadd.f32 %v2766, %v3081
  %v3083 = vpop.f32.mrf.mxu0
  %v3084 = vadd.f32 %v2770, %v3083
  %3085 = vmatprep.mubr.bf16.mxu0 %v2722
  %3086 = vmatmul.mubr.bf16.gmra.mxu0 %v2721
  %v3087 = vpop.f32.mrf.mxu0
  %v3088 = vadd.f32 %v2766, %v3087
  %v3089 = vpop.f32.mrf.mxu0
  %v3090 = vadd.f32 %v2770, %v3089
  %v3091 = vpop.f32.mrf.mxu0
  %v3092 = vadd.f32 %v2766, %v3091
  %v3093 = vpop.f32.mrf.mxu0
  %v3094 = vadd.f32 %v2770, %v3093
  %3095 = vmatprep.mubr.bf16.mxu0 %v2724
  %3096 = vmatmul.mubr.bf16.gmra.mxu0 %v2723
  %v3097 = vpop.f32.mrf.mxu0
  %v3098 = vadd.f32 %v2766, %v3097
  %v3099 = vpop.f32.mrf.mxu0
  %v3100 = vadd.f32 %v2770, %v3099
  %v3101 = vpop.f32.mrf.mxu0
  %v3102 = vadd.f32 %v2766, %v3101
  %v3103 = vpop.f32.mrf.mxu0
  %v3104 = vadd.f32 %v2770, %v3103
  %3105 = vmatprep.mubr.bf16.mxu0 %v2726
  %3106 = vmatmul.mubr.bf16.gmra.mxu0 %v2725
  %v3107 = vpop.f32.mrf.mxu0
  %v3108 = vadd.f32 %v2766, %v3107
  %v3109 = vpop.f32.mrf.mxu0
  %v3110 = vadd.f32 %v2770, %v3109
  %v3111 = vpop.f32.mrf.mxu0
  %v3112 = vadd.f32 %v2766, %v3111
  %v3113 = vpop.f32.mrf.mxu0
  %v3114 = vadd.f32 %v2770, %v3113
  %3115 = vmatprep.mubr.bf16.mxu0 %v2728
  %3116 = vmatmul.mubr.bf16.gmra.mxu0 %v2727
  %v3117 = vpop.f32.mrf.mxu0
  %v3118 = vadd.f32 %v2766, %v3117
  %v3119 = vpop.f32.mrf.mxu0
  %v3120 = vadd.f32 %v2770, %v3119
  %v3121 = vpop.f32.mrf.mxu0
  %v3122 = vadd.f32 %v2766, %v3121
  %v3123 = vpop.f32.mrf.mxu0
  %v3124 = vadd.f32 %v2770, %v3123
  %3125 = vdwg.mxu0
  %v3126 = vmax.f32 %v2968, 0.0
  %v3127 = vmax.f32 %v2970, 0.0
  %v3128 = vmax.f32 %v2972, 0.0
  %v3129 = vmax.f32 %v2974, 0.0
  %v3130 = vmax.f32 %v2978, 0.0
  %v3131 = vmax.f32 %v2980, 0.0
  %v3132 = vmax.f32 %v2982, 0.0
  %v3133 = vmax.f32 %v2984, 0.0
  %v3134 = vmax.f32 %v2988, 0.0
  %v3135 = vmax.f32 %v2990, 0.0
  %v3136 = vmax.f32 %v2992, 0.0
  %v3137 = vmax.f32 %v2994, 0.0
  %v3138 = vmax.f32 %v2998, 0.0
  %v3139 = vmax.f32 %v3000, 0.0
  %v3140 = vmax.f32 %v3002, 0.0
  %v3141 = vmax.f32 %v3004, 0.0
  %v3142 = vmax.f32 %v3008, 0.0
  %v3143 = vmax.f32 %v3010, 0.0
  %v3144 = vmax.f32 %v3012, 0.0
  %v3145 = vmax.f32 %v3014, 0.0
  %v3146 = vmax.f32 %v3018, 0.0
  %v3147 = vmax.f32 %v3020, 0.0
  %v3148 = vmax.f32 %v3022, 0.0
  %v3149 = vmax.f32 %v3024, 0.0
  %v3150 = vmax.f32 %v3028, 0.0
  %v3151 = vmax.f32 %v3030, 0.0
  %v3152 = vmax.f32 %v3032, 0.0
  %v3153 = vmax.f32 %v3034, 0.0
  %v3154 = vmax.f32 %v3038, 0.0
  %v3155 = vmax.f32 %v3040, 0.0
  %v3156 = vmax.f32 %v3042, 0.0
  %v3157 = vmax.f32 %v3044, 0.0
  %v3158 = vmax.f32 %v3048, 0.0
  %v3159 = vmax.f32 %v3050, 0.0
  %v3160 = vmax.f32 %v3052, 0.0
  %v3161 = vmax.f32 %v3054, 0.0
  %v3162 = vmax.f32 %v3058, 0.0
  %v3163 = vmax.f32 %v3060, 0.0
  %v3164 = vmax.f32 %v3062, 0.0
  %v3165 = vmax.f32 %v3064, 0.0
  %v3166 = vmax.f32 %v3068, 0.0
  %v3167 = vmax.f32 %v3070, 0.0
  %v3168 = vmax.f32 %v3072, 0.0
  %v3169 = vmax.f32 %v3074, 0.0
  %v3170 = vmax.f32 %v3078, 0.0
  %v3171 = vmax.f32 %v3080, 0.0
  %v3172 = vmax.f32 %v3082, 0.0
  %v3173 = vmax.f32 %v3084, 0.0
  %v3174 = vmax.f32 %v3088, 0.0
  %v3175 = vmax.f32 %v3090, 0.0
  %v3176 = vmax.f32 %v3092, 0.0
  %v3177 = vmax.f32 %v3094, 0.0
  %v3178 = vmax.f32 %v3098, 0.0
  %v3179 = vmax.f32 %v3100, 0.0
  %v3180 = vmax.f32 %v3102, 0.0
  %v3181 = vmax.f32 %v3104, 0.0
  %v3182 = vmax.f32 %v3108, 0.0
  %v3183 = vmax.f32 %v3110, 0.0
  %v3184 = vmax.f32 %v3112, 0.0
  %v3185 = vmax.f32 %v3114, 0.0
  %v3186 = vmax.f32 %v3118, 0.0
  %v3187 = vmax.f32 %v3120, 0.0
  %v3188 = vmax.f32 %v3122, 0.0
  %v3189 = vmax.f32 %v3124, 0.0
  %v3190 = vpack.c.bf16 %v3128, %v3126
  %v3191 = vpack.c.bf16 %v3129, %v3127
  %v3192 = vpack.c.bf16 %v3132, %v3130
  %v3193 = vpack.c.bf16 %v3133, %v3131
  %v3194 = vpack.c.bf16 %v3136, %v3134
  %v3195 = vpack.c.bf16 %v3137, %v3135
  %v3196 = vpack.c.bf16 %v3140, %v3138
  %v3197 = vpack.c.bf16 %v3141, %v3139
  %v3198 = vpack.c.bf16 %v3144, %v3142
  %v3199 = vpack.c.bf16 %v3145, %v3143
  %v3200 = vpack.c.bf16 %v3148, %v3146
  %v3201 = vpack.c.bf16 %v3149, %v3147
  %v3202 = vpack.c.bf16 %v3152, %v3150
  %v3203 = vpack.c.bf16 %v3153, %v3151
  %v3204 = vpack.c.bf16 %v3156, %v3154
  %v3205 = vpack.c.bf16 %v3157, %v3155
  %v3206 = vpack.c.bf16 %v3160, %v3158
  %v3207 = vpack.c.bf16 %v3161, %v3159
  %v3208 = vpack.c.bf16 %v3164, %v3162
  %v3209 = vpack.c.bf16 %v3165, %v3163
  %v3210 = vpack.c.bf16 %v3168, %v3166
  %v3211 = vpack.c.bf16 %v3169, %v3167
  %v3212 = vpack.c.bf16 %v3172, %v3170
  %v3213 = vpack.c.bf16 %v3173, %v3171
  %v3214 = vpack.c.bf16 %v3176, %v3174
  %v3215 = vpack.c.bf16 %v3177, %v3175
  %v3216 = vpack.c.bf16 %v3180, %v3178
  %v3217 = vpack.c.bf16 %v3181, %v3179
  %v3218 = vpack.c.bf16 %v3184, %v3182
  %v3219 = vpack.c.bf16 %v3185, %v3183
  %v3220 = vpack.c.bf16 %v3188, %v3186
  %v3221 = vpack.c.bf16 %v3189, %v3187
  %v3254 = vunpack.c.l.b16 %v3190
  %v3255 = vunpack.c.l.b16 %v3191
  %v3256 = vunpack.c.h.b16 %v3190
  %v3257 = vunpack.c.h.b16 %v3191
  %v3258 = vunpack.c.l.b16 %v3192
  %v3259 = vunpack.c.l.b16 %v3193
  %v3260 = vunpack.c.h.b16 %v3192
  %v3261 = vunpack.c.h.b16 %v3193
  %v3262 = vunpack.c.l.b16 %v3194
  %v3263 = vunpack.c.l.b16 %v3195
  %v3264 = vunpack.c.h.b16 %v3194
  %v3265 = vunpack.c.h.b16 %v3195
  %v3266 = vunpack.c.l.b16 %v3196
  %v3267 = vunpack.c.l.b16 %v3197
  %v3268 = vunpack.c.h.b16 %v3196
  %v3269 = vunpack.c.h.b16 %v3197
  %v3270 = vunpack.c.l.b16 %v3198
  %v3271 = vunpack.c.l.b16 %v3199
  %v3272 = vunpack.c.h.b16 %v3198
  %v3273 = vunpack.c.h.b16 %v3199
  %v3274 = vunpack.c.l.b16 %v3200
  %v3275 = vunpack.c.l.b16 %v3201
  %v3276 = vunpack.c.h.b16 %v3200
  %v3277 = vunpack.c.h.b16 %v3201
  %v3278 = vunpack.c.l.b16 %v3202
  %v3279 = vunpack.c.l.b16 %v3203
  %v3280 = vunpack.c.h.b16 %v3202
  %v3281 = vunpack.c.h.b16 %v3203
  %v3282 = vunpack.c.l.b16 %v3204
  %v3283 = vunpack.c.l.b16 %v3205
  %v3284 = vunpack.c.h.b16 %v3204
  %v3285 = vunpack.c.h.b16 %v3205
  %v3286 = vunpack.c.l.b16 %v3206
  %v3287 = vunpack.c.l.b16 %v3207
  %v3288 = vunpack.c.h.b16 %v3206
  %v3289 = vunpack.c.h.b16 %v3207
  %v3290 = vunpack.c.l.b16 %v3208
  %v3291 = vunpack.c.l.b16 %v3209
  %v3292 = vunpack.c.h.b16 %v3208
  %v3293 = vunpack.c.h.b16 %v3209
  %v3294 = vunpack.c.l.b16 %v3210
  %v3295 = vunpack.c.l.b16 %v3211
  %v3296 = vunpack.c.h.b16 %v3210
  %v3297 = vunpack.c.h.b16 %v3211
  %v3298 = vunpack.c.l.b16 %v3212
  %v3299 = vunpack.c.l.b16 %v3213
  %v3300 = vunpack.c.h.b16 %v3212
  %v3301 = vunpack.c.h.b16 %v3213
  %v3302 = vunpack.c.l.b16 %v3214
  %v3303 = vunpack.c.l.b16 %v3215
  %v3304 = vunpack.c.h.b16 %v3214
  %v3305 = vunpack.c.h.b16 %v3215
  %v3306 = vunpack.c.l.b16 %v3216
  %v3307 = vunpack.c.l.b16 %v3217
  %v3308 = vunpack.c.h.b16 %v3216
  %v3309 = vunpack.c.h.b16 %v3217
  %v3310 = vunpack.c.l.b16 %v3218
  %v3311 = vunpack.c.l.b16 %v3219
  %v3312 = vunpack.c.h.b16 %v3218
  %v3313 = vunpack.c.h.b16 %v3219
  %v3314 = vunpack.c.l.b16 %v3220
  %v3315 = vunpack.c.l.b16 %v3221
  %v3316 = vunpack.c.h.b16 %v3220
  %v3317 = vunpack.c.h.b16 %v3221
  %v3318 = vpack.c.b16 %v3255, %v3254
  %v3319 = vpack.c.b16 %v3257, %v3256
  %v3320 = vpack.c.b16 %v3259, %v3258
  %v3321 = vpack.c.b16 %v3261, %v3260
  %v3322 = vpack.c.b16 %v3263, %v3262
  %v3323 = vpack.c.b16 %v3265, %v3264
  %v3324 = vpack.c.b16 %v3267, %v3266
  %v3325 = vpack.c.b16 %v3269, %v3268
  %v3326 = vpack.c.b16 %v3271, %v3270
  %v3327 = vpack.c.b16 %v3273, %v3272
  %v3328 = vpack.c.b16 %v3275, %v3274
  %v3329 = vpack.c.b16 %v3277, %v3276
  %v3330 = vpack.c.b16 %v3279, %v3278
  %v3331 = vpack.c.b16 %v3281, %v3280
  %v3332 = vpack.c.b16 %v3283, %v3282
  %v3333 = vpack.c.b16 %v3285, %v3284
  %v3334 = vpack.c.b16 %v3287, %v3286
  %v3335 = vpack.c.b16 %v3289, %v3288
  %v3336 = vpack.c.b16 %v3291, %v3290
  %v3337 = vpack.c.b16 %v3293, %v3292
  %v3338 = vpack.c.b16 %v3295, %v3294
  %v3339 = vpack.c.b16 %v3297, %v3296
  %v3340 = vpack.c.b16 %v3299, %v3298
  %v3341 = vpack.c.b16 %v3301, %v3300
  %v3342 = vpack.c.b16 %v3303, %v3302
  %v3343 = vpack.c.b16 %v3305, %v3304
  %v3344 = vpack.c.b16 %v3307, %v3306
  %v3345 = vpack.c.b16 %v3309, %v3308
  %v3346 = vpack.c.b16 %v3311, %v3310
  %v3347 = vpack.c.b16 %v3313, %v3312
  %v3348 = vpack.c.b16 %v3315, %v3314
  %v3349 = vpack.c.b16 %v3317, %v3316
  %3382 = vst [vmem:[#allocation3] sm:$0xff] %v3318
  %3383 = vst [vmem:[#allocation3 + $0x8] sm:$0xff] %v3319
  %3384 = vst [vmem:[#allocation3 + $0x10] sm:$0xff] %v3320
  %3385 = vst [vmem:[#allocation3 + $0x18] sm:$0xff] %v3321
  %3386 = vst [vmem:[#allocation3 + $0x20] sm:$0xff] %v3322
  %3387 = vst [vmem:[#allocation3 + $0x28] sm:$0xff] %v3323
  %3388 = vst [vmem:[#allocation3 + $0x30] sm:$0xff] %v3324
  %3389 = vst [vmem:[#allocation3 + $0x38] sm:$0xff] %v3325
  %3390 = vst [vmem:[#allocation3 + $0x40] sm:$0xff] %v3326
  %3391 = vst [vmem:[#allocation3 + $0x48] sm:$0xff] %v3327
  %3392 = vst [vmem:[#allocation3 + $0x50] sm:$0xff] %v3328
  %3393 = vst [vmem:[#allocation3 + $0x58] sm:$0xff] %v3329
  %3394 = vst [vmem:[#allocation3 + $0x60] sm:$0xff] %v3330
  %3395 = vst [vmem:[#allocation3 + $0x68] sm:$0xff] %v3331
  %3396 = vst [vmem:[#allocation3 + $0x70] sm:$0xff] %v3332
  %3397 = vst [vmem:[#allocation3 + $0x78] sm:$0xff] %v3333
  %3398 = vst [vmem:[#allocation3 + $0x80] sm:$0xff] %v3334
  %3399 = vst [vmem:[#allocation3 + $0x88] sm:$0xff] %v3335
  %3400 = vst [vmem:[#allocation3 + $0x90] sm:$0xff] %v3336
  %3401 = vst [vmem:[#allocation3 + $0x98] sm:$0xff] %v3337
  %3402 = vst [vmem:[#allocation3 + $0xa0] sm:$0xff] %v3338
  %3403 = vst [vmem:[#allocation3 + $0xa8] sm:$0xff] %v3339
  %3404 = vst [vmem:[#allocation3 + $0xb0] sm:$0xff] %v3340
  %3405 = vst [vmem:[#allocation3 + $0xb8] sm:$0xff] %v3341
  %3406 = vst [vmem:[#allocation3 + $0xc0] sm:$0xff] %v3342
  %3407 = vst [vmem:[#allocation3 + $0xc8] sm:$0xff] %v3343
  %3408 = vst [vmem:[#allocation3 + $0xd0] sm:$0xff] %v3344
  %3409 = vst [vmem:[#allocation3 + $0xd8] sm:$0xff] %v3345
  %3410 = vst [vmem:[#allocation3 + $0xe0] sm:$0xff] %v3346
  %3411 = vst [vmem:[#allocation3 + $0xe8] sm:$0xff] %v3347
  %3412 = vst [vmem:[#allocation3 + $0xf0] sm:$0xff] %v3348
  %3413 = vst [vmem:[#allocation3 + $0xf8] sm:$0xff] %v3349
  %v3414 = vld [vmem:[%s0] sm:$0xff]
  %v3415 = vld [vmem:[%s0 + $0x8] sm:$0xff]
  %v3416 = vld [vmem:[%s0 + $0x10] sm:$0xff]
  %v3417 = vld [vmem:[%s0 + $0x18] sm:$0xff]
  %v3418 = vld [vmem:[%s0 + $0x20] sm:$0xff]
  %v3419 = vld [vmem:[%s0 + $0x28] sm:$0xff]
  %v3420 = vld [vmem:[%s0 + $0x30] sm:$0xff]
  %v3421 = vld [vmem:[%s0 + $0x38] sm:$0xff]
  %v3422 = vld [vmem:[%s0 + $0x40] sm:$0xff]
  %v3423 = vld [vmem:[%s0 + $0x48] sm:$0xff]
  %v3424 = vld [vmem:[%s0 + $0x50] sm:$0xff]
  %v3425 = vld [vmem:[%s0 + $0x58] sm:$0xff]
  %v3426 = vld [vmem:[%s0 + $0x60] sm:$0xff]
  %v3427 = vld [vmem:[%s0 + $0x68] sm:$0xff]
  %v3428 = vld [vmem:[%s0 + $0x70] sm:$0xff]
  %v3429 = vld [vmem:[%s0 + $0x78] sm:$0xff]
  %v3430 = vld [vmem:[%s0 + $0x80] sm:$0xff]
  %v3431 = vld [vmem:[%s0 + $0x88] sm:$0xff]
  %v3432 = vld [vmem:[%s0 + $0x90] sm:$0xff]
  %v3433 = vld [vmem:[%s0 + $0x98] sm:$0xff]
  %v3434 = vld [vmem:[%s0 + $0xa0] sm:$0xff]
  %v3435 = vld [vmem:[%s0 + $0xa8] sm:$0xff]
  %v3436 = vld [vmem:[%s0 + $0xb0] sm:$0xff]
  %v3437 = vld [vmem:[%s0 + $0xb8] sm:$0xff]
  %v3438 = vld [vmem:[%s0 + $0xc0] sm:$0xff]
  %v3439 = vld [vmem:[%s0 + $0xc8] sm:$0xff]
  %v3440 = vld [vmem:[%s0 + $0xd0] sm:$0xff]
  %v3441 = vld [vmem:[%s0 + $0xd8] sm:$0xff]
  %v3442 = vld [vmem:[%s0 + $0xe0] sm:$0xff]
  %v3443 = vld [vmem:[%s0 + $0xe8] sm:$0xff]
  %v3444 = vld [vmem:[%s0 + $0xf0] sm:$0xff]
  %v3445 = vld [vmem:[%s0 + $0xf8] sm:$0xff]
  %v3446 = vld [vmem:[#allocation3] sm:$0xff]
  %v3447 = vld [vmem:[#allocation3 + $0x8] sm:$0xff]
  %v3448 = vld [vmem:[#allocation3 + $0x10] sm:$0xff]
  %v3449 = vld [vmem:[#allocation3 + $0x18] sm:$0xff]
  %v3450 = vld [vmem:[#allocation3 + $0x20] sm:$0xff]
  %v3451 = vld [vmem:[#allocation3 + $0x28] sm:$0xff]
  %v3452 = vld [vmem:[#allocation3 + $0x30] sm:$0xff]
  %v3453 = vld [vmem:[#allocation3 + $0x38] sm:$0xff]
  %v3454 = vld [vmem:[#allocation3 + $0x40] sm:$0xff]
  %v3455 = vld [vmem:[#allocation3 + $0x48] sm:$0xff]
  %v3456 = vld [vmem:[#allocation3 + $0x50] sm:$0xff]
  %v3457 = vld [vmem:[#allocation3 + $0x58] sm:$0xff]
  %v3458 = vld [vmem:[#allocation3 + $0x60] sm:$0xff]
  %v3459 = vld [vmem:[#allocation3 + $0x68] sm:$0xff]
  %v3460 = vld [vmem:[#allocation3 + $0x70] sm:$0xff]
  %v3461 = vld [vmem:[#allocation3 + $0x78] sm:$0xff]
  %v3462 = vld [vmem:[#allocation3 + $0x80] sm:$0xff]
  %v3463 = vld [vmem:[#allocation3 + $0x88] sm:$0xff]
  %v3464 = vld [vmem:[#allocation3 + $0x90] sm:$0xff]
  %v3465 = vld [vmem:[#allocation3 + $0x98] sm:$0xff]
  %v3466 = vld [vmem:[#allocation3 + $0xa0] sm:$0xff]
  %v3467 = vld [vmem:[#allocation3 + $0xa8] sm:$0xff]
  %v3468 = vld [vmem:[#allocation3 + $0xb0] sm:$0xff]
  %v3469 = vld [vmem:[#allocation3 + $0xb8] sm:$0xff]
  %v3470 = vld [vmem:[#allocation3 + $0xc0] sm:$0xff]
  %v3471 = vld [vmem:[#allocation3 + $0xc8] sm:$0xff]
  %v3472 = vld [vmem:[#allocation3 + $0xd0] sm:$0xff]
  %v3473 = vld [vmem:[#allocation3 + $0xd8] sm:$0xff]
  %v3474 = vld [vmem:[#allocation3 + $0xe0] sm:$0xff]
  %v3475 = vld [vmem:[#allocation3 + $0xe8] sm:$0xff]
  %v3476 = vld [vmem:[#allocation3 + $0xf0] sm:$0xff]
  %v3477 = vld [vmem:[#allocation3 + $0xf8] sm:$0xff]
  %v3510 = vunpack.c.l.b16 %v3414
  %v3511 = vunpack.c.h.b16 %v3414
  %v3512 = vunpack.c.l.b16 %v3415
  %v3513 = vunpack.c.h.b16 %v3415
  %v3514 = vunpack.c.l.b16 %v3416
  %v3515 = vunpack.c.h.b16 %v3416
  %v3516 = vunpack.c.l.b16 %v3417
  %v3517 = vunpack.c.h.b16 %v3417
  %v3518 = vunpack.c.l.b16 %v3418
  %v3519 = vunpack.c.h.b16 %v3418
  %v3520 = vunpack.c.l.b16 %v3419
  %v3521 = vunpack.c.h.b16 %v3419
  %v3522 = vunpack.c.l.b16 %v3420
  %v3523 = vunpack.c.h.b16 %v3420
  %v3524 = vunpack.c.l.b16 %v3421
  %v3525 = vunpack.c.h.b16 %v3421
  %v3526 = vunpack.c.l.b16 %v3422
  %v3527 = vunpack.c.h.b16 %v3422
  %v3528 = vunpack.c.l.b16 %v3423
  %v3529 = vunpack.c.h.b16 %v3423
  %v3530 = vunpack.c.l.b16 %v3424
  %v3531 = vunpack.c.h.b16 %v3424
  %v3532 = vunpack.c.l.b16 %v3425
  %v3533 = vunpack.c.h.b16 %v3425
  %v3534 = vunpack.c.l.b16 %v3426
  %v3535 = vunpack.c.h.b16 %v3426
  %v3536 = vunpack.c.l.b16 %v3427
  %v3537 = vunpack.c.h.b16 %v3427
  %v3538 = vunpack.c.l.b16 %v3428
  %v3539 = vunpack.c.h.b16 %v3428
  %v3540 = vunpack.c.l.b16 %v3429
  %v3541 = vunpack.c.h.b16 %v3429
  %v3542 = vunpack.c.l.b16 %v3430
  %v3543 = vunpack.c.h.b16 %v3430
  %v3544 = vunpack.c.l.b16 %v3431
  %v3545 = vunpack.c.h.b16 %v3431
  %v3546 = vunpack.c.l.b16 %v3432
  %v3547 = vunpack.c.h.b16 %v3432
  %v3548 = vunpack.c.l.b16 %v3433
  %v3549 = vunpack.c.h.b16 %v3433
  %v3550 = vunpack.c.l.b16 %v3434
  %v3551 = vunpack.c.h.b16 %v3434
  %v3552 = vunpack.c.l.b16 %v3435
  %v3553 = vunpack.c.h.b16 %v3435
  %v3554 = vunpack.c.l.b16 %v3436
  %v3555 = vunpack.c.h.b16 %v3436
  %v3556 = vunpack.c.l.b16 %v3437
  %v3557 = vunpack.c.h.b16 %v3437
  %v3558 = vunpack.c.l.b16 %v3438
  %v3559 = vunpack.c.h.b16 %v3438
  %v3560 = vunpack.c.l.b16 %v3439
  %v3561 = vunpack.c.h.b16 %v3439
  %v3562 = vunpack.c.l.b16 %v3440
  %v3563 = vunpack.c.h.b16 %v3440
  %v3564 = vunpack.c.l.b16 %v3441
  %v3565 = vunpack.c.h.b16 %v3441
  %v3566 = vunpack.c.l.b16 %v3442
  %v3567 = vunpack.c.h.b16 %v3442
  %v3568 = vunpack.c.l.b16 %v3443
  %v3569 = vunpack.c.h.b16 %v3443
  %v3570 = vunpack.c.l.b16 %v3444
  %v3571 = vunpack.c.h.b16 %v3444
  %v3572 = vunpack.c.l.b16 %v3445
  %v3573 = vunpack.c.h.b16 %v3445
  %v3574 = vpack.c.b16 %v3512, %v3510
  %v3575 = vpack.c.b16 %v3513, %v3511
  %v3576 = vpack.c.b16 %v3516, %v3514
  %v3577 = vpack.c.b16 %v3517, %v3515
  %v3578 = vpack.c.b16 %v3520, %v3518
  %v3579 = vpack.c.b16 %v3521, %v3519
  %v3580 = vpack.c.b16 %v3524, %v3522
  %v3581 = vpack.c.b16 %v3525, %v3523
  %v3582 = vpack.c.b16 %v3528, %v3526
  %v3583 = vpack.c.b16 %v3529, %v3527
  %v3584 = vpack.c.b16 %v3532, %v3530
  %v3585 = vpack.c.b16 %v3533, %v3531
  %v3586 = vpack.c.b16 %v3536, %v3534
  %v3587 = vpack.c.b16 %v3537, %v3535
  %v3588 = vpack.c.b16 %v3540, %v3538
  %v3589 = vpack.c.b16 %v3541, %v3539
  %v3590 = vpack.c.b16 %v3544, %v3542
  %v3591 = vpack.c.b16 %v3545, %v3543
  %v3592 = vpack.c.b16 %v3548, %v3546
  %v3593 = vpack.c.b16 %v3549, %v3547
  %v3594 = vpack.c.b16 %v3552, %v3550
  %v3595 = vpack.c.b16 %v3553, %v3551
  %v3596 = vpack.c.b16 %v3556, %v3554
  %v3597 = vpack.c.b16 %v3557, %v3555
  %v3598 = vpack.c.b16 %v3560, %v3558
  %v3599 = vpack.c.b16 %v3561, %v3559
  %v3600 = vpack.c.b16 %v3564, %v3562
  %v3601 = vpack.c.b16 %v3565, %v3563
  %v3602 = vpack.c.b16 %v3568, %v3566
  %v3603 = vpack.c.b16 %v3569, %v3567
  %v3604 = vpack.c.b16 %v3572, %v3570
  %v3605 = vpack.c.b16 %v3573, %v3571
  %v3670 = vunpack.c.l.b16 %v3446
  %v3671 = vunpack.c.h.b16 %v3446
  %v3672 = vunpack.c.l.b16 %v3447
  %v3673 = vunpack.c.h.b16 %v3447
  %v3674 = vunpack.c.l.b16 %v3448
  %v3675 = vunpack.c.h.b16 %v3448
  %v3676 = vunpack.c.l.b16 %v3449
  %v3677 = vunpack.c.h.b16 %v3449
  %v3678 = vunpack.c.l.b16 %v3450
  %v3679 = vunpack.c.h.b16 %v3450
  %v3680 = vunpack.c.l.b16 %v3451
  %v3681 = vunpack.c.h.b16 %v3451
  %v3682 = vunpack.c.l.b16 %v3452
  %v3683 = vunpack.c.h.b16 %v3452
  %v3684 = vunpack.c.l.b16 %v3453
  %v3685 = vunpack.c.h.b16 %v3453
  %v3686 = vunpack.c.l.b16 %v3454
  %v3687 = vunpack.c.h.b16 %v3454
  %v3688 = vunpack.c.l.b16 %v3455
  %v3689 = vunpack.c.h.b16 %v3455
  %v3690 = vunpack.c.l.b16 %v3456
  %v3691 = vunpack.c.h.b16 %v3456
  %v3692 = vunpack.c.l.b16 %v3457
  %v3693 = vunpack.c.h.b16 %v3457
  %v3694 = vunpack.c.l.b16 %v3458
  %v3695 = vunpack.c.h.b16 %v3458
  %v3696 = vunpack.c.l.b16 %v3459
  %v3697 = vunpack.c.h.b16 %v3459
  %v3698 = vunpack.c.l.b16 %v3460
  %v3699 = vunpack.c.h.b16 %v3460
  %v3700 = vunpack.c.l.b16 %v3461
  %v3701 = vunpack.c.h.b16 %v3461
  %v3702 = vunpack.c.l.b16 %v3462
  %v3703 = vunpack.c.h.b16 %v3462
  %v3704 = vunpack.c.l.b16 %v3463
  %v3705 = vunpack.c.h.b16 %v3463
  %v3706 = vunpack.c.l.b16 %v3464
  %v3707 = vunpack.c.h.b16 %v3464
  %v3708 = vunpack.c.l.b16 %v3465
  %v3709 = vunpack.c.h.b16 %v3465
  %v3710 = vunpack.c.l.b16 %v3466
  %v3711 = vunpack.c.h.b16 %v3466
  %v3712 = vunpack.c.l.b16 %v3467
  %v3713 = vunpack.c.h.b16 %v3467
  %v3714 = vunpack.c.l.b16 %v3468
  %v3715 = vunpack.c.h.b16 %v3468
  %v3716 = vunpack.c.l.b16 %v3469
  %v3717 = vunpack.c.h.b16 %v3469
  %v3718 = vunpack.c.l.b16 %v3470
  %v3719 = vunpack.c.h.b16 %v3470
  %v3720 = vunpack.c.l.b16 %v3471
  %v3721 = vunpack.c.h.b16 %v3471
  %v3722 = vunpack.c.l.b16 %v3472
  %v3723 = vunpack.c.h.b16 %v3472
  %v3724 = vunpack.c.l.b16 %v3473
  %v3725 = vunpack.c.h.b16 %v3473
  %v3726 = vunpack.c.l.b16 %v3474
  %v3727 = vunpack.c.h.b16 %v3474
  %v3728 = vunpack.c.l.b16 %v3475
  %v3729 = vunpack.c.h.b16 %v3475
  %v3730 = vunpack.c.l.b16 %v3476
  %v3731 = vunpack.c.h.b16 %v3476
  %v3732 = vunpack.c.l.b16 %v3477
  %v3733 = vunpack.c.h.b16 %v3477
  %v3734 = vpack.c.b16 %v3672, %v3670
  %v3735 = vpack.c.b16 %v3673, %v3671
  %v3736 = vpack.c.b16 %v3676, %v3674
  %v3737 = vpack.c.b16 %v3677, %v3675
  %v3738 = vpack.c.b16 %v3680, %v3678
  %v3739 = vpack.c.b16 %v3681, %v3679
  %v3740 = vpack.c.b16 %v3684, %v3682
  %v3741 = vpack.c.b16 %v3685, %v3683
  %v3742 = vpack.c.b16 %v3688, %v3686
  %v3743 = vpack.c.b16 %v3689, %v3687
  %v3744 = vpack.c.b16 %v3692, %v3690
  %v3745 = vpack.c.b16 %v3693, %v3691
  %v3746 = vpack.c.b16 %v3696, %v3694
  %v3747 = vpack.c.b16 %v3697, %v3695
  %v3748 = vpack.c.b16 %v3700, %v3698
  %v3749 = vpack.c.b16 %v3701, %v3699
  %v3750 = vpack.c.b16 %v3704, %v3702
  %v3751 = vpack.c.b16 %v3705, %v3703
  %v3752 = vpack.c.b16 %v3708, %v3706
  %v3753 = vpack.c.b16 %v3709, %v3707
  %v3754 = vpack.c.b16 %v3712, %v3710
  %v3755 = vpack.c.b16 %v3713, %v3711
  %v3756 = vpack.c.b16 %v3716, %v3714
  %v3757 = vpack.c.b16 %v3717, %v3715
  %v3758 = vpack.c.b16 %v3720, %v3718
  %v3759 = vpack.c.b16 %v3721, %v3719
  %v3760 = vpack.c.b16 %v3724, %v3722
  %v3761 = vpack.c.b16 %v3725, %v3723
  %v3762 = vpack.c.b16 %v3728, %v3726
  %v3763 = vpack.c.b16 %v3729, %v3727
  %v3764 = vpack.c.b16 %v3732, %v3730
  %v3765 = vpack.c.b16 %v3733, %v3731
  %3798 = vmatprep.subr.bf16.mxu0 %v3749
  %3799 = vmatpush1.bf16.msra.mxu0 %v3748
  %3800 = vmatprep.subr.bf16.mxu0 %v3747
  %3801 = vmatpush1.bf16.msra.mxu0 %v3746
  %3802 = vmatprep.subr.bf16.mxu0 %v3745
  %3803 = vmatpush1.bf16.msra.mxu0 %v3744
  %3804 = vmatprep.subr.bf16.mxu0 %v3743
  %3805 = vmatpush1.bf16.msra.mxu0 %v3742
  %3806 = vmatprep.subr.bf16.mxu0 %v3741
  %3807 = vmatpush1.bf16.msra.mxu0 %v3740
  %3808 = vmatprep.subr.bf16.mxu0 %v3739
  %3809 = vmatpush1.bf16.msra.mxu0 %v3738
  %3810 = vmatprep.subr.bf16.mxu0 %v3737
  %3811 = vmatpush1.bf16.msra.mxu0 %v3736
  %3812 = vmatprep.subr.bf16.mxu0 %v3735
  %3813 = vmatpush1.bf16.msra.mxu0 %v3734
  %3814 = vmatprep.subr.bf16.mxu0 %v3765
  %3815 = vmatpush2.bf16.msra.mxu0 %v3764
  %3816 = vmatprep.subr.bf16.mxu0 %v3763
  %3817 = vmatpush2.bf16.msra.mxu0 %v3762
  %3818 = vmatprep.subr.bf16.mxu0 %v3761
  %3819 = vmatpush2.bf16.msra.mxu0 %v3760
  %3820 = vmatprep.subr.bf16.mxu0 %v3759
  %3821 = vmatpush2.bf16.msra.mxu0 %v3758
  %3822 = vmatprep.subr.bf16.mxu0 %v3757
  %3823 = vmatpush2.bf16.msra.mxu0 %v3756
  %3824 = vmatprep.subr.bf16.mxu0 %v3755
  %3825 = vmatpush2.bf16.msra.mxu0 %v3754
  %3826 = vmatprep.subr.bf16.mxu0 %v3753
  %3827 = vmatpush2.bf16.msra.mxu0 %v3752
  %3828 = vmatprep.subr.bf16.mxu0 %v3751
  %3829 = vmatpush2.bf16.msra.mxu0 %v3750
  %3830 = vmatprep.mubr.bf16.mxu0 %v3575
  %3831 = vmatmul.mubr.bf16.gmra.mxu0 %v3574
  %v3832 = vpop.f32.mrf.mxu0
  %v3833 = vadd.f32 0.0, %v3832
  %v3834 = vpop.f32.mrf.mxu0
  %v3835 = vadd.f32 0.0, %v3834
  %v3836 = vpop.f32.mrf.mxu0
  %v3837 = vadd.f32 0.0, %v3836
  %v3838 = vpop.f32.mrf.mxu0
  %v3839 = vadd.f32 0.0, %v3838
  %3840 = vmatprep.mubr.bf16.mxu0 %v3577
  %3841 = vmatmul.mubr.bf16.gmra.mxu0 %v3576
  %v3842 = vpop.f32.mrf.mxu0
  %v3843 = vadd.f32 0.0, %v3842
  %v3844 = vpop.f32.mrf.mxu0
  %v3845 = vadd.f32 0.0, %v3844
  %v3846 = vpop.f32.mrf.mxu0
  %v3847 = vadd.f32 0.0, %v3846
  %v3848 = vpop.f32.mrf.mxu0
  %v3849 = vadd.f32 0.0, %v3848
  %3850 = vmatprep.mubr.bf16.mxu0 %v3579
  %3851 = vmatmul.mubr.bf16.gmra.mxu0 %v3578
  %v3852 = vpop.f32.mrf.mxu0
  %v3853 = vadd.f32 0.0, %v3852
  %v3854 = vpop.f32.mrf.mxu0
  %v3855 = vadd.f32 0.0, %v3854
  %v3856 = vpop.f32.mrf.mxu0
  %v3857 = vadd.f32 0.0, %v3856
  %v3858 = vpop.f32.mrf.mxu0
  %v3859 = vadd.f32 0.0, %v3858
  %3860 = vmatprep.mubr.bf16.mxu0 %v3581
  %3861 = vmatmul.mubr.bf16.gmra.mxu0 %v3580
  %v3862 = vpop.f32.mrf.mxu0
  %v3863 = vadd.f32 0.0, %v3862
  %v3864 = vpop.f32.mrf.mxu0
  %v3865 = vadd.f32 0.0, %v3864
  %v3866 = vpop.f32.mrf.mxu0
  %v3867 = vadd.f32 0.0, %v3866
  %v3868 = vpop.f32.mrf.mxu0
  %v3869 = vadd.f32 0.0, %v3868
  %3870 = vmatprep.mubr.bf16.mxu0 %v3583
  %3871 = vmatmul.mubr.bf16.gmra.mxu0 %v3582
  %v3872 = vpop.f32.mrf.mxu0
  %v3873 = vadd.f32 0.0, %v3872
  %v3874 = vpop.f32.mrf.mxu0
  %v3875 = vadd.f32 0.0, %v3874
  %v3876 = vpop.f32.mrf.mxu0
  %v3877 = vadd.f32 0.0, %v3876
  %v3878 = vpop.f32.mrf.mxu0
  %v3879 = vadd.f32 0.0, %v3878
  %3880 = vmatprep.mubr.bf16.mxu0 %v3585
  %3881 = vmatmul.mubr.bf16.gmra.mxu0 %v3584
  %v3882 = vpop.f32.mrf.mxu0
  %v3883 = vadd.f32 0.0, %v3882
  %v3884 = vpop.f32.mrf.mxu0
  %v3885 = vadd.f32 0.0, %v3884
  %v3886 = vpop.f32.mrf.mxu0
  %v3887 = vadd.f32 0.0, %v3886
  %v3888 = vpop.f32.mrf.mxu0
  %v3889 = vadd.f32 0.0, %v3888
  %3890 = vmatprep.mubr.bf16.mxu0 %v3587
  %3891 = vmatmul.mubr.bf16.gmra.mxu0 %v3586
  %v3892 = vpop.f32.mrf.mxu0
  %v3893 = vadd.f32 0.0, %v3892
  %v3894 = vpop.f32.mrf.mxu0
  %v3895 = vadd.f32 0.0, %v3894
  %v3896 = vpop.f32.mrf.mxu0
  %v3897 = vadd.f32 0.0, %v3896
  %v3898 = vpop.f32.mrf.mxu0
  %v3899 = vadd.f32 0.0, %v3898
  %3900 = vmatprep.mubr.bf16.mxu0 %v3589
  %3901 = vmatmul.mubr.bf16.gmra.mxu0 %v3588
  %v3902 = vpop.f32.mrf.mxu0
  %v3903 = vadd.f32 0.0, %v3902
  %v3904 = vpop.f32.mrf.mxu0
  %v3905 = vadd.f32 0.0, %v3904
  %v3906 = vpop.f32.mrf.mxu0
  %v3907 = vadd.f32 0.0, %v3906
  %v3908 = vpop.f32.mrf.mxu0
  %v3909 = vadd.f32 0.0, %v3908
  %3910 = vmatprep.mubr.bf16.mxu0 %v3591
  %3911 = vmatmul.mubr.bf16.gmra.mxu0 %v3590
  %v3912 = vpop.f32.mrf.mxu0
  %v3913 = vadd.f32 0.0, %v3912
  %v3914 = vpop.f32.mrf.mxu0
  %v3915 = vadd.f32 0.0, %v3914
  %v3916 = vpop.f32.mrf.mxu0
  %v3917 = vadd.f32 0.0, %v3916
  %v3918 = vpop.f32.mrf.mxu0
  %v3919 = vadd.f32 0.0, %v3918
  %3920 = vmatprep.mubr.bf16.mxu0 %v3593
  %3921 = vmatmul.mubr.bf16.gmra.mxu0 %v3592
  %v3922 = vpop.f32.mrf.mxu0
  %v3923 = vadd.f32 0.0, %v3922
  %v3924 = vpop.f32.mrf.mxu0
  %v3925 = vadd.f32 0.0, %v3924
  %v3926 = vpop.f32.mrf.mxu0
  %v3927 = vadd.f32 0.0, %v3926
  %v3928 = vpop.f32.mrf.mxu0
  %v3929 = vadd.f32 0.0, %v3928
  %3930 = vmatprep.mubr.bf16.mxu0 %v3595
  %3931 = vmatmul.mubr.bf16.gmra.mxu0 %v3594
  %v3932 = vpop.f32.mrf.mxu0
  %v3933 = vadd.f32 0.0, %v3932
  %v3934 = vpop.f32.mrf.mxu0
  %v3935 = vadd.f32 0.0, %v3934
  %v3936 = vpop.f32.mrf.mxu0
  %v3937 = vadd.f32 0.0, %v3936
  %v3938 = vpop.f32.mrf.mxu0
  %v3939 = vadd.f32 0.0, %v3938
  %3940 = vmatprep.mubr.bf16.mxu0 %v3597
  %3941 = vmatmul.mubr.bf16.gmra.mxu0 %v3596
  %v3942 = vpop.f32.mrf.mxu0
  %v3943 = vadd.f32 0.0, %v3942
  %v3944 = vpop.f32.mrf.mxu0
  %v3945 = vadd.f32 0.0, %v3944
  %v3946 = vpop.f32.mrf.mxu0
  %v3947 = vadd.f32 0.0, %v3946
  %v3948 = vpop.f32.mrf.mxu0
  %v3949 = vadd.f32 0.0, %v3948
  %3950 = vmatprep.mubr.bf16.mxu0 %v3599
  %3951 = vmatmul.mubr.bf16.gmra.mxu0 %v3598
  %v3952 = vpop.f32.mrf.mxu0
  %v3953 = vadd.f32 0.0, %v3952
  %v3954 = vpop.f32.mrf.mxu0
  %v3955 = vadd.f32 0.0, %v3954
  %v3956 = vpop.f32.mrf.mxu0
  %v3957 = vadd.f32 0.0, %v3956
  %v3958 = vpop.f32.mrf.mxu0
  %v3959 = vadd.f32 0.0, %v3958
  %3960 = vmatprep.mubr.bf16.mxu0 %v3601
  %3961 = vmatmul.mubr.bf16.gmra.mxu0 %v3600
  %v3962 = vpop.f32.mrf.mxu0
  %v3963 = vadd.f32 0.0, %v3962
  %v3964 = vpop.f32.mrf.mxu0
  %v3965 = vadd.f32 0.0, %v3964
  %v3966 = vpop.f32.mrf.mxu0
  %v3967 = vadd.f32 0.0, %v3966
  %v3968 = vpop.f32.mrf.mxu0
  %v3969 = vadd.f32 0.0, %v3968
  %3970 = vmatprep.mubr.bf16.mxu0 %v3603
  %3971 = vmatmul.mubr.bf16.gmra.mxu0 %v3602
  %v3972 = vpop.f32.mrf.mxu0
  %v3973 = vadd.f32 0.0, %v3972
  %v3974 = vpop.f32.mrf.mxu0
  %v3975 = vadd.f32 0.0, %v3974
  %v3976 = vpop.f32.mrf.mxu0
  %v3977 = vadd.f32 0.0, %v3976
  %v3978 = vpop.f32.mrf.mxu0
  %v3979 = vadd.f32 0.0, %v3978
  %3980 = vmatprep.mubr.bf16.mxu0 %v3605
  %3981 = vmatmul.mubr.bf16.gmra.mxu0 %v3604
  %v3982 = vpop.f32.mrf.mxu0
  %v3983 = vadd.f32 0.0, %v3982
  %v3984 = vpop.f32.mrf.mxu0
  %v3985 = vadd.f32 0.0, %v3984
  %v3986 = vpop.f32.mrf.mxu0
  %v3987 = vadd.f32 0.0, %v3986
  %v3988 = vpop.f32.mrf.mxu0
  %v3989 = vadd.f32 0.0, %v3988
  %3990 = vdwg.mxu0
  %v3991 = vpack.c.bf16 %v3837, %v3833
  %v3992 = vpack.c.bf16 %v3839, %v3835
  %v3993 = vpack.c.bf16 %v3847, %v3843
  %v3994 = vpack.c.bf16 %v3849, %v3845
  %v3995 = vpack.c.bf16 %v3857, %v3853
  %v3996 = vpack.c.bf16 %v3859, %v3855
  %v3997 = vpack.c.bf16 %v3867, %v3863
  %v3998 = vpack.c.bf16 %v3869, %v3865
  %v3999 = vpack.c.bf16 %v3877, %v3873
  %v4000 = vpack.c.bf16 %v3879, %v3875
  %v4001 = vpack.c.bf16 %v3887, %v3883
  %v4002 = vpack.c.bf16 %v3889, %v3885
  %v4003 = vpack.c.bf16 %v3897, %v3893
  %v4004 = vpack.c.bf16 %v3899, %v3895
  %v4005 = vpack.c.bf16 %v3907, %v3903
  %v4006 = vpack.c.bf16 %v3909, %v3905
  %v4007 = vpack.c.bf16 %v3917, %v3913
  %v4008 = vpack.c.bf16 %v3919, %v3915
  %v4009 = vpack.c.bf16 %v3927, %v3923
  %v4010 = vpack.c.bf16 %v3929, %v3925
  %v4011 = vpack.c.bf16 %v3937, %v3933
  %v4012 = vpack.c.bf16 %v3939, %v3935
  %v4013 = vpack.c.bf16 %v3947, %v3943
  %v4014 = vpack.c.bf16 %v3949, %v3945
  %v4015 = vpack.c.bf16 %v3957, %v3953
  %v4016 = vpack.c.bf16 %v3959, %v3955
  %v4017 = vpack.c.bf16 %v3967, %v3963
  %v4018 = vpack.c.bf16 %v3969, %v3965
  %v4019 = vpack.c.bf16 %v3977, %v3973
  %v4020 = vpack.c.bf16 %v3979, %v3975
  %v4021 = vpack.c.bf16 %v3987, %v3983
  %v4022 = vpack.c.bf16 %v3989, %v3985
  %v4023 = vld [vmem:[%s10] sm:$0xf]
  %v4024 = vld [vmem:[%s10 + $0x4] sm:$0xf]
  %v4025 = vld [vmem:[%s10 + $0x8] sm:$0xf]
  %v4026 = vld [vmem:[%s10 + $0xc] sm:$0xf]
  %v4027 = vld [vmem:[%s10 + $0x10] sm:$0xf]
  %v4028 = vld [vmem:[%s10 + $0x14] sm:$0xf]
  %v4029 = vld [vmem:[%s10 + $0x18] sm:$0xf]
  %v4030 = vld [vmem:[%s10 + $0x1c] sm:$0xf]
  %v4031 = vld [vmem:[%s10 + $0x20] sm:$0xf]
  %v4032 = vld [vmem:[%s10 + $0x24] sm:$0xf]
  %v4033 = vld [vmem:[%s10 + $0x28] sm:$0xf]
  %v4034 = vld [vmem:[%s10 + $0x2c] sm:$0xf]
  %v4035 = vld [vmem:[%s10 + $0x30] sm:$0xf]
  %v4036 = vld [vmem:[%s10 + $0x34] sm:$0xf]
  %v4037 = vld [vmem:[%s10 + $0x38] sm:$0xf]
  %v4038 = vld [vmem:[%s10 + $0x3c] sm:$0xf]
  %v4039 = vld [vmem:[%s10 + $0x40] sm:$0xf]
  %v4040 = vld [vmem:[%s10 + $0x44] sm:$0xf]
  %v4041 = vld [vmem:[%s10 + $0x48] sm:$0xf]
  %v4042 = vld [vmem:[%s10 + $0x4c] sm:$0xf]
  %v4043 = vld [vmem:[%s10 + $0x50] sm:$0xf]
  %v4044 = vld [vmem:[%s10 + $0x54] sm:$0xf]
  %v4045 = vld [vmem:[%s10 + $0x58] sm:$0xf]
  %v4046 = vld [vmem:[%s10 + $0x5c] sm:$0xf]
  %v4047 = vld [vmem:[%s10 + $0x60] sm:$0xf]
  %v4048 = vld [vmem:[%s10 + $0x64] sm:$0xf]
  %v4049 = vld [vmem:[%s10 + $0x68] sm:$0xf]
  %v4050 = vld [vmem:[%s10 + $0x6c] sm:$0xf]
  %v4051 = vld [vmem:[%s10 + $0x70] sm:$0xf]
  %v4052 = vld [vmem:[%s10 + $0x74] sm:$0xf]
  %v4053 = vld [vmem:[%s10 + $0x78] sm:$0xf]
  %v4054 = vld [vmem:[%s10 + $0x7c] sm:$0xf]
  %v4055 = vld [vmem:[%s11] sm:$0x1]
  %v4057 = vlaneseq
  %v4058 = vshrl.u32 %v4057, 7
  %v4059 = vsub.s32 0, %v4058
  %v4060 = vrot.slane %v4055, %v4059
  %v4094 = vunpack.c.l.b16 %v4023
  %v4095 = vunpack.c.l.b16 %v4024
  %v4096 = vunpack.c.l.b16 %v4025
  %v4097 = vunpack.c.l.b16 %v4026
  %v4098 = vunpack.c.l.b16 %v4027
  %v4099 = vunpack.c.l.b16 %v4028
  %v4100 = vunpack.c.l.b16 %v4029
  %v4101 = vunpack.c.l.b16 %v4030
  %v4102 = vunpack.c.l.b16 %v4031
  %v4103 = vunpack.c.l.b16 %v4032
  %v4104 = vunpack.c.l.b16 %v4033
  %v4105 = vunpack.c.l.b16 %v4034
  %v4106 = vunpack.c.l.b16 %v4035
  %v4107 = vunpack.c.l.b16 %v4036
  %v4108 = vunpack.c.l.b16 %v4037
  %v4109 = vunpack.c.l.b16 %v4038
  %v4110 = vunpack.c.l.b16 %v4039
  %v4111 = vunpack.c.l.b16 %v4040
  %v4112 = vunpack.c.l.b16 %v4041
  %v4113 = vunpack.c.l.b16 %v4042
  %v4114 = vunpack.c.l.b16 %v4043
  %v4115 = vunpack.c.l.b16 %v4044
  %v4116 = vunpack.c.l.b16 %v4045
  %v4117 = vunpack.c.l.b16 %v4046
  %v4118 = vunpack.c.l.b16 %v4047
  %v4119 = vunpack.c.l.b16 %v4048
  %v4120 = vunpack.c.l.b16 %v4049
  %v4121 = vunpack.c.l.b16 %v4050
  %v4122 = vunpack.c.l.b16 %v4051
  %v4123 = vunpack.c.l.b16 %v4052
  %v4124 = vunpack.c.l.b16 %v4053
  %v4125 = vunpack.c.l.b16 %v4054
  %v4126 = vpack.c.b16 %v4095, %v4094
  %v4127 = vpack.c.b16 %v4097, %v4096
  %v4128 = vpack.c.b16 %v4099, %v4098
  %v4129 = vpack.c.b16 %v4101, %v4100
  %v4130 = vpack.c.b16 %v4103, %v4102
  %v4131 = vpack.c.b16 %v4105, %v4104
  %v4132 = vpack.c.b16 %v4107, %v4106
  %v4133 = vpack.c.b16 %v4109, %v4108
  %v4134 = vpack.c.b16 %v4111, %v4110
  %v4135 = vpack.c.b16 %v4113, %v4112
  %v4136 = vpack.c.b16 %v4115, %v4114
  %v4137 = vpack.c.b16 %v4117, %v4116
  %v4138 = vpack.c.b16 %v4119, %v4118
  %v4139 = vpack.c.b16 %v4121, %v4120
  %v4140 = vpack.c.b16 %v4123, %v4122
  %v4141 = vpack.c.b16 %v4125, %v4124
  %4158 = vmatprep.subr.bf16.mxu0 0
  %4159 = vmatpush1.bf16.msra.mxu0 %v4133
  %4160 = vmatprep.subr.bf16.mxu0 0
  %4161 = vmatpush1.bf16.msra.mxu0 %v4132
  %4162 = vmatprep.subr.bf16.mxu0 0
  %4163 = vmatpush1.bf16.msra.mxu0 %v4131
  %4164 = vmatprep.subr.bf16.mxu0 0
  %4165 = vmatpush1.bf16.msra.mxu0 %v4130
  %4166 = vmatprep.subr.bf16.mxu0 0
  %4167 = vmatpush1.bf16.msra.mxu0 %v4129
  %4168 = vmatprep.subr.bf16.mxu0 0
  %4169 = vmatpush1.bf16.msra.mxu0 %v4128
  %4170 = vmatprep.subr.bf16.mxu0 0
  %4171 = vmatpush1.bf16.msra.mxu0 %v4127
  %4172 = vmatprep.subr.bf16.mxu0 0
  %4173 = vmatpush1.bf16.msra.mxu0 %v4126
  %4174 = vmatprep.subr.bf16.mxu0 0
  %4175 = vmatpush2.bf16.msra.mxu0 %v4141
  %4176 = vmatprep.subr.bf16.mxu0 0
  %4177 = vmatpush2.bf16.msra.mxu0 %v4140
  %4178 = vmatprep.subr.bf16.mxu0 0
  %4179 = vmatpush2.bf16.msra.mxu0 %v4139
  %4180 = vmatprep.subr.bf16.mxu0 0
  %4181 = vmatpush2.bf16.msra.mxu0 %v4138
  %4182 = vmatprep.subr.bf16.mxu0 0
  %4183 = vmatpush2.bf16.msra.mxu0 %v4137
  %4184 = vmatprep.subr.bf16.mxu0 0
  %4185 = vmatpush2.bf16.msra.mxu0 %v4136
  %4186 = vmatprep.subr.bf16.mxu0 0
  %4187 = vmatpush2.bf16.msra.mxu0 %v4135
  %4188 = vmatprep.subr.bf16.mxu0 0
  %4189 = vmatpush2.bf16.msra.mxu0 %v4134
  %4190 = vmatprep.mubr.bf16.mxu0 %v3992
  %4191 = vmatmul.mubr.bf16.gmra.mxu0 %v3991
  %v4192 = vpop.f32.mrf.mxu0
  %v4193 = vadd.f32 %v4060, %v4192
  %v4194 = vpop.f32.mrf.mxu0
  %v4195 = vpop.f32.mrf.mxu0
  %v4196 = vadd.f32 %v4060, %v4195
  %v4197 = vpop.f32.mrf.mxu0
  %4198 = vmatprep.mubr.bf16.mxu0 %v3994
  %4199 = vmatmul.mubr.bf16.gmra.mxu0 %v3993
  %v4200 = vpop.f32.mrf.mxu0
  %v4201 = vadd.f32 %v4060, %v4200
  %v4202 = vpop.f32.mrf.mxu0
  %v4203 = vpop.f32.mrf.mxu0
  %v4204 = vadd.f32 %v4060, %v4203
  %v4205 = vpop.f32.mrf.mxu0
  %4206 = vmatprep.mubr.bf16.mxu0 %v3996
  %4207 = vmatmul.mubr.bf16.gmra.mxu0 %v3995
  %v4208 = vpop.f32.mrf.mxu0
  %v4209 = vadd.f32 %v4060, %v4208
  %v4210 = vpop.f32.mrf.mxu0
  %v4211 = vpop.f32.mrf.mxu0
  %v4212 = vadd.f32 %v4060, %v4211
  %v4213 = vpop.f32.mrf.mxu0
  %4214 = vmatprep.mubr.bf16.mxu0 %v3998
  %4215 = vmatmul.mubr.bf16.gmra.mxu0 %v3997
  %v4216 = vpop.f32.mrf.mxu0
  %v4217 = vadd.f32 %v4060, %v4216
  %v4218 = vpop.f32.mrf.mxu0
  %v4219 = vpop.f32.mrf.mxu0
  %v4220 = vadd.f32 %v4060, %v4219
  %v4221 = vpop.f32.mrf.mxu0
  %4222 = vmatprep.mubr.bf16.mxu0 %v4000
  %4223 = vmatmul.mubr.bf16.gmra.mxu0 %v3999
  %v4224 = vpop.f32.mrf.mxu0
  %v4225 = vadd.f32 %v4060, %v4224
  %v4226 = vpop.f32.mrf.mxu0
  %v4227 = vpop.f32.mrf.mxu0
  %v4228 = vadd.f32 %v4060, %v4227
  %v4229 = vpop.f32.mrf.mxu0
  %4230 = vmatprep.mubr.bf16.mxu0 %v4002
  %4231 = vmatmul.mubr.bf16.gmra.mxu0 %v4001
  %v4232 = vpop.f32.mrf.mxu0
  %v4233 = vadd.f32 %v4060, %v4232
  %v4234 = vpop.f32.mrf.mxu0
  %v4235 = vpop.f32.mrf.mxu0
  %v4236 = vadd.f32 %v4060, %v4235
  %v4237 = vpop.f32.mrf.mxu0
  %4238 = vmatprep.mubr.bf16.mxu0 %v4004
  %4239 = vmatmul.mubr.bf16.gmra.mxu0 %v4003
  %v4240 = vpop.f32.mrf.mxu0
  %v4241 = vadd.f32 %v4060, %v4240
  %v4242 = vpop.f32.mrf.mxu0
  %v4243 = vpop.f32.mrf.mxu0
  %v4244 = vadd.f32 %v4060, %v4243
  %v4245 = vpop.f32.mrf.mxu0
  %4246 = vmatprep.mubr.bf16.mxu0 %v4006
  %4247 = vmatmul.mubr.bf16.gmra.mxu0 %v4005
  %v4248 = vpop.f32.mrf.mxu0
  %v4249 = vadd.f32 %v4060, %v4248
  %v4250 = vpop.f32.mrf.mxu0
  %v4251 = vpop.f32.mrf.mxu0
  %v4252 = vadd.f32 %v4060, %v4251
  %v4253 = vpop.f32.mrf.mxu0
  %4254 = vmatprep.mubr.bf16.mxu0 %v4008
  %4255 = vmatmul.mubr.bf16.gmra.mxu0 %v4007
  %v4256 = vpop.f32.mrf.mxu0
  %v4257 = vadd.f32 %v4060, %v4256
  %v4258 = vpop.f32.mrf.mxu0
  %v4259 = vpop.f32.mrf.mxu0
  %v4260 = vadd.f32 %v4060, %v4259
  %v4261 = vpop.f32.mrf.mxu0
  %4262 = vmatprep.mubr.bf16.mxu0 %v4010
  %4263 = vmatmul.mubr.bf16.gmra.mxu0 %v4009
  %v4264 = vpop.f32.mrf.mxu0
  %v4265 = vadd.f32 %v4060, %v4264
  %v4266 = vpop.f32.mrf.mxu0
  %v4267 = vpop.f32.mrf.mxu0
  %v4268 = vadd.f32 %v4060, %v4267
  %v4269 = vpop.f32.mrf.mxu0
  %4270 = vmatprep.mubr.bf16.mxu0 %v4012
  %4271 = vmatmul.mubr.bf16.gmra.mxu0 %v4011
  %v4272 = vpop.f32.mrf.mxu0
  %v4273 = vadd.f32 %v4060, %v4272
  %v4274 = vpop.f32.mrf.mxu0
  %v4275 = vpop.f32.mrf.mxu0
  %v4276 = vadd.f32 %v4060, %v4275
  %v4277 = vpop.f32.mrf.mxu0
  %4278 = vmatprep.mubr.bf16.mxu0 %v4014
  %4279 = vmatmul.mubr.bf16.gmra.mxu0 %v4013
  %v4280 = vpop.f32.mrf.mxu0
  %v4281 = vadd.f32 %v4060, %v4280
  %v4282 = vpop.f32.mrf.mxu0
  %v4283 = vpop.f32.mrf.mxu0
  %v4284 = vadd.f32 %v4060, %v4283
  %v4285 = vpop.f32.mrf.mxu0
  %4286 = vmatprep.mubr.bf16.mxu0 %v4016
  %4287 = vmatmul.mubr.bf16.gmra.mxu0 %v4015
  %v4288 = vpop.f32.mrf.mxu0
  %v4289 = vadd.f32 %v4060, %v4288
  %v4290 = vpop.f32.mrf.mxu0
  %v4291 = vpop.f32.mrf.mxu0
  %v4292 = vadd.f32 %v4060, %v4291
  %v4293 = vpop.f32.mrf.mxu0
  %4294 = vmatprep.mubr.bf16.mxu0 %v4018
  %4295 = vmatmul.mubr.bf16.gmra.mxu0 %v4017
  %v4296 = vpop.f32.mrf.mxu0
  %v4297 = vadd.f32 %v4060, %v4296
  %v4298 = vpop.f32.mrf.mxu0
  %v4299 = vpop.f32.mrf.mxu0
  %v4300 = vadd.f32 %v4060, %v4299
  %v4301 = vpop.f32.mrf.mxu0
  %4302 = vmatprep.mubr.bf16.mxu0 %v4020
  %4303 = vmatmul.mubr.bf16.gmra.mxu0 %v4019
  %v4304 = vpop.f32.mrf.mxu0
  %v4305 = vadd.f32 %v4060, %v4304
  %v4306 = vpop.f32.mrf.mxu0
  %v4307 = vpop.f32.mrf.mxu0
  %v4308 = vadd.f32 %v4060, %v4307
  %v4309 = vpop.f32.mrf.mxu0
  %4310 = vmatprep.mubr.bf16.mxu0 %v4022
  %4311 = vmatmul.mubr.bf16.gmra.mxu0 %v4021
  %v4312 = vpop.f32.mrf.mxu0
  %v4313 = vadd.f32 %v4060, %v4312
  %v4314 = vpop.f32.mrf.mxu0
  %v4315 = vpop.f32.mrf.mxu0
  %v4316 = vadd.f32 %v4060, %v4315
  %v4317 = vpop.f32.mrf.mxu0
  %4318 = vdwg.mxu0
  %v4319 = vmax.f32 %v4193, 0.0
  %v4320 = vmax.f32 %v4196, 0.0
  %v4321 = vmax.f32 %v4201, 0.0
  %v4322 = vmax.f32 %v4204, 0.0
  %v4323 = vmax.f32 %v4209, 0.0
  %v4324 = vmax.f32 %v4212, 0.0
  %v4325 = vmax.f32 %v4217, 0.0
  %v4326 = vmax.f32 %v4220, 0.0
  %v4327 = vmax.f32 %v4225, 0.0
  %v4328 = vmax.f32 %v4228, 0.0
  %v4329 = vmax.f32 %v4233, 0.0
  %v4330 = vmax.f32 %v4236, 0.0
  %v4331 = vmax.f32 %v4241, 0.0
  %v4332 = vmax.f32 %v4244, 0.0
  %v4333 = vmax.f32 %v4249, 0.0
  %v4334 = vmax.f32 %v4252, 0.0
  %v4335 = vmax.f32 %v4257, 0.0
  %v4336 = vmax.f32 %v4260, 0.0
  %v4337 = vmax.f32 %v4265, 0.0
  %v4338 = vmax.f32 %v4268, 0.0
  %v4339 = vmax.f32 %v4273, 0.0
  %v4340 = vmax.f32 %v4276, 0.0
  %v4341 = vmax.f32 %v4281, 0.0
  %v4342 = vmax.f32 %v4284, 0.0
  %v4343 = vmax.f32 %v4289, 0.0
  %v4344 = vmax.f32 %v4292, 0.0
  %v4345 = vmax.f32 %v4297, 0.0
  %v4346 = vmax.f32 %v4300, 0.0
  %v4347 = vmax.f32 %v4305, 0.0
  %v4348 = vmax.f32 %v4308, 0.0
  %v4349 = vmax.f32 %v4313, 0.0
  %v4350 = vmax.f32 %v4316, 0.0
  %v4351 = vpack.c.bf16 %v4320, %v4319
  %v4352 = vpack.c.bf16 %v4322, %v4321
  %v4353 = vpack.c.bf16 %v4324, %v4323
  %v4354 = vpack.c.bf16 %v4326, %v4325
  %v4355 = vpack.c.bf16 %v4328, %v4327
  %v4356 = vpack.c.bf16 %v4330, %v4329
  %v4357 = vpack.c.bf16 %v4332, %v4331
  %v4358 = vpack.c.bf16 %v4334, %v4333
  %v4359 = vpack.c.bf16 %v4336, %v4335
  %v4360 = vpack.c.bf16 %v4338, %v4337
  %v4361 = vpack.c.bf16 %v4340, %v4339
  %v4362 = vpack.c.bf16 %v4342, %v4341
  %v4363 = vpack.c.bf16 %v4344, %v4343
  %v4364 = vpack.c.bf16 %v4346, %v4345
  %v4365 = vpack.c.bf16 %v4348, %v4347
  %v4366 = vpack.c.bf16 %v4350, %v4349
  %v4367 = vld [vmem:[%s12] sm:$0xf]
  %v4368 = vld [vmem:[%s12 + $0x4] sm:$0xf]
  %v4369 = vld [vmem:[%s12 + $0x8] sm:$0xf]
  %v4370 = vld [vmem:[%s12 + $0xc] sm:$0xf]
  %v4371 = vld [vmem:[%s12 + $0x10] sm:$0xf]
  %v4372 = vld [vmem:[%s12 + $0x14] sm:$0xf]
  %v4373 = vld [vmem:[%s12 + $0x18] sm:$0xf]
  %v4374 = vld [vmem:[%s12 + $0x1c] sm:$0xf]
  %v4375 = vld [vmem:[%s12 + $0x20] sm:$0xf]
  %v4376 = vld [vmem:[%s12 + $0x24] sm:$0xf]
  %v4377 = vld [vmem:[%s12 + $0x28] sm:$0xf]
  %v4378 = vld [vmem:[%s12 + $0x2c] sm:$0xf]
  %v4379 = vld [vmem:[%s12 + $0x30] sm:$0xf]
  %v4380 = vld [vmem:[%s12 + $0x34] sm:$0xf]
  %v4381 = vld [vmem:[%s12 + $0x38] sm:$0xf]
  %v4382 = vld [vmem:[%s12 + $0x3c] sm:$0xf]
  %v4383 = vld [vmem:[%s13] sm:$0x1]
  %v4385 = vlaneseq
  %v4386 = vshrl.u32 %v4385, 7
  %v4387 = vsub.s32 0, %v4386
  %v4388 = vrot.slane %v4383, %v4387
  %v4406 = vunpack.c.l.b16 %v4367
  %v4407 = vunpack.c.l.b16 %v4368
  %v4408 = vunpack.c.l.b16 %v4369
  %v4409 = vunpack.c.l.b16 %v4370
  %v4410 = vunpack.c.l.b16 %v4371
  %v4411 = vunpack.c.l.b16 %v4372
  %v4412 = vunpack.c.l.b16 %v4373
  %v4413 = vunpack.c.l.b16 %v4374
  %v4414 = vunpack.c.l.b16 %v4375
  %v4415 = vunpack.c.l.b16 %v4376
  %v4416 = vunpack.c.l.b16 %v4377
  %v4417 = vunpack.c.l.b16 %v4378
  %v4418 = vunpack.c.l.b16 %v4379
  %v4419 = vunpack.c.l.b16 %v4380
  %v4420 = vunpack.c.l.b16 %v4381
  %v4421 = vunpack.c.l.b16 %v4382
  %v4422 = vpack.c.b16 %v4407, %v4406
  %v4423 = vpack.c.b16 %v4409, %v4408
  %v4424 = vpack.c.b16 %v4411, %v4410
  %v4425 = vpack.c.b16 %v4413, %v4412
  %v4426 = vpack.c.b16 %v4415, %v4414
  %v4427 = vpack.c.b16 %v4417, %v4416
  %v4428 = vpack.c.b16 %v4419, %v4418
  %v4429 = vpack.c.b16 %v4421, %v4420
  %4438 = vmatprep.subr.bf16.mxu0 0
  %4439 = vmatpush1.bf16.msra.mxu0 %v4429
  %4440 = vmatprep.subr.bf16.mxu0 0
  %4441 = vmatpush1.bf16.msra.mxu0 %v4428
  %4442 = vmatprep.subr.bf16.mxu0 0
  %4443 = vmatpush1.bf16.msra.mxu0 %v4427
  %4444 = vmatprep.subr.bf16.mxu0 0
  %4445 = vmatpush1.bf16.msra.mxu0 %v4426
  %4446 = vmatprep.subr.bf16.mxu0 0
  %4447 = vmatpush1.bf16.msra.mxu0 %v4425
  %4448 = vmatprep.subr.bf16.mxu0 0
  %4449 = vmatpush1.bf16.msra.mxu0 %v4424
  %4450 = vmatprep.subr.bf16.mxu0 0
  %4451 = vmatpush1.bf16.msra.mxu0 %v4423
  %4452 = vmatprep.subr.bf16.mxu0 0
  %4453 = vmatpush1.bf16.msra.mxu0 %v4422
  %4454 = vmatprep.subr.bf16.mxu0 0
  %4455 = vmatpush2.bf16.msra.mxu0 0
  %4456 = vmatprep.subr.bf16.mxu0 0
  %4457 = vmatpush2.bf16.msra.mxu0 0
  %4458 = vmatprep.subr.bf16.mxu0 0
  %4459 = vmatpush2.bf16.msra.mxu0 0
  %4460 = vmatprep.subr.bf16.mxu0 0
  %4461 = vmatpush2.bf16.msra.mxu0 0
  %4462 = vmatprep.subr.bf16.mxu0 0
  %4463 = vmatpush2.bf16.msra.mxu0 0
  %4464 = vmatprep.subr.bf16.mxu0 0
  %4465 = vmatpush2.bf16.msra.mxu0 0
  %4466 = vmatprep.subr.bf16.mxu0 0
  %4467 = vmatpush2.bf16.msra.mxu0 0
  %4468 = vmatprep.subr.bf16.mxu0 0
  %4469 = vmatpush2.bf16.msra.mxu0 0
  %4470 = vmatprep.mubr.bf16.mxu0 0
  %4471 = vmatmul.mubr.bf16.gmra.mxu0 %v4351
  %v4472 = vpop.f32.mrf.mxu0
  %v4473 = vadd.f32 %v4388, %v4472
  %v4474 = vpop.f32.mrf.mxu0
  %v4475 = vpop.f32.mrf.mxu0
  %v4476 = vadd.f32 %v4388, %v4475
  %v4477 = vpop.f32.mrf.mxu0
  %4478 = vmatprep.mubr.bf16.mxu0 0
  %4479 = vmatmul.mubr.bf16.gmra.mxu0 %v4352
  %v4480 = vpop.f32.mrf.mxu0
  %v4481 = vadd.f32 %v4388, %v4480
  %v4482 = vpop.f32.mrf.mxu0
  %v4483 = vpop.f32.mrf.mxu0
  %v4484 = vadd.f32 %v4388, %v4483
  %v4485 = vpop.f32.mrf.mxu0
  %4486 = vmatprep.mubr.bf16.mxu0 0
  %4487 = vmatmul.mubr.bf16.gmra.mxu0 %v4353
  %v4488 = vpop.f32.mrf.mxu0
  %v4489 = vadd.f32 %v4388, %v4488
  %v4490 = vpop.f32.mrf.mxu0
  %v4491 = vpop.f32.mrf.mxu0
  %v4492 = vadd.f32 %v4388, %v4491
  %v4493 = vpop.f32.mrf.mxu0
  %4494 = vmatprep.mubr.bf16.mxu0 0
  %4495 = vmatmul.mubr.bf16.gmra.mxu0 %v4354
  %v4496 = vpop.f32.mrf.mxu0
  %v4497 = vadd.f32 %v4388, %v4496
  %v4498 = vpop.f32.mrf.mxu0
  %v4499 = vpop.f32.mrf.mxu0
  %v4500 = vadd.f32 %v4388, %v4499
  %v4501 = vpop.f32.mrf.mxu0
  %4502 = vmatprep.mubr.bf16.mxu0 0
  %4503 = vmatmul.mubr.bf16.gmra.mxu0 %v4355
  %v4504 = vpop.f32.mrf.mxu0
  %v4505 = vadd.f32 %v4388, %v4504
  %v4506 = vpop.f32.mrf.mxu0
  %v4507 = vpop.f32.mrf.mxu0
  %v4508 = vadd.f32 %v4388, %v4507
  %v4509 = vpop.f32.mrf.mxu0
  %4510 = vmatprep.mubr.bf16.mxu0 0
  %4511 = vmatmul.mubr.bf16.gmra.mxu0 %v4356
  %v4512 = vpop.f32.mrf.mxu0
  %v4513 = vadd.f32 %v4388, %v4512
  %v4514 = vpop.f32.mrf.mxu0
  %v4515 = vpop.f32.mrf.mxu0
  %v4516 = vadd.f32 %v4388, %v4515
  %v4517 = vpop.f32.mrf.mxu0
  %4518 = vmatprep.mubr.bf16.mxu0 0
  %4519 = vmatmul.mubr.bf16.gmra.mxu0 %v4357
  %v4520 = vpop.f32.mrf.mxu0
  %v4521 = vadd.f32 %v4388, %v4520
  %v4522 = vpop.f32.mrf.mxu0
  %v4523 = vpop.f32.mrf.mxu0
  %v4524 = vadd.f32 %v4388, %v4523
  %v4525 = vpop.f32.mrf.mxu0
  %4526 = vmatprep.mubr.bf16.mxu0 0
  %4527 = vmatmul.mubr.bf16.gmra.mxu0 %v4358
  %v4528 = vpop.f32.mrf.mxu0
  %v4529 = vadd.f32 %v4388, %v4528
  %v4530 = vpop.f32.mrf.mxu0
  %v4531 = vpop.f32.mrf.mxu0
  %v4532 = vadd.f32 %v4388, %v4531
  %v4533 = vpop.f32.mrf.mxu0
  %4534 = vmatprep.mubr.bf16.mxu0 0
  %4535 = vmatmul.mubr.bf16.gmra.mxu0 %v4359
  %v4536 = vpop.f32.mrf.mxu0
  %v4537 = vadd.f32 %v4388, %v4536
  %v4538 = vpop.f32.mrf.mxu0
  %v4539 = vpop.f32.mrf.mxu0
  %v4540 = vadd.f32 %v4388, %v4539
  %v4541 = vpop.f32.mrf.mxu0
  %4542 = vmatprep.mubr.bf16.mxu0 0
  %4543 = vmatmul.mubr.bf16.gmra.mxu0 %v4360
  %v4544 = vpop.f32.mrf.mxu0
  %v4545 = vadd.f32 %v4388, %v4544
  %v4546 = vpop.f32.mrf.mxu0
  %v4547 = vpop.f32.mrf.mxu0
  %v4548 = vadd.f32 %v4388, %v4547
  %v4549 = vpop.f32.mrf.mxu0
  %4550 = vmatprep.mubr.bf16.mxu0 0
  %4551 = vmatmul.mubr.bf16.gmra.mxu0 %v4361
  %v4552 = vpop.f32.mrf.mxu0
  %v4553 = vadd.f32 %v4388, %v4552
  %v4554 = vpop.f32.mrf.mxu0
  %v4555 = vpop.f32.mrf.mxu0
  %v4556 = vadd.f32 %v4388, %v4555
  %v4557 = vpop.f32.mrf.mxu0
  %4558 = vmatprep.mubr.bf16.mxu0 0
  %4559 = vmatmul.mubr.bf16.gmra.mxu0 %v4362
  %v4560 = vpop.f32.mrf.mxu0
  %v4561 = vadd.f32 %v4388, %v4560
  %v4562 = vpop.f32.mrf.mxu0
  %v4563 = vpop.f32.mrf.mxu0
  %v4564 = vadd.f32 %v4388, %v4563
  %v4565 = vpop.f32.mrf.mxu0
  %4566 = vmatprep.mubr.bf16.mxu0 0
  %4567 = vmatmul.mubr.bf16.gmra.mxu0 %v4363
  %v4568 = vpop.f32.mrf.mxu0
  %v4569 = vadd.f32 %v4388, %v4568
  %v4570 = vpop.f32.mrf.mxu0
  %v4571 = vpop.f32.mrf.mxu0
  %v4572 = vadd.f32 %v4388, %v4571
  %v4573 = vpop.f32.mrf.mxu0
  %4574 = vmatprep.mubr.bf16.mxu0 0
  %4575 = vmatmul.mubr.bf16.gmra.mxu0 %v4364
  %v4576 = vpop.f32.mrf.mxu0
  %v4577 = vadd.f32 %v4388, %v4576
  %v4578 = vpop.f32.mrf.mxu0
  %v4579 = vpop.f32.mrf.mxu0
  %v4580 = vadd.f32 %v4388, %v4579
  %v4581 = vpop.f32.mrf.mxu0
  %4582 = vmatprep.mubr.bf16.mxu0 0
  %4583 = vmatmul.mubr.bf16.gmra.mxu0 %v4365
  %v4584 = vpop.f32.mrf.mxu0
  %v4585 = vadd.f32 %v4388, %v4584
  %v4586 = vpop.f32.mrf.mxu0
  %v4587 = vpop.f32.mrf.mxu0
  %v4588 = vadd.f32 %v4388, %v4587
  %v4589 = vpop.f32.mrf.mxu0
  %4590 = vmatprep.mubr.bf16.mxu0 0
  %4591 = vmatmul.mubr.bf16.gmra.mxu0 %v4366
  %v4592 = vpop.f32.mrf.mxu0
  %v4593 = vadd.f32 %v4388, %v4592
  %v4594 = vpop.f32.mrf.mxu0
  %v4595 = vpop.f32.mrf.mxu0
  %v4596 = vadd.f32 %v4388, %v4595
  %v4597 = vpop.f32.mrf.mxu0
  %4598 = vdwg.mxu0
  %4599 = vst [vmem:[%s14] sm:$0xff] %v4473
  %4600 = vst [vmem:[%s14 + $0x8] sm:$0xff] %v4476
  %4601 = vst [vmem:[%s14 + $0x10] sm:$0xff] %v4481
  %4602 = vst [vmem:[%s14 + $0x18] sm:$0xff] %v4484
  %4603 = vst [vmem:[%s14 + $0x20] sm:$0xff] %v4489
  %4604 = vst [vmem:[%s14 + $0x28] sm:$0xff] %v4492
  %4605 = vst [vmem:[%s14 + $0x30] sm:$0xff] %v4497
  %4606 = vst [vmem:[%s14 + $0x38] sm:$0xff] %v4500
  %4607 = vst [vmem:[%s14 + $0x40] sm:$0xff] %v4505
  %4608 = vst [vmem:[%s14 + $0x48] sm:$0xff] %v4508
  %4609 = vst [vmem:[%s14 + $0x50] sm:$0xff] %v4513
  %4610 = vst [vmem:[%s14 + $0x58] sm:$0xff] %v4516
  %4611 = vst [vmem:[%s14 + $0x60] sm:$0xff] %v4521
  %4612 = vst [vmem:[%s14 + $0x68] sm:$0xff] %v4524
  %4613 = vst [vmem:[%s14 + $0x70] sm:$0xff] %v4529
  %4614 = vst [vmem:[%s14 + $0x78] sm:$0xff] %v4532
  %4615 = vst [vmem:[%s14 + $0x80] sm:$0xff] %v4537
  %4616 = vst [vmem:[%s14 + $0x88] sm:$0xff] %v4540
  %4617 = vst [vmem:[%s14 + $0x90] sm:$0xff] %v4545
  %4618 = vst [vmem:[%s14 + $0x98] sm:$0xff] %v4548
  %4619 = vst [vmem:[%s14 + $0xa0] sm:$0xff] %v4553
  %4620 = vst [vmem:[%s14 + $0xa8] sm:$0xff] %v4556
  %4621 = vst [vmem:[%s14 + $0xb0] sm:$0xff] %v4561
  %4622 = vst [vmem:[%s14 + $0xb8] sm:$0xff] %v4564
  %4623 = vst [vmem:[%s14 + $0xc0] sm:$0xff] %v4569
  %4624 = vst [vmem:[%s14 + $0xc8] sm:$0xff] %v4572
  %4625 = vst [vmem:[%s14 + $0xd0] sm:$0xff] %v4577
  %4626 = vst [vmem:[%s14 + $0xd8] sm:$0xff] %v4580
  %4627 = vst [vmem:[%s14 + $0xe0] sm:$0xff] %v4585
  %4628 = vst [vmem:[%s14 + $0xe8] sm:$0xff] %v4588
  %4629 = vst [vmem:[%s14 + $0xf0] sm:$0xff] %v4593
  %4630 = vst [vmem:[%s14 + $0xf8] sm:$0xff] %v4596
  // Predicated region
  $region58: #{_lambda_.1} parent=0 // pred_check
    _
  $region59: #{_lambda_.1} parent=0 // pred_check_branch
    %4632 = sbr.rel (0) target = $region61
  $region60: #{_lambda_.1} parent=0 // pred_region
    _
  $region61: #{_lambda_.1} parent=0 // pred_fallthru
    _
  // Predicated region
  $region62: #{_lambda_.1} parent=0 // pred_check
    _
  $region63: #{_lambda_.1} parent=0 // pred_check_branch
    %4634 = sbr.rel (0) target = $region65
  $region64: #{_lambda_.1} parent=0 // pred_region
    _
  $region65: #{_lambda_.1} parent=0 // pred_fallthru
    _

</llo_original>
